<compile_context>
chip_gen: v5e
topology: v5e:2x2
jax: 0.10.0
libtpu: 0.0.40
codegen_flags: <defaults>
</compile_context>

<pallas_src>
import functools

import jax
import jax.numpy as jnp
from jax.experimental import pallas as pl
from jax.experimental.pallas import tpu as pltpu  # noqa: F401  (kept for parity)

H = 128    # GRU hidden size (see TODO above)
ATT = 64   # attention hidden width
R = 2      # attention output width (== number of stacked GRU layers in h_n)
IN = 2     # GRU input size


# ----------------------------------------------------------------------------
# Single fused kernel: 2-layer GRU recurrence over time (fully unrolled,
# hidden states in registers) + attention MLP + softmax over the layer axis +
# penalty + pooled feature + pred Linear.  Everything stays VMEM/vreg
# resident; the only output is one lane-dense packed slab.
# ----------------------------------------------------------------------------
def fused_kernel(T, B, wslab_ref, sslab_ref, out_ref):
    H2, H3 = 2 * H, 3 * H
    rows = out_ref.shape[0]
    n_tb = T * B

    # ---- bf16 weight views (single packed slab -> one DMA) ------------------
    wblk = wslab_ref[0:H2, :]                    # (256, 768) blockdiag(W_hh0, W_hh1)
    wih1 = wslab_ref[H2:H3, 0:H3]                # (128, 384)
    w1 = wslab_ref[H3:4 * H, 0:ATT]              # (128, 64)
    w2 = wslab_ref[4 * H:4 * H + ATT, 0:R]       # (64, 2)

    # ---- f32 small operands (biases pre-folded in the wrapper) --------------
    b0_pre = sslab_ref[0:1, :]                   # (1, 384) = b_ih0 + b_hh0[r,z]
    b1_pre = sslab_ref[1:2, :]                   # (1, 384) = b_ih1 + b_hh1[r,z]
    bhh0_n = sslab_ref[2:3, 0:H]                 # (1, 128)  n-gate b_hh (layer 0)
    bhh1_n = sslab_ref[2:3, H:H2]                # (1, 128)  n-gate b_hh (layer 1)
    wp_row = sslab_ref[2:3, H2:H3]               # (1, 128)  pred weight (transposed)
    bp = sslab_ref[3:4, 0:1]                     # (1, 1)
    wih0 = sslab_ref[4:6, :]                     # (2, 384)
    x2d = sslab_ref[8:8 + n_tb, 0:IN]            # (T*B, 2)

    # ---- prologue: layer-0 input projection for ALL timesteps ---------------
    # K=2 -> VPU broadcast FMAs (off the serial path), b0_pre folded in.
    # Kept as a register/VMEM-resident value; sliced statically per step.
    w0r0 = jnp.broadcast_to(wih0[0:1, :], (n_tb, H3))
    w0r1 = jnp.broadcast_to(wih0[1:2, :], (n_tb, H3))
    b0b = jnp.broadcast_to(b0_pre, (n_tb, H3))
    gi0_all = x2d[:, 0:1] * w0r0 + x2d[:, 1:2] * w0r1 + b0b     # (T*B, 384) f32

    # ---- sequential 2-layer GRU recurrence (statically unrolled) ------------
    h0 = jnp.zeros((B, H), jnp.float32)
    h1 = jnp.zeros((B, H), jnp.float32)
    for t in range(T):
        # Both layers' recurrent matmuls fused into one block-diagonal matmul.
        hcat = jnp.concatenate([h0, h1], axis=-1).astype(jnp.bfloat16)   # (B, 256)
        gh = jnp.dot(hcat, wblk, preferred_element_type=jnp.float32)     # (B, 768)
        gh0 = gh[:, :H3]
        gh1 = gh[:, H3:]
        gi0 = gi0_all[t * B:(t + 1) * B, :]                              # static slice

        # layer 0; sigmoid(x) == 0.5*(1 + tanh(x/2)); one tanh covers r and z
        rz0 = 0.5 + 0.5 * jnp.tanh(0.5 * (gi0[:, :H2] + gh0[:, :H2]))
        r0, z0 = rz0[:, :H], rz0[:, H:]
        n0 = jnp.tanh(gi0[:, H2:] + r0 * (gh0[:, H2:] + bhh0_n))
        h0 = (1.0 - z0) * n0 + z0 * h0

        # layer 1 (input = layer-0 output at this step)
        gi1 = jnp.dot(h0.astype(jnp.bfloat16), wih1,
                      preferred_element_type=jnp.float32) + b1_pre
        rz1 = 0.5 + 0.5 * jnp.tanh(0.5 * (gi1[:, :H2] + gh1[:, :H2]))
        r1, z1 = rz1[:, :H], rz1[:, H:]
        n1 = jnp.tanh(gi1[:, H2:] + r1 * (gh1[:, H2:] + bhh1_n))
        h1 = (1.0 - z1) * n1 + z1 * h1

    # ---- fused attention head (both stacked hidden states at once) ----------
    hstk = jnp.concatenate([h0, h1], axis=0).astype(jnp.bfloat16)        # (2B, 128)
    th = jnp.tanh(jnp.dot(hstk, w1, preferred_element_type=jnp.float32)) # (2B, 64)
    logits = jnp.dot(th.astype(jnp.bfloat16), w2,
                     preferred_element_type=jnp.float32)                 # (2B, 2)
    l0 = logits[:B, :]
    l1 = logits[B:, :]

    # softmax over the layer axis (2 stacked hidden states), max-subtracted
    m = jnp.maximum(l0, l1)
    e0 = jnp.exp(l0 - m)
    e1 = jnp.exp(l1 - m)
    inv = 1.0 / (e0 + e1)
    a0 = e0 * inv                                                        # att[0]  (B, 2)
    a1 = e1 * inv                                                        # att[1]  (B, 2)

    # AA[b] = att_b.T @ att_b ; penalty = sum_b || AA - I ||_F^2
    aa00 = a0[:, 0:1] * a0[:, 0:1] + a1[:, 0:1] * a1[:, 0:1]             # (B, 1)
    aa01 = a0[:, 0:1] * a0[:, 1:2] + a1[:, 0:1] * a1[:, 1:2]
    aa11 = a0[:, 1:2] * a0[:, 1:2] + a1[:, 1:2] * a1[:, 1:2]
    pen = (jnp.sum((aa00 - 1.0) ** 2) + 2.0 * jnp.sum(aa01 ** 2)
           + jnp.sum((aa11 - 1.0) ** 2))

    # feat[b, d] = sum_k h[k, b, d] * (att[k, b, 0] + att[k, b, 1])
    feat = (h0 * (a0[:, 0:1] + a0[:, 1:2])
            + h1 * (a1[:, 0:1] + a1[:, 1:2]))                            # (B, H)
    # pred as VPU mul + lane reduce (no N=1 matmul)
    pred = jnp.sum(feat * wp_row, axis=-1, keepdims=True) + bp           # (B, 1)

    # ---- single unmasked full-tile store: rows [0,B)=pred, rows [B,..)=pen --
    row_idx = jax.lax.broadcasted_iota(jnp.int32, (rows, 128), 0)
    pred_pad = jnp.concatenate(
        [pred, jnp.zeros((rows - B, 1), jnp.float32)], axis=0)           # (rows, 1)
    pred_b = pred_pad * jnp.ones((1, 128), jnp.float32)                  # (rows, 128)
    pen_b = pen * jnp.ones((rows, 128), jnp.float32)                     # (rows, 128)
    out_ref[...] = jnp.where(row_idx < B, pred_b, pen_b)


# ----------------------------------------------------------------------------
# Wrapper: packs the 12 parameters + x into 2 lane-dense slabs (2 DMAs).
# ----------------------------------------------------------------------------
@jax.jit
def model_attention_forward(x, params):
    (wih0, whh0, bih0, bhh0, wih1, whh1, bih1, bhh1, w1, w2, wp, bp) = params
    T, B, _ = x.shape
    H2, H3, H6 = 2 * H, 3 * H, 6 * H

    # Fold b_hh into the r/z gate bias; n-gate keeps its b_hh inside r*(...).
    rz_mask = (jnp.arange(H3)[None, :] < H2).astype(jnp.float32)
    b0_pre = bih0 + bhh0 * rz_mask
    b1_pre = bih1 + bhh1 * rz_mask

    # bf16 weight slab: blockdiag(W_hh0, W_hh1) | W_ih1 | W1 | W2
    w_rows = 4 * H + ATT                                        # 576
    wslab = jnp.zeros((w_rows, H6), jnp.float32)
    wslab = wslab.at[0:H, 0:H3].set(whh0)
    wslab = wslab.at[H:H2, H3:H6].set(whh1)
    wslab = wslab.at[H2:H3, 0:H3].set(wih1)
    wslab = wslab.at[H3:4 * H, 0:ATT].set(w1)
    wslab = wslab.at[4 * H:4 * H + ATT, 0:R].set(w2)
    wslab = wslab.astype(jnp.bfloat16)

    # f32 small-operand slab: folded biases, n-gate b_hh, pred weights, bp,
    # W_ih0, and x packed as (T*B, 2) rows.
    s_rows = 8 + ((T * B + 7) // 8) * 8
    sslab = jnp.zeros((s_rows, H3), jnp.float32)
    sslab = sslab.at[0, :].set(b0_pre[0])
    sslab = sslab.at[1, :].set(b1_pre[0])
    sslab = sslab.at[2, 0:H].set(bhh0[0, H2:])
    sslab = sslab.at[2, H:H2].set(bhh1[0, H2:])
    sslab = sslab.at[2, H2:H3].set(wp[:, 0])
    sslab = sslab.at[3, 0:1].set(bp[0])
    sslab = sslab.at[4:6, :].set(wih0)
    sslab = sslab.at[8:8 + T * B, 0:IN].set(x.reshape(T * B, IN))

    pack_rows = ((B + 1 + 7) // 8) * 8                          # sublane-aligned output

    packed = pl.pallas_call(
        functools.partial(fused_kernel, T, B),
        out_shape=jax.ShapeDtypeStruct((pack_rows, 128), jnp.float32),
    )(wslab, sslab)

    out = packed[:B, 0]       # (B,)
    pen = packed[B, 0]        # ()
    return out, pen


# ----------------------------------------------------------------------------
# Pure-JAX f32 reference (same math) for validation.
# ----------------------------------------------------------------------------
def reference_forward(x, params):
    (wih0, whh0, bih0, bhh0, wih1, whh1, bih1, bhh1, w1, w2, wp, bp) = params
    T, B, _ = x.shape

    def cell(xi, h, wih, whh, bih, bhh):
        gi = jnp.dot(xi, wih, preferred_element_type=jnp.float32) + bih
        gh = jnp.dot(h, whh, preferred_element_type=jnp.float32) + bhh
        r = jax.nn.sigmoid(gi[:, :H] + gh[:, :H])
        z = jax.nn.sigmoid(gi[:, H:2 * H] + gh[:, H:2 * H])
        n = jnp.tanh(gi[:, 2 * H:] + r * gh[:, 2 * H:])
        return (1.0 - z) * n + z * h

    h0 = jnp.zeros((B, H), jnp.float32)
    h1 = jnp.zeros((B, H), jnp.float32)
    for t in range(T):
        h0 = cell(x[t], h0, wih0, whh0, bih0, bhh0)
        h1 = cell(h0, h1, wih1, whh1, bih1, bhh1)
    hn = jnp.stack([h0, h1], axis=0)                          # (2, B, H)

    logits = jnp.tanh(hn @ w1) @ w2                           # (2, B, 2)
    att = jax.nn.softmax(logits, axis=0)                      # (2, B, 2)
    att_b = jnp.transpose(att, (1, 0, 2))                     # (B, 2, 2)
    AA = jnp.einsum('bki,bkj->bij', att_b, att_b)             # (B, 2, 2)
    pen = jnp.sum((AA - jnp.eye(2, dtype=jnp.float32)) ** 2)
    feat = jnp.einsum('kbd,kbj->bd', hn, att)                 # (B, H)
    out = feat @ wp + bp                                      # (B, 1)
    return out.reshape(-1), pen


if __name__ == "__main__":
    key = jax.random.PRNGKey(0)
    T, B = 8, 4
    keys = jax.random.split(key, 16)

    def u(k, shape, scale):
        return jax.random.uniform(k, shape, jnp.float32, -scale, scale)

    s_h = 1.0 / float(jnp.sqrt(H))
    s_a = 1.0 / float(jnp.sqrt(ATT))
    params = (
        u(keys[0], (IN, 3 * H), s_h), u(keys[1], (H, 3 * H), s_h),   # layer 0 W_ih, W_hh
        u(keys[2], (1, 3 * H), s_h),  u(keys[3], (1, 3 * H), s_h),   # layer 0 b_ih, b_hh
        u(keys[4], (H, 3 * H), s_h),  u(keys[5], (H, 3 * H), s_h),   # layer 1 W_ih, W_hh
        u(keys[6], (1, 3 * H), s_h),  u(keys[7], (1, 3 * H), s_h),   # layer 1 b_ih, b_hh
        u(keys[8], (H, ATT), s_h),    u(keys[9], (ATT, R), s_a),     # attention W1, W2
        u(keys[10], (H, 1), s_h),     u(keys[11], (1, 1), s_h),      # pred W, b
    )
    x = jax.random.normal(keys[12], (T, B, IN), jnp.float32)

    out, pen = model_attention_forward(x, params)
    out = jax.block_until_ready(out)
    pen = jax.block_until_ready(pen)

    ref_out, ref_pen = reference_forward(x, params)
    assert out.shape == (B,) and pen.shape == ()
    # Tolerance loosened vs. the pure-f32 variant: matmul operands are bf16
    # (f32 accumulation), so the 8-step recurrence matches to ~bf16 accuracy.
    assert jnp.allclose(out, ref_out, rtol=3e-2, atol=3e-2)
    assert jnp.allclose(pen, ref_pen, rtol=3e-2, atol=3e-2)

    print("KERNEL_OK")
</pallas_src>

<mosaic_0001>
module attributes {stable_mosaic.version = 11 : i64} {
  func.func @fused_kernel(%arg0: memref<576x768xbf16, #tpu.memory_space<vmem>>, %arg1: memref<40x384xf32, #tpu.memory_space<vmem>>, %arg2: memref<8x128xf32, #tpu.memory_space<vmem>>) attributes {dimension_semantics = [], scalar_prefetch = 0 : i64, scratch_operands = 0 : i64, tpu.core_type = #tpu.core_type<tc>} {
    %c0 = arith.constant 0 : index
    %c0_0 = arith.constant 0 : index
    %0 = vector.load %arg0[%c0, %c0_0] : memref<576x768xbf16, #tpu.memory_space<vmem>>, vector<256x768xbf16>
    %c256 = arith.constant 256 : index
    %c0_1 = arith.constant 0 : index
    %1 = vector.load %arg0[%c256, %c0_1] : memref<576x768xbf16, #tpu.memory_space<vmem>>, vector<128x384xbf16>
    %c384 = arith.constant 384 : index
    %c0_2 = arith.constant 0 : index
    %2 = vector.load %arg0[%c384, %c0_2] : memref<576x768xbf16, #tpu.memory_space<vmem>>, vector<128x64xbf16>
    %c512 = arith.constant 512 : index
    %c0_3 = arith.constant 0 : index
    %3 = vector.load %arg0[%c512, %c0_3] : memref<576x768xbf16, #tpu.memory_space<vmem>>, vector<64x2xbf16>
    %c0_4 = arith.constant 0 : index
    %c0_5 = arith.constant 0 : index
    %4 = vector.load %arg1[%c0_4, %c0_5] : memref<40x384xf32, #tpu.memory_space<vmem>>, vector<1x384xf32>
    %c1 = arith.constant 1 : index
    %c0_6 = arith.constant 0 : index
    %5 = vector.load %arg1[%c1, %c0_6] : memref<40x384xf32, #tpu.memory_space<vmem>>, vector<1x384xf32>
    %c2 = arith.constant 2 : index
    %c0_7 = arith.constant 0 : index
    %6 = vector.load %arg1[%c2, %c0_7] : memref<40x384xf32, #tpu.memory_space<vmem>>, vector<1x128xf32>
    %c2_8 = arith.constant 2 : index
    %c128 = arith.constant 128 : index
    %7 = vector.load %arg1[%c2_8, %c128] : memref<40x384xf32, #tpu.memory_space<vmem>>, vector<1x128xf32>
    %c2_9 = arith.constant 2 : index
    %c256_10 = arith.constant 256 : index
    %8 = vector.load %arg1[%c2_9, %c256_10] : memref<40x384xf32, #tpu.memory_space<vmem>>, vector<1x128xf32>
    %c3 = arith.constant 3 : index
    %c0_11 = arith.constant 0 : index
    %9 = vector.load %arg1[%c3, %c0_11] : memref<40x384xf32, #tpu.memory_space<vmem>>, vector<1x1xf32>
    %c4 = arith.constant 4 : index
    %c0_12 = arith.constant 0 : index
    %10 = vector.load %arg1[%c4, %c0_12] : memref<40x384xf32, #tpu.memory_space<vmem>>, vector<2x384xf32>
    %c8 = arith.constant 8 : index
    %c0_13 = arith.constant 0 : index
    %11 = vector.load %arg1[%c8, %c0_13] : memref<40x384xf32, #tpu.memory_space<vmem>>, vector<32x2xf32>
    %12 = vector.extract_strided_slice %10 {offsets = [0, 0], sizes = [1, 384], strides = [1, 1]} : vector<2x384xf32> to vector<1x384xf32>
    %13 = vector.shape_cast %12 : vector<1x384xf32> to vector<1x384xf32>
    %14 = vector.broadcast %13 : vector<1x384xf32> to vector<32x384xf32>
    %15 = vector.extract_strided_slice %10 {offsets = [1, 0], sizes = [1, 384], strides = [1, 1]} : vector<2x384xf32> to vector<1x384xf32>
    %16 = vector.shape_cast %15 : vector<1x384xf32> to vector<1x384xf32>
    %17 = vector.broadcast %16 : vector<1x384xf32> to vector<32x384xf32>
    %18 = vector.shape_cast %4 : vector<1x384xf32> to vector<1x384xf32>
    %19 = vector.broadcast %18 : vector<1x384xf32> to vector<32x384xf32>
    %20 = vector.extract_strided_slice %11 {offsets = [0, 0], sizes = [32, 1], strides = [1, 1]} : vector<32x2xf32> to vector<32x1xf32>
    %21 = vector.broadcast %20 : vector<32x1xf32> to vector<32x384xf32>
    %22 = arith.mulf %21, %14 : vector<32x384xf32>
    %23 = vector.extract_strided_slice %11 {offsets = [0, 1], sizes = [32, 1], strides = [1, 1]} : vector<32x2xf32> to vector<32x1xf32>
    %24 = vector.broadcast %23 : vector<32x1xf32> to vector<32x384xf32>
    %25 = arith.mulf %24, %17 : vector<32x384xf32>
    %26 = arith.addf %22, %25 : vector<32x384xf32>
    %27 = arith.addf %26, %19 : vector<32x384xf32>
    %cst = arith.constant 0.000000e+00 : f32
    %28 = vector.broadcast %cst : f32 to vector<4x128xf32>
    %cst_14 = arith.constant 0.000000e+00 : f32
    %29 = vector.broadcast %cst_14 : f32 to vector<4x128xf32>
    %30 = tpu.concatenate %28, %29 in 1 : vector<4x128xf32>, vector<4x128xf32> -> vector<4x256xf32>
    %31 = arith.truncf %30 : vector<4x256xf32> to vector<4x256xbf16>
    %cst_15 = arith.constant dense<0.000000e+00> : vector<4x768xf32>
    %32 = tpu.matmul %31, %0, %cst_15 {dimension_numbers = #tpu.dot_dimension_numbers<[1], [0], [0], [1], [0, 0, 1, 1], [], []>} : vector<4x256xbf16>, vector<256x768xbf16>, vector<4x768xf32> -> vector<4x768xf32>
    %33 = vector.extract_strided_slice %32 {offsets = [0, 0], sizes = [4, 384], strides = [1, 1]} : vector<4x768xf32> to vector<4x384xf32>
    %34 = vector.extract_strided_slice %32 {offsets = [0, 384], sizes = [4, 384], strides = [1, 1]} : vector<4x768xf32> to vector<4x384xf32>
    %35 = vector.extract_strided_slice %27 {offsets = [0, 0], sizes = [4, 384], strides = [1, 1]} : vector<32x384xf32> to vector<4x384xf32>
    %36 = vector.extract_strided_slice %35 {offsets = [0, 0], sizes = [4, 256], strides = [1, 1]} : vector<4x384xf32> to vector<4x256xf32>
    %37 = vector.extract_strided_slice %33 {offsets = [0, 0], sizes = [4, 256], strides = [1, 1]} : vector<4x384xf32> to vector<4x256xf32>
    %38 = arith.addf %36, %37 : vector<4x256xf32>
    %cst_16 = arith.constant 5.000000e-01 : f32
    %39 = vector.broadcast %cst_16 : f32 to vector<4x256xf32>
    %40 = arith.mulf %39, %38 : vector<4x256xf32>
    %41 = math.tanh %40 : vector<4x256xf32>
    %cst_17 = arith.constant 5.000000e-01 : f32
    %42 = vector.broadcast %cst_17 : f32 to vector<4x256xf32>
    %43 = arith.mulf %42, %41 : vector<4x256xf32>
    %cst_18 = arith.constant 5.000000e-01 : f32
    %44 = vector.broadcast %cst_18 : f32 to vector<4x256xf32>
    %45 = arith.addf %44, %43 : vector<4x256xf32>
    %46 = vector.extract_strided_slice %45 {offsets = [0, 0], sizes = [4, 128], strides = [1, 1]} : vector<4x256xf32> to vector<4x128xf32>
    %47 = vector.extract_strided_slice %45 {offsets = [0, 128], sizes = [4, 128], strides = [1, 1]} : vector<4x256xf32> to vector<4x128xf32>
    %48 = vector.extract_strided_slice %35 {offsets = [0, 256], sizes = [4, 128], strides = [1, 1]} : vector<4x384xf32> to vector<4x128xf32>
    %49 = vector.extract_strided_slice %33 {offsets = [0, 256], sizes = [4, 128], strides = [1, 1]} : vector<4x384xf32> to vector<4x128xf32>
    %50 = vector.broadcast %6 : vector<1x128xf32> to vector<4x128xf32>
    %51 = arith.addf %49, %50 : vector<4x128xf32>
    %52 = arith.mulf %46, %51 : vector<4x128xf32>
    %53 = arith.addf %48, %52 : vector<4x128xf32>
    %54 = math.tanh %53 : vector<4x128xf32>
    %cst_19 = arith.constant 1.000000e+00 : f32
    %55 = vector.broadcast %cst_19 : f32 to vector<4x128xf32>
    %56 = arith.subf %55, %47 : vector<4x128xf32>
    %57 = arith.mulf %56, %54 : vector<4x128xf32>
    %58 = arith.mulf %47, %28 : vector<4x128xf32>
    %59 = arith.addf %57, %58 : vector<4x128xf32>
    %60 = arith.truncf %59 : vector<4x128xf32> to vector<4x128xbf16>
    %cst_20 = arith.constant dense<0.000000e+00> : vector<4x384xf32>
    %61 = tpu.matmul %60, %1, %cst_20 {dimension_numbers = #tpu.dot_dimension_numbers<[1], [0], [0], [1], [0, 0, 1, 1], [], []>} : vector<4x128xbf16>, vector<128x384xbf16>, vector<4x384xf32> -> vector<4x384xf32>
    %62 = vector.broadcast %5 : vector<1x384xf32> to vector<4x384xf32>
    %63 = arith.addf %61, %62 : vector<4x384xf32>
    %64 = vector.extract_strided_slice %63 {offsets = [0, 0], sizes = [4, 256], strides = [1, 1]} : vector<4x384xf32> to vector<4x256xf32>
    %65 = vector.extract_strided_slice %34 {offsets = [0, 0], sizes = [4, 256], strides = [1, 1]} : vector<4x384xf32> to vector<4x256xf32>
    %66 = arith.addf %64, %65 : vector<4x256xf32>
    %cst_21 = arith.constant 5.000000e-01 : f32
    %67 = vector.broadcast %cst_21 : f32 to vector<4x256xf32>
    %68 = arith.mulf %67, %66 : vector<4x256xf32>
    %69 = math.tanh %68 : vector<4x256xf32>
    %cst_22 = arith.constant 5.000000e-01 : f32
    %70 = vector.broadcast %cst_22 : f32 to vector<4x256xf32>
    %71 = arith.mulf %70, %69 : vector<4x256xf32>
    %cst_23 = arith.constant 5.000000e-01 : f32
    %72 = vector.broadcast %cst_23 : f32 to vector<4x256xf32>
    %73 = arith.addf %72, %71 : vector<4x256xf32>
    %74 = vector.extract_strided_slice %73 {offsets = [0, 0], sizes = [4, 128], strides = [1, 1]} : vector<4x256xf32> to vector<4x128xf32>
    %75 = vector.extract_strided_slice %73 {offsets = [0, 128], sizes = [4, 128], strides = [1, 1]} : vector<4x256xf32> to vector<4x128xf32>
    %76 = vector.extract_strided_slice %63 {offsets = [0, 256], sizes = [4, 128], strides = [1, 1]} : vector<4x384xf32> to vector<4x128xf32>
    %77 = vector.extract_strided_slice %34 {offsets = [0, 256], sizes = [4, 128], strides = [1, 1]} : vector<4x384xf32> to vector<4x128xf32>
    %78 = vector.broadcast %7 : vector<1x128xf32> to vector<4x128xf32>
    %79 = arith.addf %77, %78 : vector<4x128xf32>
    %80 = arith.mulf %74, %79 : vector<4x128xf32>
    %81 = arith.addf %76, %80 : vector<4x128xf32>
    %82 = math.tanh %81 : vector<4x128xf32>
    %cst_24 = arith.constant 1.000000e+00 : f32
    %83 = vector.broadcast %cst_24 : f32 to vector<4x128xf32>
    %84 = arith.subf %83, %75 : vector<4x128xf32>
    %85 = arith.mulf %84, %82 : vector<4x128xf32>
    %86 = arith.mulf %75, %29 : vector<4x128xf32>
    %87 = arith.addf %85, %86 : vector<4x128xf32>
    %88 = tpu.concatenate %59, %87 in 1 : vector<4x128xf32>, vector<4x128xf32> -> vector<4x256xf32>
    %89 = arith.truncf %88 : vector<4x256xf32> to vector<4x256xbf16>
    %cst_25 = arith.constant dense<0.000000e+00> : vector<4x768xf32>
    %90 = tpu.matmul %89, %0, %cst_25 {dimension_numbers = #tpu.dot_dimension_numbers<[1], [0], [0], [1], [0, 0, 1, 1], [], []>} : vector<4x256xbf16>, vector<256x768xbf16>, vector<4x768xf32> -> vector<4x768xf32>
    %91 = vector.extract_strided_slice %90 {offsets = [0, 0], sizes = [4, 384], strides = [1, 1]} : vector<4x768xf32> to vector<4x384xf32>
    %92 = vector.extract_strided_slice %90 {offsets = [0, 384], sizes = [4, 384], strides = [1, 1]} : vector<4x768xf32> to vector<4x384xf32>
    %93 = vector.extract_strided_slice %27 {offsets = [4, 0], sizes = [4, 384], strides = [1, 1]} : vector<32x384xf32> to vector<4x384xf32>
    %94 = vector.extract_strided_slice %93 {offsets = [0, 0], sizes = [4, 256], strides = [1, 1]} : vector<4x384xf32> to vector<4x256xf32>
    %95 = vector.extract_strided_slice %91 {offsets = [0, 0], sizes = [4, 256], strides = [1, 1]} : vector<4x384xf32> to vector<4x256xf32>
    %96 = arith.addf %94, %95 : vector<4x256xf32>
    %cst_26 = arith.constant 5.000000e-01 : f32
    %97 = vector.broadcast %cst_26 : f32 to vector<4x256xf32>
    %98 = arith.mulf %97, %96 : vector<4x256xf32>
    %99 = math.tanh %98 : vector<4x256xf32>
    %cst_27 = arith.constant 5.000000e-01 : f32
    %100 = vector.broadcast %cst_27 : f32 to vector<4x256xf32>
    %101 = arith.mulf %100, %99 : vector<4x256xf32>
    %cst_28 = arith.constant 5.000000e-01 : f32
    %102 = vector.broadcast %cst_28 : f32 to vector<4x256xf32>
    %103 = arith.addf %102, %101 : vector<4x256xf32>
    %104 = vector.extract_strided_slice %103 {offsets = [0, 0], sizes = [4, 128], strides = [1, 1]} : vector<4x256xf32> to vector<4x128xf32>
    %105 = vector.extract_strided_slice %103 {offsets = [0, 128], sizes = [4, 128], strides = [1, 1]} : vector<4x256xf32> to vector<4x128xf32>
    %106 = vector.extract_strided_slice %93 {offsets = [0, 256], sizes = [4, 128], strides = [1, 1]} : vector<4x384xf32> to vector<4x128xf32>
    %107 = vector.extract_strided_slice %91 {offsets = [0, 256], sizes = [4, 128], strides = [1, 1]} : vector<4x384xf32> to vector<4x128xf32>
    %108 = vector.broadcast %6 : vector<1x128xf32> to vector<4x128xf32>
    %109 = arith.addf %107, %108 : vector<4x128xf32>
    %110 = arith.mulf %104, %109 : vector<4x128xf32>
    %111 = arith.addf %106, %110 : vector<4x128xf32>
    %112 = math.tanh %111 : vector<4x128xf32>
    %cst_29 = arith.constant 1.000000e+00 : f32
    %113 = vector.broadcast %cst_29 : f32 to vector<4x128xf32>
    %114 = arith.subf %113, %105 : vector<4x128xf32>
    %115 = arith.mulf %114, %112 : vector<4x128xf32>
    %116 = arith.mulf %105, %59 : vector<4x128xf32>
    %117 = arith.addf %115, %116 : vector<4x128xf32>
    %118 = arith.truncf %117 : vector<4x128xf32> to vector<4x128xbf16>
    %cst_30 = arith.constant dense<0.000000e+00> : vector<4x384xf32>
    %119 = tpu.matmul %118, %1, %cst_30 {dimension_numbers = #tpu.dot_dimension_numbers<[1], [0], [0], [1], [0, 0, 1, 1], [], []>} : vector<4x128xbf16>, vector<128x384xbf16>, vector<4x384xf32> -> vector<4x384xf32>
    %120 = vector.broadcast %5 : vector<1x384xf32> to vector<4x384xf32>
    %121 = arith.addf %119, %120 : vector<4x384xf32>
    %122 = vector.extract_strided_slice %121 {offsets = [0, 0], sizes = [4, 256], strides = [1, 1]} : vector<4x384xf32> to vector<4x256xf32>
    %123 = vector.extract_strided_slice %92 {offsets = [0, 0], sizes = [4, 256], strides = [1, 1]} : vector<4x384xf32> to vector<4x256xf32>
    %124 = arith.addf %122, %123 : vector<4x256xf32>
    %cst_31 = arith.constant 5.000000e-01 : f32
    %125 = vector.broadcast %cst_31 : f32 to vector<4x256xf32>
    %126 = arith.mulf %125, %124 : vector<4x256xf32>
    %127 = math.tanh %126 : vector<4x256xf32>
    %cst_32 = arith.constant 5.000000e-01 : f32
    %128 = vector.broadcast %cst_32 : f32 to vector<4x256xf32>
    %129 = arith.mulf %128, %127 : vector<4x256xf32>
    %cst_33 = arith.constant 5.000000e-01 : f32
    %130 = vector.broadcast %cst_33 : f32 to vector<4x256xf32>
    %131 = arith.addf %130, %129 : vector<4x256xf32>
    %132 = vector.extract_strided_slice %131 {offsets = [0, 0], sizes = [4, 128], strides = [1, 1]} : vector<4x256xf32> to vector<4x128xf32>
    %133 = vector.extract_strided_slice %131 {offsets = [0, 128], sizes = [4, 128], strides = [1, 1]} : vector<4x256xf32> to vector<4x128xf32>
    %134 = vector.extract_strided_slice %121 {offsets = [0, 256], sizes = [4, 128], strides = [1, 1]} : vector<4x384xf32> to vector<4x128xf32>
    %135 = vector.extract_strided_slice %92 {offsets = [0, 256], sizes = [4, 128], strides = [1, 1]} : vector<4x384xf32> to vector<4x128xf32>
    %136 = vector.broadcast %7 : vector<1x128xf32> to vector<4x128xf32>
    %137 = arith.addf %135, %136 : vector<4x128xf32>
    %138 = arith.mulf %132, %137 : vector<4x128xf32>
    %139 = arith.addf %134, %138 : vector<4x128xf32>
    %140 = math.tanh %139 : vector<4x128xf32>
    %cst_34 = arith.constant 1.000000e+00 : f32
    %141 = vector.broadcast %cst_34 : f32 to vector<4x128xf32>
    %142 = arith.subf %141, %133 : vector<4x128xf32>
    %143 = arith.mulf %142, %140 : vector<4x128xf32>
    %144 = arith.mulf %133, %87 : vector<4x128xf32>
    %145 = arith.addf %143, %144 : vector<4x128xf32>
    %146 = tpu.concatenate %117, %145 in 1 : vector<4x128xf32>, vector<4x128xf32> -> vector<4x256xf32>
    %147 = arith.truncf %146 : vector<4x256xf32> to vector<4x256xbf16>
    %cst_35 = arith.constant dense<0.000000e+00> : vector<4x768xf32>
    %148 = tpu.matmul %147, %0, %cst_35 {dimension_numbers = #tpu.dot_dimension_numbers<[1], [0], [0], [1], [0, 0, 1, 1], [], []>} : vector<4x256xbf16>, vector<256x768xbf16>, vector<4x768xf32> -> vector<4x768xf32>
    %149 = vector.extract_strided_slice %148 {offsets = [0, 0], sizes = [4, 384], strides = [1, 1]} : vector<4x768xf32> to vector<4x384xf32>
    %150 = vector.extract_strided_slice %148 {offsets = [0, 384], sizes = [4, 384], strides = [1, 1]} : vector<4x768xf32> to vector<4x384xf32>
    %151 = vector.extract_strided_slice %27 {offsets = [8, 0], sizes = [4, 384], strides = [1, 1]} : vector<32x384xf32> to vector<4x384xf32>
    %152 = vector.extract_strided_slice %151 {offsets = [0, 0], sizes = [4, 256], strides = [1, 1]} : vector<4x384xf32> to vector<4x256xf32>
    %153 = vector.extract_strided_slice %149 {offsets = [0, 0], sizes = [4, 256], strides = [1, 1]} : vector<4x384xf32> to vector<4x256xf32>
    %154 = arith.addf %152, %153 : vector<4x256xf32>
    %cst_36 = arith.constant 5.000000e-01 : f32
    %155 = vector.broadcast %cst_36 : f32 to vector<4x256xf32>
    %156 = arith.mulf %155, %154 : vector<4x256xf32>
    %157 = math.tanh %156 : vector<4x256xf32>
    %cst_37 = arith.constant 5.000000e-01 : f32
    %158 = vector.broadcast %cst_37 : f32 to vector<4x256xf32>
    %159 = arith.mulf %158, %157 : vector<4x256xf32>
    %cst_38 = arith.constant 5.000000e-01 : f32
    %160 = vector.broadcast %cst_38 : f32 to vector<4x256xf32>
    %161 = arith.addf %160, %159 : vector<4x256xf32>
    %162 = vector.extract_strided_slice %161 {offsets = [0, 0], sizes = [4, 128], strides = [1, 1]} : vector<4x256xf32> to vector<4x128xf32>
    %163 = vector.extract_strided_slice %161 {offsets = [0, 128], sizes = [4, 128], strides = [1, 1]} : vector<4x256xf32> to vector<4x128xf32>
    %164 = vector.extract_strided_slice %151 {offsets = [0, 256], sizes = [4, 128], strides = [1, 1]} : vector<4x384xf32> to vector<4x128xf32>
    %165 = vector.extract_strided_slice %149 {offsets = [0, 256], sizes = [4, 128], strides = [1, 1]} : vector<4x384xf32> to vector<4x128xf32>
    %166 = vector.broadcast %6 : vector<1x128xf32> to vector<4x128xf32>
    %167 = arith.addf %165, %166 : vector<4x128xf32>
    %168 = arith.mulf %162, %167 : vector<4x128xf32>
    %169 = arith.addf %164, %168 : vector<4x128xf32>
    %170 = math.tanh %169 : vector<4x128xf32>
    %cst_39 = arith.constant 1.000000e+00 : f32
    %171 = vector.broadcast %cst_39 : f32 to vector<4x128xf32>
    %172 = arith.subf %171, %163 : vector<4x128xf32>
    %173 = arith.mulf %172, %170 : vector<4x128xf32>
    %174 = arith.mulf %163, %117 : vector<4x128xf32>
    %175 = arith.addf %173, %174 : vector<4x128xf32>
    %176 = arith.truncf %175 : vector<4x128xf32> to vector<4x128xbf16>
    %cst_40 = arith.constant dense<0.000000e+00> : vector<4x384xf32>
    %177 = tpu.matmul %176, %1, %cst_40 {dimension_numbers = #tpu.dot_dimension_numbers<[1], [0], [0], [1], [0, 0, 1, 1], [], []>} : vector<4x128xbf16>, vector<128x384xbf16>, vector<4x384xf32> -> vector<4x384xf32>
    %178 = vector.broadcast %5 : vector<1x384xf32> to vector<4x384xf32>
    %179 = arith.addf %177, %178 : vector<4x384xf32>
    %180 = vector.extract_strided_slice %179 {offsets = [0, 0], sizes = [4, 256], strides = [1, 1]} : vector<4x384xf32> to vector<4x256xf32>
    %181 = vector.extract_strided_slice %150 {offsets = [0, 0], sizes = [4, 256], strides = [1, 1]} : vector<4x384xf32> to vector<4x256xf32>
    %182 = arith.addf %180, %181 : vector<4x256xf32>
    %cst_41 = arith.constant 5.000000e-01 : f32
    %183 = vector.broadcast %cst_41 : f32 to vector<4x256xf32>
    %184 = arith.mulf %183, %182 : vector<4x256xf32>
    %185 = math.tanh %184 : vector<4x256xf32>
    %cst_42 = arith.constant 5.000000e-01 : f32
    %186 = vector.broadcast %cst_42 : f32 to vector<4x256xf32>
    %187 = arith.mulf %186, %185 : vector<4x256xf32>
    %cst_43 = arith.constant 5.000000e-01 : f32
    %188 = vector.broadcast %cst_43 : f32 to vector<4x256xf32>
    %189 = arith.addf %188, %187 : vector<4x256xf32>
    %190 = vector.extract_strided_slice %189 {offsets = [0, 0], sizes = [4, 128], strides = [1, 1]} : vector<4x256xf32> to vector<4x128xf32>
    %191 = vector.extract_strided_slice %189 {offsets = [0, 128], sizes = [4, 128], strides = [1, 1]} : vector<4x256xf32> to vector<4x128xf32>
    %192 = vector.extract_strided_slice %179 {offsets = [0, 256], sizes = [4, 128], strides = [1, 1]} : vector<4x384xf32> to vector<4x128xf32>
    %193 = vector.extract_strided_slice %150 {offsets = [0, 256], sizes = [4, 128], strides = [1, 1]} : vector<4x384xf32> to vector<4x128xf32>
    %194 = vector.broadcast %7 : vector<1x128xf32> to vector<4x128xf32>
    %195 = arith.addf %193, %194 : vector<4x128xf32>
    %196 = arith.mulf %190, %195 : vector<4x128xf32>
    %197 = arith.addf %192, %196 : vector<4x128xf32>
    %198 = math.tanh %197 : vector<4x128xf32>
    %cst_44 = arith.constant 1.000000e+00 : f32
    %199 = vector.broadcast %cst_44 : f32 to vector<4x128xf32>
    %200 = arith.subf %199, %191 : vector<4x128xf32>
    %201 = arith.mulf %200, %198 : vector<4x128xf32>
    %202 = arith.mulf %191, %145 : vector<4x128xf32>
    %203 = arith.addf %201, %202 : vector<4x128xf32>
    %204 = tpu.concatenate %175, %203 in 1 : vector<4x128xf32>, vector<4x128xf32> -> vector<4x256xf32>
    %205 = arith.truncf %204 : vector<4x256xf32> to vector<4x256xbf16>
    %cst_45 = arith.constant dense<0.000000e+00> : vector<4x768xf32>
    %206 = tpu.matmul %205, %0, %cst_45 {dimension_numbers = #tpu.dot_dimension_numbers<[1], [0], [0], [1], [0, 0, 1, 1], [], []>} : vector<4x256xbf16>, vector<256x768xbf16>, vector<4x768xf32> -> vector<4x768xf32>
    %207 = vector.extract_strided_slice %206 {offsets = [0, 0], sizes = [4, 384], strides = [1, 1]} : vector<4x768xf32> to vector<4x384xf32>
    %208 = vector.extract_strided_slice %206 {offsets = [0, 384], sizes = [4, 384], strides = [1, 1]} : vector<4x768xf32> to vector<4x384xf32>
    %209 = vector.extract_strided_slice %27 {offsets = [12, 0], sizes = [4, 384], strides = [1, 1]} : vector<32x384xf32> to vector<4x384xf32>
    %210 = vector.extract_strided_slice %209 {offsets = [0, 0], sizes = [4, 256], strides = [1, 1]} : vector<4x384xf32> to vector<4x256xf32>
    %211 = vector.extract_strided_slice %207 {offsets = [0, 0], sizes = [4, 256], strides = [1, 1]} : vector<4x384xf32> to vector<4x256xf32>
    %212 = arith.addf %210, %211 : vector<4x256xf32>
    %cst_46 = arith.constant 5.000000e-01 : f32
    %213 = vector.broadcast %cst_46 : f32 to vector<4x256xf32>
    %214 = arith.mulf %213, %212 : vector<4x256xf32>
    %215 = math.tanh %214 : vector<4x256xf32>
    %cst_47 = arith.constant 5.000000e-01 : f32
    %216 = vector.broadcast %cst_47 : f32 to vector<4x256xf32>
    %217 = arith.mulf %216, %215 : vector<4x256xf32>
    %cst_48 = arith.constant 5.000000e-01 : f32
    %218 = vector.broadcast %cst_48 : f32 to vector<4x256xf32>
    %219 = arith.addf %218, %217 : vector<4x256xf32>
    %220 = vector.extract_strided_slice %219 {offsets = [0, 0], sizes = [4, 128], strides = [1, 1]} : vector<4x256xf32> to vector<4x128xf32>
    %221 = vector.extract_strided_slice %219 {offsets = [0, 128], sizes = [4, 128], strides = [1, 1]} : vector<4x256xf32> to vector<4x128xf32>
    %222 = vector.extract_strided_slice %209 {offsets = [0, 256], sizes = [4, 128], strides = [1, 1]} : vector<4x384xf32> to vector<4x128xf32>
    %223 = vector.extract_strided_slice %207 {offsets = [0, 256], sizes = [4, 128], strides = [1, 1]} : vector<4x384xf32> to vector<4x128xf32>
    %224 = vector.broadcast %6 : vector<1x128xf32> to vector<4x128xf32>
    %225 = arith.addf %223, %224 : vector<4x128xf32>
    %226 = arith.mulf %220, %225 : vector<4x128xf32>
    %227 = arith.addf %222, %226 : vector<4x128xf32>
    %228 = math.tanh %227 : vector<4x128xf32>
    %cst_49 = arith.constant 1.000000e+00 : f32
    %229 = vector.broadcast %cst_49 : f32 to vector<4x128xf32>
    %230 = arith.subf %229, %221 : vector<4x128xf32>
    %231 = arith.mulf %230, %228 : vector<4x128xf32>
    %232 = arith.mulf %221, %175 : vector<4x128xf32>
    %233 = arith.addf %231, %232 : vector<4x128xf32>
    %234 = arith.truncf %233 : vector<4x128xf32> to vector<4x128xbf16>
    %cst_50 = arith.constant dense<0.000000e+00> : vector<4x384xf32>
    %235 = tpu.matmul %234, %1, %cst_50 {dimension_numbers = #tpu.dot_dimension_numbers<[1], [0], [0], [1], [0, 0, 1, 1], [], []>} : vector<4x128xbf16>, vector<128x384xbf16>, vector<4x384xf32> -> vector<4x384xf32>
    %236 = vector.broadcast %5 : vector<1x384xf32> to vector<4x384xf32>
    %237 = arith.addf %235, %236 : vector<4x384xf32>
    %238 = vector.extract_strided_slice %237 {offsets = [0, 0], sizes = [4, 256], strides = [1, 1]} : vector<4x384xf32> to vector<4x256xf32>
    %239 = vector.extract_strided_slice %208 {offsets = [0, 0], sizes = [4, 256], strides = [1, 1]} : vector<4x384xf32> to vector<4x256xf32>
    %240 = arith.addf %238, %239 : vector<4x256xf32>
    %cst_51 = arith.constant 5.000000e-01 : f32
    %241 = vector.broadcast %cst_51 : f32 to vector<4x256xf32>
    %242 = arith.mulf %241, %240 : vector<4x256xf32>
    %243 = math.tanh %242 : vector<4x256xf32>
    %cst_52 = arith.constant 5.000000e-01 : f32
    %244 = vector.broadcast %cst_52 : f32 to vector<4x256xf32>
    %245 = arith.mulf %244, %243 : vector<4x256xf32>
    %cst_53 = arith.constant 5.000000e-01 : f32
    %246 = vector.broadcast %cst_53 : f32 to vector<4x256xf32>
    %247 = arith.addf %246, %245 : vector<4x256xf32>
    %248 = vector.extract_strided_slice %247 {offsets = [0, 0], sizes = [4, 128], strides = [1, 1]} : vector<4x256xf32> to vector<4x128xf32>
    %249 = vector.extract_strided_slice %247 {offsets = [0, 128], sizes = [4, 128], strides = [1, 1]} : vector<4x256xf32> to vector<4x128xf32>
    %250 = vector.extract_strided_slice %237 {offsets = [0, 256], sizes = [4, 128], strides = [1, 1]} : vector<4x384xf32> to vector<4x128xf32>
    %251 = vector.extract_strided_slice %208 {offsets = [0, 256], sizes = [4, 128], strides = [1, 1]} : vector<4x384xf32> to vector<4x128xf32>
    %252 = vector.broadcast %7 : vector<1x128xf32> to vector<4x128xf32>
    %253 = arith.addf %251, %252 : vector<4x128xf32>
    %254 = arith.mulf %248, %253 : vector<4x128xf32>
    %255 = arith.addf %250, %254 : vector<4x128xf32>
    %256 = math.tanh %255 : vector<4x128xf32>
    %cst_54 = arith.constant 1.000000e+00 : f32
    %257 = vector.broadcast %cst_54 : f32 to vector<4x128xf32>
    %258 = arith.subf %257, %249 : vector<4x128xf32>
    %259 = arith.mulf %258, %256 : vector<4x128xf32>
    %260 = arith.mulf %249, %203 : vector<4x128xf32>
    %261 = arith.addf %259, %260 : vector<4x128xf32>
    %262 = tpu.concatenate %233, %261 in 1 : vector<4x128xf32>, vector<4x128xf32> -> vector<4x256xf32>
    %263 = arith.truncf %262 : vector<4x256xf32> to vector<4x256xbf16>
    %cst_55 = arith.constant dense<0.000000e+00> : vector<4x768xf32>
    %264 = tpu.matmul %263, %0, %cst_55 {dimension_numbers = #tpu.dot_dimension_numbers<[1], [0], [0], [1], [0, 0, 1, 1], [], []>} : vector<4x256xbf16>, vector<256x768xbf16>, vector<4x768xf32> -> vector<4x768xf32>
    %265 = vector.extract_strided_slice %264 {offsets = [0, 0], sizes = [4, 384], strides = [1, 1]} : vector<4x768xf32> to vector<4x384xf32>
    %266 = vector.extract_strided_slice %264 {offsets = [0, 384], sizes = [4, 384], strides = [1, 1]} : vector<4x768xf32> to vector<4x384xf32>
    %267 = vector.extract_strided_slice %27 {offsets = [16, 0], sizes = [4, 384], strides = [1, 1]} : vector<32x384xf32> to vector<4x384xf32>
    %268 = vector.extract_strided_slice %267 {offsets = [0, 0], sizes = [4, 256], strides = [1, 1]} : vector<4x384xf32> to vector<4x256xf32>
    %269 = vector.extract_strided_slice %265 {offsets = [0, 0], sizes = [4, 256], strides = [1, 1]} : vector<4x384xf32> to vector<4x256xf32>
    %270 = arith.addf %268, %269 : vector<4x256xf32>
    %cst_56 = arith.constant 5.000000e-01 : f32
    %271 = vector.broadcast %cst_56 : f32 to vector<4x256xf32>
    %272 = arith.mulf %271, %270 : vector<4x256xf32>
    %273 = math.tanh %272 : vector<4x256xf32>
    %cst_57 = arith.constant 5.000000e-01 : f32
    %274 = vector.broadcast %cst_57 : f32 to vector<4x256xf32>
    %275 = arith.mulf %274, %273 : vector<4x256xf32>
    %cst_58 = arith.constant 5.000000e-01 : f32
    %276 = vector.broadcast %cst_58 : f32 to vector<4x256xf32>
    %277 = arith.addf %276, %275 : vector<4x256xf32>
    %278 = vector.extract_strided_slice %277 {offsets = [0, 0], sizes = [4, 128], strides = [1, 1]} : vector<4x256xf32> to vector<4x128xf32>
    %279 = vector.extract_strided_slice %277 {offsets = [0, 128], sizes = [4, 128], strides = [1, 1]} : vector<4x256xf32> to vector<4x128xf32>
    %280 = vector.extract_strided_slice %267 {offsets = [0, 256], sizes = [4, 128], strides = [1, 1]} : vector<4x384xf32> to vector<4x128xf32>
    %281 = vector.extract_strided_slice %265 {offsets = [0, 256], sizes = [4, 128], strides = [1, 1]} : vector<4x384xf32> to vector<4x128xf32>
    %282 = vector.broadcast %6 : vector<1x128xf32> to vector<4x128xf32>
    %283 = arith.addf %281, %282 : vector<4x128xf32>
    %284 = arith.mulf %278, %283 : vector<4x128xf32>
    %285 = arith.addf %280, %284 : vector<4x128xf32>
    %286 = math.tanh %285 : vector<4x128xf32>
    %cst_59 = arith.constant 1.000000e+00 : f32
    %287 = vector.broadcast %cst_59 : f32 to vector<4x128xf32>
    %288 = arith.subf %287, %279 : vector<4x128xf32>
    %289 = arith.mulf %288, %286 : vector<4x128xf32>
    %290 = arith.mulf %279, %233 : vector<4x128xf32>
    %291 = arith.addf %289, %290 : vector<4x128xf32>
    %292 = arith.truncf %291 : vector<4x128xf32> to vector<4x128xbf16>
    %cst_60 = arith.constant dense<0.000000e+00> : vector<4x384xf32>
    %293 = tpu.matmul %292, %1, %cst_60 {dimension_numbers = #tpu.dot_dimension_numbers<[1], [0], [0], [1], [0, 0, 1, 1], [], []>} : vector<4x128xbf16>, vector<128x384xbf16>, vector<4x384xf32> -> vector<4x384xf32>
    %294 = vector.broadcast %5 : vector<1x384xf32> to vector<4x384xf32>
    %295 = arith.addf %293, %294 : vector<4x384xf32>
    %296 = vector.extract_strided_slice %295 {offsets = [0, 0], sizes = [4, 256], strides = [1, 1]} : vector<4x384xf32> to vector<4x256xf32>
    %297 = vector.extract_strided_slice %266 {offsets = [0, 0], sizes = [4, 256], strides = [1, 1]} : vector<4x384xf32> to vector<4x256xf32>
    %298 = arith.addf %296, %297 : vector<4x256xf32>
    %cst_61 = arith.constant 5.000000e-01 : f32
    %299 = vector.broadcast %cst_61 : f32 to vector<4x256xf32>
    %300 = arith.mulf %299, %298 : vector<4x256xf32>
    %301 = math.tanh %300 : vector<4x256xf32>
    %cst_62 = arith.constant 5.000000e-01 : f32
    %302 = vector.broadcast %cst_62 : f32 to vector<4x256xf32>
    %303 = arith.mulf %302, %301 : vector<4x256xf32>
    %cst_63 = arith.constant 5.000000e-01 : f32
    %304 = vector.broadcast %cst_63 : f32 to vector<4x256xf32>
    %305 = arith.addf %304, %303 : vector<4x256xf32>
    %306 = vector.extract_strided_slice %305 {offsets = [0, 0], sizes = [4, 128], strides = [1, 1]} : vector<4x256xf32> to vector<4x128xf32>
    %307 = vector.extract_strided_slice %305 {offsets = [0, 128], sizes = [4, 128], strides = [1, 1]} : vector<4x256xf32> to vector<4x128xf32>
    %308 = vector.extract_strided_slice %295 {offsets = [0, 256], sizes = [4, 128], strides = [1, 1]} : vector<4x384xf32> to vector<4x128xf32>
    %309 = vector.extract_strided_slice %266 {offsets = [0, 256], sizes = [4, 128], strides = [1, 1]} : vector<4x384xf32> to vector<4x128xf32>
    %310 = vector.broadcast %7 : vector<1x128xf32> to vector<4x128xf32>
    %311 = arith.addf %309, %310 : vector<4x128xf32>
    %312 = arith.mulf %306, %311 : vector<4x128xf32>
    %313 = arith.addf %308, %312 : vector<4x128xf32>
    %314 = math.tanh %313 : vector<4x128xf32>
    %cst_64 = arith.constant 1.000000e+00 : f32
    %315 = vector.broadcast %cst_64 : f32 to vector<4x128xf32>
    %316 = arith.subf %315, %307 : vector<4x128xf32>
    %317 = arith.mulf %316, %314 : vector<4x128xf32>
    %318 = arith.mulf %307, %261 : vector<4x128xf32>
    %319 = arith.addf %317, %318 : vector<4x128xf32>
    %320 = tpu.concatenate %291, %319 in 1 : vector<4x128xf32>, vector<4x128xf32> -> vector<4x256xf32>
    %321 = arith.truncf %320 : vector<4x256xf32> to vector<4x256xbf16>
    %cst_65 = arith.constant dense<0.000000e+00> : vector<4x768xf32>
    %322 = tpu.matmul %321, %0, %cst_65 {dimension_numbers = #tpu.dot_dimension_numbers<[1], [0], [0], [1], [0, 0, 1, 1], [], []>} : vector<4x256xbf16>, vector<256x768xbf16>, vector<4x768xf32> -> vector<4x768xf32>
    %323 = vector.extract_strided_slice %322 {offsets = [0, 0], sizes = [4, 384], strides = [1, 1]} : vector<4x768xf32> to vector<4x384xf32>
    %324 = vector.extract_strided_slice %322 {offsets = [0, 384], sizes = [4, 384], strides = [1, 1]} : vector<4x768xf32> to vector<4x384xf32>
    %325 = vector.extract_strided_slice %27 {offsets = [20, 0], sizes = [4, 384], strides = [1, 1]} : vector<32x384xf32> to vector<4x384xf32>
    %326 = vector.extract_strided_slice %325 {offsets = [0, 0], sizes = [4, 256], strides = [1, 1]} : vector<4x384xf32> to vector<4x256xf32>
    %327 = vector.extract_strided_slice %323 {offsets = [0, 0], sizes = [4, 256], strides = [1, 1]} : vector<4x384xf32> to vector<4x256xf32>
    %328 = arith.addf %326, %327 : vector<4x256xf32>
    %cst_66 = arith.constant 5.000000e-01 : f32
    %329 = vector.broadcast %cst_66 : f32 to vector<4x256xf32>
    %330 = arith.mulf %329, %328 : vector<4x256xf32>
    %331 = math.tanh %330 : vector<4x256xf32>
    %cst_67 = arith.constant 5.000000e-01 : f32
    %332 = vector.broadcast %cst_67 : f32 to vector<4x256xf32>
    %333 = arith.mulf %332, %331 : vector<4x256xf32>
    %cst_68 = arith.constant 5.000000e-01 : f32
    %334 = vector.broadcast %cst_68 : f32 to vector<4x256xf32>
    %335 = arith.addf %334, %333 : vector<4x256xf32>
    %336 = vector.extract_strided_slice %335 {offsets = [0, 0], sizes = [4, 128], strides = [1, 1]} : vector<4x256xf32> to vector<4x128xf32>
    %337 = vector.extract_strided_slice %335 {offsets = [0, 128], sizes = [4, 128], strides = [1, 1]} : vector<4x256xf32> to vector<4x128xf32>
    %338 = vector.extract_strided_slice %325 {offsets = [0, 256], sizes = [4, 128], strides = [1, 1]} : vector<4x384xf32> to vector<4x128xf32>
    %339 = vector.extract_strided_slice %323 {offsets = [0, 256], sizes = [4, 128], strides = [1, 1]} : vector<4x384xf32> to vector<4x128xf32>
    %340 = vector.broadcast %6 : vector<1x128xf32> to vector<4x128xf32>
    %341 = arith.addf %339, %340 : vector<4x128xf32>
    %342 = arith.mulf %336, %341 : vector<4x128xf32>
    %343 = arith.addf %338, %342 : vector<4x128xf32>
    %344 = math.tanh %343 : vector<4x128xf32>
    %cst_69 = arith.constant 1.000000e+00 : f32
    %345 = vector.broadcast %cst_69 : f32 to vector<4x128xf32>
    %346 = arith.subf %345, %337 : vector<4x128xf32>
    %347 = arith.mulf %346, %344 : vector<4x128xf32>
    %348 = arith.mulf %337, %291 : vector<4x128xf32>
    %349 = arith.addf %347, %348 : vector<4x128xf32>
    %350 = arith.truncf %349 : vector<4x128xf32> to vector<4x128xbf16>
    %cst_70 = arith.constant dense<0.000000e+00> : vector<4x384xf32>
    %351 = tpu.matmul %350, %1, %cst_70 {dimension_numbers = #tpu.dot_dimension_numbers<[1], [0], [0], [1], [0, 0, 1, 1], [], []>} : vector<4x128xbf16>, vector<128x384xbf16>, vector<4x384xf32> -> vector<4x384xf32>
    %352 = vector.broadcast %5 : vector<1x384xf32> to vector<4x384xf32>
    %353 = arith.addf %351, %352 : vector<4x384xf32>
    %354 = vector.extract_strided_slice %353 {offsets = [0, 0], sizes = [4, 256], strides = [1, 1]} : vector<4x384xf32> to vector<4x256xf32>
    %355 = vector.extract_strided_slice %324 {offsets = [0, 0], sizes = [4, 256], strides = [1, 1]} : vector<4x384xf32> to vector<4x256xf32>
    %356 = arith.addf %354, %355 : vector<4x256xf32>
    %cst_71 = arith.constant 5.000000e-01 : f32
    %357 = vector.broadcast %cst_71 : f32 to vector<4x256xf32>
    %358 = arith.mulf %357, %356 : vector<4x256xf32>
    %359 = math.tanh %358 : vector<4x256xf32>
    %cst_72 = arith.constant 5.000000e-01 : f32
    %360 = vector.broadcast %cst_72 : f32 to vector<4x256xf32>
    %361 = arith.mulf %360, %359 : vector<4x256xf32>
    %cst_73 = arith.constant 5.000000e-01 : f32
    %362 = vector.broadcast %cst_73 : f32 to vector<4x256xf32>
    %363 = arith.addf %362, %361 : vector<4x256xf32>
    %364 = vector.extract_strided_slice %363 {offsets = [0, 0], sizes = [4, 128], strides = [1, 1]} : vector<4x256xf32> to vector<4x128xf32>
    %365 = vector.extract_strided_slice %363 {offsets = [0, 128], sizes = [4, 128], strides = [1, 1]} : vector<4x256xf32> to vector<4x128xf32>
    %366 = vector.extract_strided_slice %353 {offsets = [0, 256], sizes = [4, 128], strides = [1, 1]} : vector<4x384xf32> to vector<4x128xf32>
    %367 = vector.extract_strided_slice %324 {offsets = [0, 256], sizes = [4, 128], strides = [1, 1]} : vector<4x384xf32> to vector<4x128xf32>
    %368 = vector.broadcast %7 : vector<1x128xf32> to vector<4x128xf32>
    %369 = arith.addf %367, %368 : vector<4x128xf32>
    %370 = arith.mulf %364, %369 : vector<4x128xf32>
    %371 = arith.addf %366, %370 : vector<4x128xf32>
    %372 = math.tanh %371 : vector<4x128xf32>
    %cst_74 = arith.constant 1.000000e+00 : f32
    %373 = vector.broadcast %cst_74 : f32 to vector<4x128xf32>
    %374 = arith.subf %373, %365 : vector<4x128xf32>
    %375 = arith.mulf %374, %372 : vector<4x128xf32>
    %376 = arith.mulf %365, %319 : vector<4x128xf32>
    %377 = arith.addf %375, %376 : vector<4x128xf32>
    %378 = tpu.concatenate %349, %377 in 1 : vector<4x128xf32>, vector<4x128xf32> -> vector<4x256xf32>
    %379 = arith.truncf %378 : vector<4x256xf32> to vector<4x256xbf16>
    %cst_75 = arith.constant dense<0.000000e+00> : vector<4x768xf32>
    %380 = tpu.matmul %379, %0, %cst_75 {dimension_numbers = #tpu.dot_dimension_numbers<[1], [0], [0], [1], [0, 0, 1, 1], [], []>} : vector<4x256xbf16>, vector<256x768xbf16>, vector<4x768xf32> -> vector<4x768xf32>
    %381 = vector.extract_strided_slice %380 {offsets = [0, 0], sizes = [4, 384], strides = [1, 1]} : vector<4x768xf32> to vector<4x384xf32>
    %382 = vector.extract_strided_slice %380 {offsets = [0, 384], sizes = [4, 384], strides = [1, 1]} : vector<4x768xf32> to vector<4x384xf32>
    %383 = vector.extract_strided_slice %27 {offsets = [24, 0], sizes = [4, 384], strides = [1, 1]} : vector<32x384xf32> to vector<4x384xf32>
    %384 = vector.extract_strided_slice %383 {offsets = [0, 0], sizes = [4, 256], strides = [1, 1]} : vector<4x384xf32> to vector<4x256xf32>
    %385 = vector.extract_strided_slice %381 {offsets = [0, 0], sizes = [4, 256], strides = [1, 1]} : vector<4x384xf32> to vector<4x256xf32>
    %386 = arith.addf %384, %385 : vector<4x256xf32>
    %cst_76 = arith.constant 5.000000e-01 : f32
    %387 = vector.broadcast %cst_76 : f32 to vector<4x256xf32>
    %388 = arith.mulf %387, %386 : vector<4x256xf32>
    %389 = math.tanh %388 : vector<4x256xf32>
    %cst_77 = arith.constant 5.000000e-01 : f32
    %390 = vector.broadcast %cst_77 : f32 to vector<4x256xf32>
    %391 = arith.mulf %390, %389 : vector<4x256xf32>
    %cst_78 = arith.constant 5.000000e-01 : f32
    %392 = vector.broadcast %cst_78 : f32 to vector<4x256xf32>
    %393 = arith.addf %392, %391 : vector<4x256xf32>
    %394 = vector.extract_strided_slice %393 {offsets = [0, 0], sizes = [4, 128], strides = [1, 1]} : vector<4x256xf32> to vector<4x128xf32>
    %395 = vector.extract_strided_slice %393 {offsets = [0, 128], sizes = [4, 128], strides = [1, 1]} : vector<4x256xf32> to vector<4x128xf32>
    %396 = vector.extract_strided_slice %383 {offsets = [0, 256], sizes = [4, 128], strides = [1, 1]} : vector<4x384xf32> to vector<4x128xf32>
    %397 = vector.extract_strided_slice %381 {offsets = [0, 256], sizes = [4, 128], strides = [1, 1]} : vector<4x384xf32> to vector<4x128xf32>
    %398 = vector.broadcast %6 : vector<1x128xf32> to vector<4x128xf32>
    %399 = arith.addf %397, %398 : vector<4x128xf32>
    %400 = arith.mulf %394, %399 : vector<4x128xf32>
    %401 = arith.addf %396, %400 : vector<4x128xf32>
    %402 = math.tanh %401 : vector<4x128xf32>
    %cst_79 = arith.constant 1.000000e+00 : f32
    %403 = vector.broadcast %cst_79 : f32 to vector<4x128xf32>
    %404 = arith.subf %403, %395 : vector<4x128xf32>
    %405 = arith.mulf %404, %402 : vector<4x128xf32>
    %406 = arith.mulf %395, %349 : vector<4x128xf32>
    %407 = arith.addf %405, %406 : vector<4x128xf32>
    %408 = arith.truncf %407 : vector<4x128xf32> to vector<4x128xbf16>
    %cst_80 = arith.constant dense<0.000000e+00> : vector<4x384xf32>
    %409 = tpu.matmul %408, %1, %cst_80 {dimension_numbers = #tpu.dot_dimension_numbers<[1], [0], [0], [1], [0, 0, 1, 1], [], []>} : vector<4x128xbf16>, vector<128x384xbf16>, vector<4x384xf32> -> vector<4x384xf32>
    %410 = vector.broadcast %5 : vector<1x384xf32> to vector<4x384xf32>
    %411 = arith.addf %409, %410 : vector<4x384xf32>
    %412 = vector.extract_strided_slice %411 {offsets = [0, 0], sizes = [4, 256], strides = [1, 1]} : vector<4x384xf32> to vector<4x256xf32>
    %413 = vector.extract_strided_slice %382 {offsets = [0, 0], sizes = [4, 256], strides = [1, 1]} : vector<4x384xf32> to vector<4x256xf32>
    %414 = arith.addf %412, %413 : vector<4x256xf32>
    %cst_81 = arith.constant 5.000000e-01 : f32
    %415 = vector.broadcast %cst_81 : f32 to vector<4x256xf32>
    %416 = arith.mulf %415, %414 : vector<4x256xf32>
    %417 = math.tanh %416 : vector<4x256xf32>
    %cst_82 = arith.constant 5.000000e-01 : f32
    %418 = vector.broadcast %cst_82 : f32 to vector<4x256xf32>
    %419 = arith.mulf %418, %417 : vector<4x256xf32>
    %cst_83 = arith.constant 5.000000e-01 : f32
    %420 = vector.broadcast %cst_83 : f32 to vector<4x256xf32>
    %421 = arith.addf %420, %419 : vector<4x256xf32>
    %422 = vector.extract_strided_slice %421 {offsets = [0, 0], sizes = [4, 128], strides = [1, 1]} : vector<4x256xf32> to vector<4x128xf32>
    %423 = vector.extract_strided_slice %421 {offsets = [0, 128], sizes = [4, 128], strides = [1, 1]} : vector<4x256xf32> to vector<4x128xf32>
    %424 = vector.extract_strided_slice %411 {offsets = [0, 256], sizes = [4, 128], strides = [1, 1]} : vector<4x384xf32> to vector<4x128xf32>
    %425 = vector.extract_strided_slice %382 {offsets = [0, 256], sizes = [4, 128], strides = [1, 1]} : vector<4x384xf32> to vector<4x128xf32>
    %426 = vector.broadcast %7 : vector<1x128xf32> to vector<4x128xf32>
    %427 = arith.addf %425, %426 : vector<4x128xf32>
    %428 = arith.mulf %422, %427 : vector<4x128xf32>
    %429 = arith.addf %424, %428 : vector<4x128xf32>
    %430 = math.tanh %429 : vector<4x128xf32>
    %cst_84 = arith.constant 1.000000e+00 : f32
    %431 = vector.broadcast %cst_84 : f32 to vector<4x128xf32>
    %432 = arith.subf %431, %423 : vector<4x128xf32>
    %433 = arith.mulf %432, %430 : vector<4x128xf32>
    %434 = arith.mulf %423, %377 : vector<4x128xf32>
    %435 = arith.addf %433, %434 : vector<4x128xf32>
    %436 = tpu.concatenate %407, %435 in 1 : vector<4x128xf32>, vector<4x128xf32> -> vector<4x256xf32>
    %437 = arith.truncf %436 : vector<4x256xf32> to vector<4x256xbf16>
    %cst_85 = arith.constant dense<0.000000e+00> : vector<4x768xf32>
    %438 = tpu.matmul %437, %0, %cst_85 {dimension_numbers = #tpu.dot_dimension_numbers<[1], [0], [0], [1], [0, 0, 1, 1], [], []>} : vector<4x256xbf16>, vector<256x768xbf16>, vector<4x768xf32> -> vector<4x768xf32>
    %439 = vector.extract_strided_slice %438 {offsets = [0, 0], sizes = [4, 384], strides = [1, 1]} : vector<4x768xf32> to vector<4x384xf32>
    %440 = vector.extract_strided_slice %438 {offsets = [0, 384], sizes = [4, 384], strides = [1, 1]} : vector<4x768xf32> to vector<4x384xf32>
    %441 = vector.extract_strided_slice %27 {offsets = [28, 0], sizes = [4, 384], strides = [1, 1]} : vector<32x384xf32> to vector<4x384xf32>
    %442 = vector.extract_strided_slice %441 {offsets = [0, 0], sizes = [4, 256], strides = [1, 1]} : vector<4x384xf32> to vector<4x256xf32>
    %443 = vector.extract_strided_slice %439 {offsets = [0, 0], sizes = [4, 256], strides = [1, 1]} : vector<4x384xf32> to vector<4x256xf32>
    %444 = arith.addf %442, %443 : vector<4x256xf32>
    %cst_86 = arith.constant 5.000000e-01 : f32
    %445 = vector.broadcast %cst_86 : f32 to vector<4x256xf32>
    %446 = arith.mulf %445, %444 : vector<4x256xf32>
    %447 = math.tanh %446 : vector<4x256xf32>
    %cst_87 = arith.constant 5.000000e-01 : f32
    %448 = vector.broadcast %cst_87 : f32 to vector<4x256xf32>
    %449 = arith.mulf %448, %447 : vector<4x256xf32>
    %cst_88 = arith.constant 5.000000e-01 : f32
    %450 = vector.broadcast %cst_88 : f32 to vector<4x256xf32>
    %451 = arith.addf %450, %449 : vector<4x256xf32>
    %452 = vector.extract_strided_slice %451 {offsets = [0, 0], sizes = [4, 128], strides = [1, 1]} : vector<4x256xf32> to vector<4x128xf32>
    %453 = vector.extract_strided_slice %451 {offsets = [0, 128], sizes = [4, 128], strides = [1, 1]} : vector<4x256xf32> to vector<4x128xf32>
    %454 = vector.extract_strided_slice %441 {offsets = [0, 256], sizes = [4, 128], strides = [1, 1]} : vector<4x384xf32> to vector<4x128xf32>
    %455 = vector.extract_strided_slice %439 {offsets = [0, 256], sizes = [4, 128], strides = [1, 1]} : vector<4x384xf32> to vector<4x128xf32>
    %456 = vector.broadcast %6 : vector<1x128xf32> to vector<4x128xf32>
    %457 = arith.addf %455, %456 : vector<4x128xf32>
    %458 = arith.mulf %452, %457 : vector<4x128xf32>
    %459 = arith.addf %454, %458 : vector<4x128xf32>
    %460 = math.tanh %459 : vector<4x128xf32>
    %cst_89 = arith.constant 1.000000e+00 : f32
    %461 = vector.broadcast %cst_89 : f32 to vector<4x128xf32>
    %462 = arith.subf %461, %453 : vector<4x128xf32>
    %463 = arith.mulf %462, %460 : vector<4x128xf32>
    %464 = arith.mulf %453, %407 : vector<4x128xf32>
    %465 = arith.addf %463, %464 : vector<4x128xf32>
    %466 = arith.truncf %465 : vector<4x128xf32> to vector<4x128xbf16>
    %cst_90 = arith.constant dense<0.000000e+00> : vector<4x384xf32>
    %467 = tpu.matmul %466, %1, %cst_90 {dimension_numbers = #tpu.dot_dimension_numbers<[1], [0], [0], [1], [0, 0, 1, 1], [], []>} : vector<4x128xbf16>, vector<128x384xbf16>, vector<4x384xf32> -> vector<4x384xf32>
    %468 = vector.broadcast %5 : vector<1x384xf32> to vector<4x384xf32>
    %469 = arith.addf %467, %468 : vector<4x384xf32>
    %470 = vector.extract_strided_slice %469 {offsets = [0, 0], sizes = [4, 256], strides = [1, 1]} : vector<4x384xf32> to vector<4x256xf32>
    %471 = vector.extract_strided_slice %440 {offsets = [0, 0], sizes = [4, 256], strides = [1, 1]} : vector<4x384xf32> to vector<4x256xf32>
    %472 = arith.addf %470, %471 : vector<4x256xf32>
    %cst_91 = arith.constant 5.000000e-01 : f32
    %473 = vector.broadcast %cst_91 : f32 to vector<4x256xf32>
    %474 = arith.mulf %473, %472 : vector<4x256xf32>
    %475 = math.tanh %474 : vector<4x256xf32>
    %cst_92 = arith.constant 5.000000e-01 : f32
    %476 = vector.broadcast %cst_92 : f32 to vector<4x256xf32>
    %477 = arith.mulf %476, %475 : vector<4x256xf32>
    %cst_93 = arith.constant 5.000000e-01 : f32
    %478 = vector.broadcast %cst_93 : f32 to vector<4x256xf32>
    %479 = arith.addf %478, %477 : vector<4x256xf32>
    %480 = vector.extract_strided_slice %479 {offsets = [0, 0], sizes = [4, 128], strides = [1, 1]} : vector<4x256xf32> to vector<4x128xf32>
    %481 = vector.extract_strided_slice %479 {offsets = [0, 128], sizes = [4, 128], strides = [1, 1]} : vector<4x256xf32> to vector<4x128xf32>
    %482 = vector.extract_strided_slice %469 {offsets = [0, 256], sizes = [4, 128], strides = [1, 1]} : vector<4x384xf32> to vector<4x128xf32>
    %483 = vector.extract_strided_slice %440 {offsets = [0, 256], sizes = [4, 128], strides = [1, 1]} : vector<4x384xf32> to vector<4x128xf32>
    %484 = vector.broadcast %7 : vector<1x128xf32> to vector<4x128xf32>
    %485 = arith.addf %483, %484 : vector<4x128xf32>
    %486 = arith.mulf %480, %485 : vector<4x128xf32>
    %487 = arith.addf %482, %486 : vector<4x128xf32>
    %488 = math.tanh %487 : vector<4x128xf32>
    %cst_94 = arith.constant 1.000000e+00 : f32
    %489 = vector.broadcast %cst_94 : f32 to vector<4x128xf32>
    %490 = arith.subf %489, %481 : vector<4x128xf32>
    %491 = arith.mulf %490, %488 : vector<4x128xf32>
    %492 = arith.mulf %481, %435 : vector<4x128xf32>
    %493 = arith.addf %491, %492 : vector<4x128xf32>
    %494 = tpu.concatenate %465, %493 in 0 : vector<4x128xf32>, vector<4x128xf32> -> vector<8x128xf32>
    %495 = arith.truncf %494 : vector<8x128xf32> to vector<8x128xbf16>
    %cst_95 = arith.constant dense<0.000000e+00> : vector<8x64xf32>
    %496 = tpu.matmul %495, %2, %cst_95 {dimension_numbers = #tpu.dot_dimension_numbers<[1], [0], [0], [1], [0, 0, 1, 1], [], []>} : vector<8x128xbf16>, vector<128x64xbf16>, vector<8x64xf32> -> vector<8x64xf32>
    %497 = math.tanh %496 : vector<8x64xf32>
    %498 = arith.truncf %497 : vector<8x64xf32> to vector<8x64xbf16>
    %cst_96 = arith.constant dense<0.000000e+00> : vector<8x2xf32>
    %499 = tpu.matmul %498, %3, %cst_96 {dimension_numbers = #tpu.dot_dimension_numbers<[1], [0], [0], [1], [0, 0, 1, 1], [], []>} : vector<8x64xbf16>, vector<64x2xbf16>, vector<8x2xf32> -> vector<8x2xf32>
    %500 = vector.extract_strided_slice %499 {offsets = [0, 0], sizes = [4, 2], strides = [1, 1]} : vector<8x2xf32> to vector<4x2xf32>
    %501 = vector.extract_strided_slice %499 {offsets = [4, 0], sizes = [4, 2], strides = [1, 1]} : vector<8x2xf32> to vector<4x2xf32>
    %502 = arith.maximumf %500, %501 : vector<4x2xf32>
    %503 = arith.subf %500, %502 : vector<4x2xf32>
    %504 = math.exp %503 : vector<4x2xf32>
    %505 = arith.subf %501, %502 : vector<4x2xf32>
    %506 = math.exp %505 : vector<4x2xf32>
    %507 = arith.addf %504, %506 : vector<4x2xf32>
    %cst_97 = arith.constant 1.000000e+00 : f32
    %508 = vector.broadcast %cst_97 : f32 to vector<4x2xf32>
    %509 = arith.divf %508, %507 : vector<4x2xf32>
    %510 = arith.mulf %504, %509 : vector<4x2xf32>
    %511 = arith.mulf %506, %509 : vector<4x2xf32>
    %512 = vector.extract_strided_slice %510 {offsets = [0, 0], sizes = [4, 1], strides = [1, 1]} : vector<4x2xf32> to vector<4x1xf32>
    %513 = vector.extract_strided_slice %510 {offsets = [0, 0], sizes = [4, 1], strides = [1, 1]} : vector<4x2xf32> to vector<4x1xf32>
    %514 = arith.mulf %512, %513 : vector<4x1xf32>
    %515 = vector.extract_strided_slice %511 {offsets = [0, 0], sizes = [4, 1], strides = [1, 1]} : vector<4x2xf32> to vector<4x1xf32>
    %516 = vector.extract_strided_slice %511 {offsets = [0, 0], sizes = [4, 1], strides = [1, 1]} : vector<4x2xf32> to vector<4x1xf32>
    %517 = arith.mulf %515, %516 : vector<4x1xf32>
    %518 = arith.addf %514, %517 : vector<4x1xf32>
    %519 = vector.extract_strided_slice %510 {offsets = [0, 0], sizes = [4, 1], strides = [1, 1]} : vector<4x2xf32> to vector<4x1xf32>
    %520 = vector.extract_strided_slice %510 {offsets = [0, 1], sizes = [4, 1], strides = [1, 1]} : vector<4x2xf32> to vector<4x1xf32>
    %521 = arith.mulf %519, %520 : vector<4x1xf32>
    %522 = vector.extract_strided_slice %511 {offsets = [0, 0], sizes = [4, 1], strides = [1, 1]} : vector<4x2xf32> to vector<4x1xf32>
    %523 = vector.extract_strided_slice %511 {offsets = [0, 1], sizes = [4, 1], strides = [1, 1]} : vector<4x2xf32> to vector<4x1xf32>
    %524 = arith.mulf %522, %523 : vector<4x1xf32>
    %525 = arith.addf %521, %524 : vector<4x1xf32>
    %526 = vector.extract_strided_slice %510 {offsets = [0, 1], sizes = [4, 1], strides = [1, 1]} : vector<4x2xf32> to vector<4x1xf32>
    %527 = vector.extract_strided_slice %510 {offsets = [0, 1], sizes = [4, 1], strides = [1, 1]} : vector<4x2xf32> to vector<4x1xf32>
    %528 = arith.mulf %526, %527 : vector<4x1xf32>
    %529 = vector.extract_strided_slice %511 {offsets = [0, 1], sizes = [4, 1], strides = [1, 1]} : vector<4x2xf32> to vector<4x1xf32>
    %530 = vector.extract_strided_slice %511 {offsets = [0, 1], sizes = [4, 1], strides = [1, 1]} : vector<4x2xf32> to vector<4x1xf32>
    %531 = arith.mulf %529, %530 : vector<4x1xf32>
    %532 = arith.addf %528, %531 : vector<4x1xf32>
    %cst_98 = arith.constant 1.000000e+00 : f32
    %533 = vector.broadcast %cst_98 : f32 to vector<4x1xf32>
    %534 = arith.subf %518, %533 : vector<4x1xf32>
    %535 = arith.mulf %534, %534 : vector<4x1xf32>
    %536 = vector.shape_cast %535 : vector<4x1xf32> to vector<1x4x1xf32>
    %cst_99 = arith.constant dense<0.000000e+00> : vector<1xf32>
    %537 = vector.multi_reduction <add>, %536, %cst_99 [1, 2] : vector<1x4x1xf32> to vector<1xf32>
    %538 = vector.shape_cast %537 : vector<1xf32> to vector<1x1x1xf32>
    %539 = vector.extract %538[0, 0, 0] : f32 from vector<1x1x1xf32>
    %540 = arith.mulf %525, %525 : vector<4x1xf32>
    %541 = vector.shape_cast %540 : vector<4x1xf32> to vector<1x4x1xf32>
    %cst_100 = arith.constant dense<0.000000e+00> : vector<1xf32>
    %542 = vector.multi_reduction <add>, %541, %cst_100 [1, 2] : vector<1x4x1xf32> to vector<1xf32>
    %543 = vector.shape_cast %542 : vector<1xf32> to vector<1x1x1xf32>
    %544 = vector.extract %543[0, 0, 0] : f32 from vector<1x1x1xf32>
    %cst_101 = arith.constant 2.000000e+00 : f32
    %545 = arith.mulf %cst_101, %544 : f32
    %546 = arith.addf %539, %545 : f32
    %cst_102 = arith.constant 1.000000e+00 : f32
    %547 = vector.broadcast %cst_102 : f32 to vector<4x1xf32>
    %548 = arith.subf %532, %547 : vector<4x1xf32>
    %549 = arith.mulf %548, %548 : vector<4x1xf32>
    %550 = vector.shape_cast %549 : vector<4x1xf32> to vector<1x4x1xf32>
    %cst_103 = arith.constant dense<0.000000e+00> : vector<1xf32>
    %551 = vector.multi_reduction <add>, %550, %cst_103 [1, 2] : vector<1x4x1xf32> to vector<1xf32>
    %552 = vector.shape_cast %551 : vector<1xf32> to vector<1x1x1xf32>
    %553 = vector.extract %552[0, 0, 0] : f32 from vector<1x1x1xf32>
    %554 = arith.addf %546, %553 : f32
    %555 = vector.extract_strided_slice %510 {offsets = [0, 0], sizes = [4, 1], strides = [1, 1]} : vector<4x2xf32> to vector<4x1xf32>
    %556 = vector.extract_strided_slice %510 {offsets = [0, 1], sizes = [4, 1], strides = [1, 1]} : vector<4x2xf32> to vector<4x1xf32>
    %557 = arith.addf %555, %556 : vector<4x1xf32>
    %558 = vector.broadcast %557 : vector<4x1xf32> to vector<4x128xf32>
    %559 = arith.mulf %465, %558 : vector<4x128xf32>
    %560 = vector.extract_strided_slice %511 {offsets = [0, 0], sizes = [4, 1], strides = [1, 1]} : vector<4x2xf32> to vector<4x1xf32>
    %561 = vector.extract_strided_slice %511 {offsets = [0, 1], sizes = [4, 1], strides = [1, 1]} : vector<4x2xf32> to vector<4x1xf32>
    %562 = arith.addf %560, %561 : vector<4x1xf32>
    %563 = vector.broadcast %562 : vector<4x1xf32> to vector<4x128xf32>
    %564 = arith.mulf %493, %563 : vector<4x128xf32>
    %565 = arith.addf %559, %564 : vector<4x128xf32>
    %566 = vector.broadcast %8 : vector<1x128xf32> to vector<4x128xf32>
    %567 = arith.mulf %565, %566 : vector<4x128xf32>
    %cst_104 = arith.constant dense<0.000000e+00> : vector<4xf32>
    %568 = vector.multi_reduction <add>, %567, %cst_104 [1] : vector<4x128xf32> to vector<4xf32>
    %569 = vector.shape_cast %568 : vector<4xf32> to vector<4x1xf32>
    %570 = vector.broadcast %9 : vector<1x1xf32> to vector<4x1xf32>
    %571 = arith.addf %569, %570 : vector<4x1xf32>
    %572 = tpu.iota {dimensions = array<i32: 0>} : vector<8x128xi32>
    %cst_105 = arith.constant 0.000000e+00 : f32
    %573 = vector.broadcast %cst_105 : f32 to vector<4x1xf32>
    %574 = tpu.concatenate %571, %573 in 0 : vector<4x1xf32>, vector<4x1xf32> -> vector<8x1xf32>
    %cst_106 = arith.constant 1.000000e+00 : f32
    %575 = vector.broadcast %cst_106 : f32 to vector<1x128xf32>
    %576 = vector.broadcast %574 : vector<8x1xf32> to vector<8x128xf32>
    %577 = vector.broadcast %575 : vector<1x128xf32> to vector<8x128xf32>
    %578 = arith.mulf %576, %577 : vector<8x128xf32>
    %cst_107 = arith.constant 1.000000e+00 : f32
    %579 = vector.broadcast %cst_107 : f32 to vector<8x128xf32>
    %580 = vector.broadcast %554 : f32 to vector<8x128xf32>
    %581 = arith.mulf %580, %579 : vector<8x128xf32>
    %c4_i32 = arith.constant 4 : i32
    %582 = vector.broadcast %c4_i32 : i32 to vector<8x128xi32>
    %583 = arith.cmpi slt, %572, %582 : vector<8x128xi32>
    %584 = arith.select %583, %578, %581 : vector<8x128xi1>, vector<8x128xf32>
    %c0_108 = arith.constant 0 : index
    %c0_109 = arith.constant 0 : index
    %585 = vector.load %arg2[%c0_108, %c0_109] : memref<8x128xf32, #tpu.memory_space<vmem>>, vector<8x128xf32>
    tpu.vector_store %arg2[%c0_108, %c0_109], %584 {strides = array<i32>} : memref<8x128xf32, #tpu.memory_space<vmem>>, vector<8x128xf32>,
    return
  }
}

</mosaic_0001>

<llo_original>
// kernel: model_attention_forward.1
$region0: #{model_attention_forward.1}
  #allocation0 [shape = 'u32[]', space=smem, size = 0x4, offset = 0x4, fixed_abs, tag = 'smem constant byte address 0x4 - core index']
  #allocation1 [shape = 'u32[72,128]{1,0:T(1,128)}', space=vmem, size = 0x9000, scoped, tag = 'internal scratch']
  %s0 = inlined_call_operand.vmem [shape: bf16[576,768], index: 0, kind: input, shape index: {}]
  %s1 = inlined_call_operand.vmem [shape: f32[40,384], index: 1, kind: input, shape index: {}]
  %s2 = inlined_call_operand.vmem [shape: f32[8,128], index: 2, kind: output, shape index: {}]
  %s3 = sld [smem:[#allocation0]]
  $region18: #{model_attention_forward.1} parent=0
    _
  %s5 = ssub.s32 1, %s3
  %s6 = scalar_select 0, %s5, %s3
  // Predicated region
  $region2: #{model_attention_forward.1} parent=0 // pred_check
    _
  $region3: #{model_attention_forward.1} parent=0 // pred_check_branch
    %8 = sbr.rel (0) target = $region5
  $region4: #{model_attention_forward.1} parent=0 // pred_region
    _
  $region5: #{model_attention_forward.1} parent=0 // pred_fallthru
    _
  // Predicated region
  $region6: #{model_attention_forward.1} parent=0 // pred_check
    _
  $region7: #{model_attention_forward.1} parent=0 // pred_check_branch
    %10 = sbr.rel (0) target = $region9
  $region8: #{model_attention_forward.1} parent=0 // pred_region
    _
  $region9: #{model_attention_forward.1} parent=0 // pred_fallthru
    _
  %v12 = vld [vmem:[%s0] sm:$0xff]
  %v13 = vld [vmem:[%s0 + $0x8] sm:$0xff]
  %v14 = vld [vmem:[%s0 + $0x10] sm:$0xff]
  %v15 = vld [vmem:[%s0 + $0x18] sm:$0xff]
  %v16 = vld [vmem:[%s0 + $0x20] sm:$0xff]
  %v17 = vld [vmem:[%s0 + $0x28] sm:$0xff]
  %v18 = vld [vmem:[%s0 + $0x30] sm:$0xff]
  %v19 = vld [vmem:[%s0 + $0x38] sm:$0xff]
  %v20 = vld [vmem:[%s0 + $0x40] sm:$0xff]
  %v21 = vld [vmem:[%s0 + $0x48] sm:$0xff]
  %v22 = vld [vmem:[%s0 + $0x50] sm:$0xff]
  %v23 = vld [vmem:[%s0 + $0x58] sm:$0xff]
  %v24 = vld [vmem:[%s0 + $0x60] sm:$0xff]
  %v25 = vld [vmem:[%s0 + $0x68] sm:$0xff]
  %v26 = vld [vmem:[%s0 + $0x70] sm:$0xff]
  %v27 = vld [vmem:[%s0 + $0x78] sm:$0xff]
  %v28 = vld [vmem:[%s0 + $0x80] sm:$0xff]
  %v29 = vld [vmem:[%s0 + $0x88] sm:$0xff]
  %v30 = vld [vmem:[%s0 + $0x90] sm:$0xff]
  %v31 = vld [vmem:[%s0 + $0x98] sm:$0xff]
  %v32 = vld [vmem:[%s0 + $0xa0] sm:$0xff]
  %v33 = vld [vmem:[%s0 + $0xa8] sm:$0xff]
  %v34 = vld [vmem:[%s0 + $0xb0] sm:$0xff]
  %v35 = vld [vmem:[%s0 + $0xb8] sm:$0xff]
  %v36 = vld [vmem:[%s0 + $0xc0] sm:$0xff]
  %v37 = vld [vmem:[%s0 + $0xc8] sm:$0xff]
  %v38 = vld [vmem:[%s0 + $0xd0] sm:$0xff]
  %v39 = vld [vmem:[%s0 + $0xd8] sm:$0xff]
  %v40 = vld [vmem:[%s0 + $0xe0] sm:$0xff]
  %v41 = vld [vmem:[%s0 + $0xe8] sm:$0xff]
  %v42 = vld [vmem:[%s0 + $0xf0] sm:$0xff]
  %v43 = vld [vmem:[%s0 + $0xf8] sm:$0xff]
  %v44 = vld [vmem:[%s0 + $0x100] sm:$0xff]
  %v45 = vld [vmem:[%s0 + $0x108] sm:$0xff]
  %v46 = vld [vmem:[%s0 + $0x110] sm:$0xff]
  %v47 = vld [vmem:[%s0 + $0x118] sm:$0xff]
  %v48 = vld [vmem:[%s0 + $0x120] sm:$0xff]
  %v49 = vld [vmem:[%s0 + $0x128] sm:$0xff]
  %v50 = vld [vmem:[%s0 + $0x130] sm:$0xff]
  %v51 = vld [vmem:[%s0 + $0x138] sm:$0xff]
  %v52 = vld [vmem:[%s0 + $0x140] sm:$0xff]
  %v53 = vld [vmem:[%s0 + $0x148] sm:$0xff]
  %v54 = vld [vmem:[%s0 + $0x150] sm:$0xff]
  %v55 = vld [vmem:[%s0 + $0x158] sm:$0xff]
  %v56 = vld [vmem:[%s0 + $0x160] sm:$0xff]
  %v57 = vld [vmem:[%s0 + $0x168] sm:$0xff]
  %v58 = vld [vmem:[%s0 + $0x170] sm:$0xff]
  %v59 = vld [vmem:[%s0 + $0x178] sm:$0xff]
  %v60 = vld [vmem:[%s0 + $0x180] sm:$0xff]
  %v61 = vld [vmem:[%s0 + $0x188] sm:$0xff]
  %v62 = vld [vmem:[%s0 + $0x190] sm:$0xff]
  %v63 = vld [vmem:[%s0 + $0x198] sm:$0xff]
  %v64 = vld [vmem:[%s0 + $0x1a0] sm:$0xff]
  %v65 = vld [vmem:[%s0 + $0x1a8] sm:$0xff]
  %v66 = vld [vmem:[%s0 + $0x1b0] sm:$0xff]
  %v67 = vld [vmem:[%s0 + $0x1b8] sm:$0xff]
  %v68 = vld [vmem:[%s0 + $0x1c0] sm:$0xff]
  %v69 = vld [vmem:[%s0 + $0x1c8] sm:$0xff]
  %v70 = vld [vmem:[%s0 + $0x1d0] sm:$0xff]
  %v71 = vld [vmem:[%s0 + $0x1d8] sm:$0xff]
  %v72 = vld [vmem:[%s0 + $0x1e0] sm:$0xff]
  %v73 = vld [vmem:[%s0 + $0x1e8] sm:$0xff]
  %v74 = vld [vmem:[%s0 + $0x1f0] sm:$0xff]
  %v75 = vld [vmem:[%s0 + $0x1f8] sm:$0xff]
  %v76 = vld [vmem:[%s0 + $0x200] sm:$0xff]
  %v77 = vld [vmem:[%s0 + $0x208] sm:$0xff]
  %v78 = vld [vmem:[%s0 + $0x210] sm:$0xff]
  %v79 = vld [vmem:[%s0 + $0x218] sm:$0xff]
  %v80 = vld [vmem:[%s0 + $0x220] sm:$0xff]
  %v81 = vld [vmem:[%s0 + $0x228] sm:$0xff]
  %v82 = vld [vmem:[%s0 + $0x230] sm:$0xff]
  %v83 = vld [vmem:[%s0 + $0x238] sm:$0xff]
  %v84 = vld [vmem:[%s0 + $0x240] sm:$0xff]
  %v85 = vld [vmem:[%s0 + $0x248] sm:$0xff]
  %v86 = vld [vmem:[%s0 + $0x250] sm:$0xff]
  %v87 = vld [vmem:[%s0 + $0x258] sm:$0xff]
  %v88 = vld [vmem:[%s0 + $0x260] sm:$0xff]
  %v89 = vld [vmem:[%s0 + $0x268] sm:$0xff]
  %v90 = vld [vmem:[%s0 + $0x270] sm:$0xff]
  %v91 = vld [vmem:[%s0 + $0x278] sm:$0xff]
  %v92 = vld [vmem:[%s0 + $0x280] sm:$0xff]
  %v93 = vld [vmem:[%s0 + $0x288] sm:$0xff]
  %v94 = vld [vmem:[%s0 + $0x290] sm:$0xff]
  %v95 = vld [vmem:[%s0 + $0x298] sm:$0xff]
  %v96 = vld [vmem:[%s0 + $0x2a0] sm:$0xff]
  %v97 = vld [vmem:[%s0 + $0x2a8] sm:$0xff]
  %v98 = vld [vmem:[%s0 + $0x2b0] sm:$0xff]
  %v99 = vld [vmem:[%s0 + $0x2b8] sm:$0xff]
  %v100 = vld [vmem:[%s0 + $0x2c0] sm:$0xff]
  %v101 = vld [vmem:[%s0 + $0x2c8] sm:$0xff]
  %v102 = vld [vmem:[%s0 + $0x2d0] sm:$0xff]
  %v103 = vld [vmem:[%s0 + $0x2d8] sm:$0xff]
  %v104 = vld [vmem:[%s0 + $0x2e0] sm:$0xff]
  %v105 = vld [vmem:[%s0 + $0x2e8] sm:$0xff]
  %v106 = vld [vmem:[%s0 + $0x2f0] sm:$0xff]
  %v107 = vld [vmem:[%s0 + $0x2f8] sm:$0xff]
  %v108 = vld [vmem:[%s0 + $0x300] sm:$0xff]
  %v109 = vld [vmem:[%s0 + $0x308] sm:$0xf]
  %v110 = vld [vmem:[%s0 + $0x318] sm:$0xff]
  %v111 = vld [vmem:[%s0 + $0x320] sm:$0xf]
  %v112 = vld [vmem:[%s0 + $0x330] sm:$0xff]
  %v113 = vld [vmem:[%s0 + $0x338] sm:$0xf]
  %v114 = vld [vmem:[%s0 + $0x348] sm:$0xff]
  %v115 = vld [vmem:[%s0 + $0x350] sm:$0xf]
  %v116 = vld [vmem:[%s0 + $0x360] sm:$0xff]
  %v117 = vld [vmem:[%s0 + $0x368] sm:$0xf]
  %v118 = vld [vmem:[%s0 + $0x378] sm:$0xff]
  %v119 = vld [vmem:[%s0 + $0x380] sm:$0xf]
  %v120 = vld [vmem:[%s0 + $0x390] sm:$0xff]
  %v121 = vld [vmem:[%s0 + $0x398] sm:$0xf]
  %v122 = vld [vmem:[%s0 + $0x3a8] sm:$0xff]
  %v123 = vld [vmem:[%s0 + $0x3b0] sm:$0xf]
  %v124 = vld [vmem:[%s0 + $0x3c0] sm:$0xff]
  %v125 = vld [vmem:[%s0 + $0x3c8] sm:$0xf]
  %v126 = vld [vmem:[%s0 + $0x3d8] sm:$0xff]
  %v127 = vld [vmem:[%s0 + $0x3e0] sm:$0xf]
  %v128 = vld [vmem:[%s0 + $0x3f0] sm:$0xff]
  %v129 = vld [vmem:[%s0 + $0x3f8] sm:$0xf]
  %v130 = vld [vmem:[%s0 + $0x408] sm:$0xff]
  %v131 = vld [vmem:[%s0 + $0x410] sm:$0xf]
  %v132 = vld [vmem:[%s0 + $0x420] sm:$0xff]
  %v133 = vld [vmem:[%s0 + $0x428] sm:$0xf]
  %v134 = vld [vmem:[%s0 + $0x438] sm:$0xff]
  %v135 = vld [vmem:[%s0 + $0x440] sm:$0xf]
  %v136 = vld [vmem:[%s0 + $0x450] sm:$0xff]
  %v137 = vld [vmem:[%s0 + $0x458] sm:$0xf]
  %v138 = vld [vmem:[%s0 + $0x468] sm:$0xff]
  %v139 = vld [vmem:[%s0 + $0x470] sm:$0xf]
  %v140 = vld [vmem:[%s0 + $0x480] sm:$0xf]
  %v141 = vld [vmem:[%s0 + $0x498] sm:$0xf]
  %v142 = vld [vmem:[%s0 + $0x4b0] sm:$0xf]
  %v143 = vld [vmem:[%s0 + $0x4c8] sm:$0xf]
  %v144 = vld [vmem:[%s0 + $0x4e0] sm:$0xf]
  %v145 = vld [vmem:[%s0 + $0x4f8] sm:$0xf]
  %v146 = vld [vmem:[%s0 + $0x510] sm:$0xf]
  %v147 = vld [vmem:[%s0 + $0x528] sm:$0xf]
  %v148 = vld [vmem:[%s0 + $0x540] sm:$0xf]
  %v149 = vld [vmem:[%s0 + $0x558] sm:$0xf]
  %v150 = vld [vmem:[%s0 + $0x570] sm:$0xf]
  %v151 = vld [vmem:[%s0 + $0x588] sm:$0xf]
  %v152 = vld [vmem:[%s0 + $0x5a0] sm:$0xf]
  %v153 = vld [vmem:[%s0 + $0x5b8] sm:$0xf]
  %v154 = vld [vmem:[%s0 + $0x5d0] sm:$0xf]
  %v155 = vld [vmem:[%s0 + $0x5e8] sm:$0xf]
  %v156 = vld [vmem:[%s0 + $0x600] sm:$0xf]
  %v157 = vld [vmem:[%s0 + $0x618] sm:$0xf]
  %v158 = vld [vmem:[%s0 + $0x630] sm:$0xf]
  %v159 = vld [vmem:[%s0 + $0x648] sm:$0xf]
  %v160 = vld [vmem:[%s0 + $0x660] sm:$0xf]
  %v161 = vld [vmem:[%s0 + $0x678] sm:$0xf]
  %v162 = vld [vmem:[%s0 + $0x690] sm:$0xf]
  %v163 = vld [vmem:[%s0 + $0x6a8] sm:$0xf]
  %v164 = vld [vmem:[%s1] ss:$8 sm:$0x7]
  %s165 = scalar_lea.vmem %s1, 1
  %v166 = vld [vmem:[%s165] ss:$8 sm:$0x7]
  %v167 = vld [vmem:[%s1 + $0x2] ss:$0 sm:$0xff]
  %v168 = vld [vmem:[%s1 + $0xa] ss:$0 sm:$0xff]
  %v169 = vld [vmem:[%s1 + $0x12] ss:$0 sm:$0xff]
  %v170 = vld [vmem:[%s1 + $0x3] ss:$0 sm:$0xff]
  %v171 = vld [vmem:[%s1] sm:$0x30]
  %v172 = vld [vmem:[%s1 + $0x8] sm:$0x30]
  %v173 = vld [vmem:[%s1 + $0x10] sm:$0x30]
  %v174 = vld [vmem:[%s1 + $0x18] sm:$0xff]
  %v175 = vld [vmem:[%s1 + $0x30] sm:$0xff]
  %v176 = vld [vmem:[%s1 + $0x48] sm:$0xff]
  %v177 = vld [vmem:[%s1 + $0x60] sm:$0xff]
  %v178 = vperm.slane %v171, 4
  %v179 = vperm.slane %v172, 4
  %v180 = vperm.slane %v173, 4
  %v181 = vperm.slane %v171, 5
  %v182 = vperm.slane %v172, 5
  %v183 = vperm.slane %v173, 5
  %v185 = vperm.slane %v164, 0
  %v186 = vperm.slane %v164, 1
  %v187 = vperm.slane %v164, 2
  %192 = vset.pattern.permute.xlu0 0
  %193 = vperm.xlu0 %192, %v174
  %v194 = vpop.permute.xlu0 %193
  %197 = vset.pattern.permute.xlu0 0
  %198 = vperm.xlu0 %197, %v175
  %v199 = vpop.permute.xlu0 %198
  %202 = vset.pattern.permute.xlu0 0
  %203 = vperm.xlu0 %202, %v176
  %v204 = vpop.permute.xlu0 %203
  %207 = vset.pattern.permute.xlu0 0
  %208 = vperm.xlu0 %207, %v177
  %v209 = vpop.permute.xlu0 %208
  %v211 = vmul.f32 %v194, %v178
  %v212 = vmul.f32 %v194, %v179
  %v213 = vmul.f32 %v194, %v180
  %v214 = vmul.f32 %v199, %v178
  %v215 = vmul.f32 %v199, %v179
  %v216 = vmul.f32 %v199, %v180
  %v217 = vmul.f32 %v204, %v178
  %v218 = vmul.f32 %v204, %v179
  %v219 = vmul.f32 %v204, %v180
  %v220 = vmul.f32 %v209, %v178
  %v221 = vmul.f32 %v209, %v179
  %v222 = vmul.f32 %v209, %v180
  %223 = vset.pattern.permute.xlu0 1
  %224 = vperm.xlu0 %223, %v174
  %v225 = vpop.permute.xlu0 %224
  %227 = vset.pattern.permute.xlu0 1
  %228 = vperm.xlu0 %227, %v175
  %v229 = vpop.permute.xlu0 %228
  %231 = vset.pattern.permute.xlu0 1
  %232 = vperm.xlu0 %231, %v176
  %v233 = vpop.permute.xlu0 %232
  %235 = vset.pattern.permute.xlu0 1
  %236 = vperm.xlu0 %235, %v177
  %v237 = vpop.permute.xlu0 %236
  %v239 = vmul.f32 %v225, %v181
  %v240 = vmul.f32 %v225, %v182
  %v241 = vmul.f32 %v225, %v183
  %v242 = vmul.f32 %v229, %v181
  %v243 = vmul.f32 %v229, %v182
  %v244 = vmul.f32 %v229, %v183
  %v245 = vmul.f32 %v233, %v181
  %v246 = vmul.f32 %v233, %v182
  %v247 = vmul.f32 %v233, %v183
  %v248 = vmul.f32 %v237, %v181
  %v249 = vmul.f32 %v237, %v182
  %v250 = vmul.f32 %v237, %v183
  %v251 = vadd.f32 %v211, %v239
  %v252 = vadd.f32 %v212, %v240
  %v253 = vadd.f32 %v213, %v241
  %v254 = vadd.f32 %v214, %v242
  %v255 = vadd.f32 %v215, %v243
  %v256 = vadd.f32 %v216, %v244
  %v257 = vadd.f32 %v217, %v245
  %v258 = vadd.f32 %v218, %v246
  %v259 = vadd.f32 %v219, %v247
  %v260 = vadd.f32 %v220, %v248
  %v261 = vadd.f32 %v221, %v249
  %v262 = vadd.f32 %v222, %v250
  %v263 = vadd.f32 %v251, %v185
  %v264 = vadd.f32 %v252, %v186
  %v265 = vadd.f32 %v253, %v187
  %v266 = vadd.f32 %v254, %v185
  %v267 = vadd.f32 %v255, %v186
  %v268 = vadd.f32 %v256, %v187
  %v269 = vadd.f32 %v257, %v185
  %v270 = vadd.f32 %v258, %v186
  %v271 = vadd.f32 %v259, %v187
  %v272 = vadd.f32 %v260, %v185
  %v273 = vadd.f32 %v261, %v186
  %v274 = vadd.f32 %v262, %v187
  %v275 = vpack.c.bf16 0.0, 0.0
  %v372 = vunpack.c.l.b16 %v12
  %v373 = vunpack.c.h.b16 %v12
  %v374 = vunpack.c.l.b16 %v13
  %v375 = vunpack.c.h.b16 %v13
  %v376 = vunpack.c.l.b16 %v14
  %v377 = vunpack.c.h.b16 %v14
  %v378 = vunpack.c.l.b16 %v15
  %v379 = vunpack.c.h.b16 %v15
  %v380 = vunpack.c.l.b16 %v16
  %v381 = vunpack.c.h.b16 %v16
  %v382 = vunpack.c.l.b16 %v17
  %v383 = vunpack.c.h.b16 %v17
  %v384 = vunpack.c.l.b16 %v18
  %v385 = vunpack.c.h.b16 %v18
  %v386 = vunpack.c.l.b16 %v19
  %v387 = vunpack.c.h.b16 %v19
  %v388 = vunpack.c.l.b16 %v20
  %v389 = vunpack.c.h.b16 %v20
  %v390 = vunpack.c.l.b16 %v21
  %v391 = vunpack.c.h.b16 %v21
  %v392 = vunpack.c.l.b16 %v22
  %v393 = vunpack.c.h.b16 %v22
  %v394 = vunpack.c.l.b16 %v23
  %v395 = vunpack.c.h.b16 %v23
  %v396 = vunpack.c.l.b16 %v24
  %v397 = vunpack.c.h.b16 %v24
  %v398 = vunpack.c.l.b16 %v25
  %v399 = vunpack.c.h.b16 %v25
  %v400 = vunpack.c.l.b16 %v26
  %v401 = vunpack.c.h.b16 %v26
  %v402 = vunpack.c.l.b16 %v27
  %v403 = vunpack.c.h.b16 %v27
  %v404 = vunpack.c.l.b16 %v28
  %v405 = vunpack.c.h.b16 %v28
  %v406 = vunpack.c.l.b16 %v29
  %v407 = vunpack.c.h.b16 %v29
  %v408 = vunpack.c.l.b16 %v30
  %v409 = vunpack.c.h.b16 %v30
  %v410 = vunpack.c.l.b16 %v31
  %v411 = vunpack.c.h.b16 %v31
  %v412 = vunpack.c.l.b16 %v32
  %v413 = vunpack.c.h.b16 %v32
  %v414 = vunpack.c.l.b16 %v33
  %v415 = vunpack.c.h.b16 %v33
  %v416 = vunpack.c.l.b16 %v34
  %v417 = vunpack.c.h.b16 %v34
  %v418 = vunpack.c.l.b16 %v35
  %v419 = vunpack.c.h.b16 %v35
  %v420 = vunpack.c.l.b16 %v36
  %v421 = vunpack.c.h.b16 %v36
  %v422 = vunpack.c.l.b16 %v37
  %v423 = vunpack.c.h.b16 %v37
  %v424 = vunpack.c.l.b16 %v38
  %v425 = vunpack.c.h.b16 %v38
  %v426 = vunpack.c.l.b16 %v39
  %v427 = vunpack.c.h.b16 %v39
  %v428 = vunpack.c.l.b16 %v40
  %v429 = vunpack.c.h.b16 %v40
  %v430 = vunpack.c.l.b16 %v41
  %v431 = vunpack.c.h.b16 %v41
  %v432 = vunpack.c.l.b16 %v42
  %v433 = vunpack.c.h.b16 %v42
  %v434 = vunpack.c.l.b16 %v43
  %v435 = vunpack.c.h.b16 %v43
  %v436 = vunpack.c.l.b16 %v44
  %v437 = vunpack.c.h.b16 %v44
  %v438 = vunpack.c.l.b16 %v45
  %v439 = vunpack.c.h.b16 %v45
  %v440 = vunpack.c.l.b16 %v46
  %v441 = vunpack.c.h.b16 %v46
  %v442 = vunpack.c.l.b16 %v47
  %v443 = vunpack.c.h.b16 %v47
  %v444 = vunpack.c.l.b16 %v48
  %v445 = vunpack.c.h.b16 %v48
  %v446 = vunpack.c.l.b16 %v49
  %v447 = vunpack.c.h.b16 %v49
  %v448 = vunpack.c.l.b16 %v50
  %v449 = vunpack.c.h.b16 %v50
  %v450 = vunpack.c.l.b16 %v51
  %v451 = vunpack.c.h.b16 %v51
  %v452 = vunpack.c.l.b16 %v52
  %v453 = vunpack.c.h.b16 %v52
  %v454 = vunpack.c.l.b16 %v53
  %v455 = vunpack.c.h.b16 %v53
  %v456 = vunpack.c.l.b16 %v54
  %v457 = vunpack.c.h.b16 %v54
  %v458 = vunpack.c.l.b16 %v55
  %v459 = vunpack.c.h.b16 %v55
  %v460 = vunpack.c.l.b16 %v56
  %v461 = vunpack.c.h.b16 %v56
  %v462 = vunpack.c.l.b16 %v57
  %v463 = vunpack.c.h.b16 %v57
  %v464 = vunpack.c.l.b16 %v58
  %v465 = vunpack.c.h.b16 %v58
  %v466 = vunpack.c.l.b16 %v59
  %v467 = vunpack.c.h.b16 %v59
  %v468 = vunpack.c.l.b16 %v60
  %v469 = vunpack.c.h.b16 %v60
  %v470 = vunpack.c.l.b16 %v61
  %v471 = vunpack.c.h.b16 %v61
  %v472 = vunpack.c.l.b16 %v62
  %v473 = vunpack.c.h.b16 %v62
  %v474 = vunpack.c.l.b16 %v63
  %v475 = vunpack.c.h.b16 %v63
  %v476 = vunpack.c.l.b16 %v64
  %v477 = vunpack.c.h.b16 %v64
  %v478 = vunpack.c.l.b16 %v65
  %v479 = vunpack.c.h.b16 %v65
  %v480 = vunpack.c.l.b16 %v66
  %v481 = vunpack.c.h.b16 %v66
  %v482 = vunpack.c.l.b16 %v67
  %v483 = vunpack.c.h.b16 %v67
  %v484 = vunpack.c.l.b16 %v68
  %v485 = vunpack.c.h.b16 %v68
  %v486 = vunpack.c.l.b16 %v69
  %v487 = vunpack.c.h.b16 %v69
  %v488 = vunpack.c.l.b16 %v70
  %v489 = vunpack.c.h.b16 %v70
  %v490 = vunpack.c.l.b16 %v71
  %v491 = vunpack.c.h.b16 %v71
  %v492 = vunpack.c.l.b16 %v72
  %v493 = vunpack.c.h.b16 %v72
  %v494 = vunpack.c.l.b16 %v73
  %v495 = vunpack.c.h.b16 %v73
  %v496 = vunpack.c.l.b16 %v74
  %v497 = vunpack.c.h.b16 %v74
  %v498 = vunpack.c.l.b16 %v75
  %v499 = vunpack.c.h.b16 %v75
  %v500 = vunpack.c.l.b16 %v76
  %v501 = vunpack.c.h.b16 %v76
  %v502 = vunpack.c.l.b16 %v77
  %v503 = vunpack.c.h.b16 %v77
  %v504 = vunpack.c.l.b16 %v78
  %v505 = vunpack.c.h.b16 %v78
  %v506 = vunpack.c.l.b16 %v79
  %v507 = vunpack.c.h.b16 %v79
  %v508 = vunpack.c.l.b16 %v80
  %v509 = vunpack.c.h.b16 %v80
  %v510 = vunpack.c.l.b16 %v81
  %v511 = vunpack.c.h.b16 %v81
  %v512 = vunpack.c.l.b16 %v82
  %v513 = vunpack.c.h.b16 %v82
  %v514 = vunpack.c.l.b16 %v83
  %v515 = vunpack.c.h.b16 %v83
  %v516 = vunpack.c.l.b16 %v84
  %v517 = vunpack.c.h.b16 %v84
  %v518 = vunpack.c.l.b16 %v85
  %v519 = vunpack.c.h.b16 %v85
  %v520 = vunpack.c.l.b16 %v86
  %v521 = vunpack.c.h.b16 %v86
  %v522 = vunpack.c.l.b16 %v87
  %v523 = vunpack.c.h.b16 %v87
  %v524 = vunpack.c.l.b16 %v88
  %v525 = vunpack.c.h.b16 %v88
  %v526 = vunpack.c.l.b16 %v89
  %v527 = vunpack.c.h.b16 %v89
  %v528 = vunpack.c.l.b16 %v90
  %v529 = vunpack.c.h.b16 %v90
  %v530 = vunpack.c.l.b16 %v91
  %v531 = vunpack.c.h.b16 %v91
  %v532 = vunpack.c.l.b16 %v92
  %v533 = vunpack.c.h.b16 %v92
  %v534 = vunpack.c.l.b16 %v93
  %v535 = vunpack.c.h.b16 %v93
  %v536 = vunpack.c.l.b16 %v94
  %v537 = vunpack.c.h.b16 %v94
  %v538 = vunpack.c.l.b16 %v95
  %v539 = vunpack.c.h.b16 %v95
  %v540 = vunpack.c.l.b16 %v96
  %v541 = vunpack.c.h.b16 %v96
  %v542 = vunpack.c.l.b16 %v97
  %v543 = vunpack.c.h.b16 %v97
  %v544 = vunpack.c.l.b16 %v98
  %v545 = vunpack.c.h.b16 %v98
  %v546 = vunpack.c.l.b16 %v99
  %v547 = vunpack.c.h.b16 %v99
  %v548 = vunpack.c.l.b16 %v100
  %v549 = vunpack.c.h.b16 %v100
  %v550 = vunpack.c.l.b16 %v101
  %v551 = vunpack.c.h.b16 %v101
  %v552 = vunpack.c.l.b16 %v102
  %v553 = vunpack.c.h.b16 %v102
  %v554 = vunpack.c.l.b16 %v103
  %v555 = vunpack.c.h.b16 %v103
  %v556 = vunpack.c.l.b16 %v104
  %v557 = vunpack.c.h.b16 %v104
  %v558 = vunpack.c.l.b16 %v105
  %v559 = vunpack.c.h.b16 %v105
  %v560 = vunpack.c.l.b16 %v106
  %v561 = vunpack.c.h.b16 %v106
  %v562 = vunpack.c.l.b16 %v107
  %v563 = vunpack.c.h.b16 %v107
  %v564 = vpack.c.b16 %v378, %v372
  %v565 = vpack.c.b16 %v379, %v373
  %v566 = vpack.c.b16 %v380, %v374
  %v567 = vpack.c.b16 %v381, %v375
  %v568 = vpack.c.b16 %v382, %v376
  %v569 = vpack.c.b16 %v383, %v377
  %v570 = vpack.c.b16 %v390, %v384
  %v571 = vpack.c.b16 %v391, %v385
  %v572 = vpack.c.b16 %v392, %v386
  %v573 = vpack.c.b16 %v393, %v387
  %v574 = vpack.c.b16 %v394, %v388
  %v575 = vpack.c.b16 %v395, %v389
  %v576 = vpack.c.b16 %v402, %v396
  %v577 = vpack.c.b16 %v403, %v397
  %v578 = vpack.c.b16 %v404, %v398
  %v579 = vpack.c.b16 %v405, %v399
  %v580 = vpack.c.b16 %v406, %v400
  %v581 = vpack.c.b16 %v407, %v401
  %v582 = vpack.c.b16 %v414, %v408
  %v583 = vpack.c.b16 %v415, %v409
  %v584 = vpack.c.b16 %v416, %v410
  %v585 = vpack.c.b16 %v417, %v411
  %v586 = vpack.c.b16 %v418, %v412
  %v587 = vpack.c.b16 %v419, %v413
  %v588 = vpack.c.b16 %v426, %v420
  %v589 = vpack.c.b16 %v427, %v421
  %v590 = vpack.c.b16 %v428, %v422
  %v591 = vpack.c.b16 %v429, %v423
  %v592 = vpack.c.b16 %v430, %v424
  %v593 = vpack.c.b16 %v431, %v425
  %v594 = vpack.c.b16 %v438, %v432
  %v595 = vpack.c.b16 %v439, %v433
  %v596 = vpack.c.b16 %v440, %v434
  %v597 = vpack.c.b16 %v441, %v435
  %v598 = vpack.c.b16 %v442, %v436
  %v599 = vpack.c.b16 %v443, %v437
  %v600 = vpack.c.b16 %v450, %v444
  %v601 = vpack.c.b16 %v451, %v445
  %v602 = vpack.c.b16 %v452, %v446
  %v603 = vpack.c.b16 %v453, %v447
  %v604 = vpack.c.b16 %v454, %v448
  %v605 = vpack.c.b16 %v455, %v449
  %v606 = vpack.c.b16 %v462, %v456
  %v607 = vpack.c.b16 %v463, %v457
  %v608 = vpack.c.b16 %v464, %v458
  %v609 = vpack.c.b16 %v465, %v459
  %v610 = vpack.c.b16 %v466, %v460
  %v611 = vpack.c.b16 %v467, %v461
  %v612 = vpack.c.b16 %v474, %v468
  %v613 = vpack.c.b16 %v475, %v469
  %v614 = vpack.c.b16 %v476, %v470
  %v615 = vpack.c.b16 %v477, %v471
  %v616 = vpack.c.b16 %v478, %v472
  %v617 = vpack.c.b16 %v479, %v473
  %v618 = vpack.c.b16 %v486, %v480
  %v619 = vpack.c.b16 %v487, %v481
  %v620 = vpack.c.b16 %v488, %v482
  %v621 = vpack.c.b16 %v489, %v483
  %v622 = vpack.c.b16 %v490, %v484
  %v623 = vpack.c.b16 %v491, %v485
  %v624 = vpack.c.b16 %v498, %v492
  %v625 = vpack.c.b16 %v499, %v493
  %v626 = vpack.c.b16 %v500, %v494
  %v627 = vpack.c.b16 %v501, %v495
  %v628 = vpack.c.b16 %v502, %v496
  %v629 = vpack.c.b16 %v503, %v497
  %v630 = vpack.c.b16 %v510, %v504
  %v631 = vpack.c.b16 %v511, %v505
  %v632 = vpack.c.b16 %v512, %v506
  %v633 = vpack.c.b16 %v513, %v507
  %v634 = vpack.c.b16 %v514, %v508
  %v635 = vpack.c.b16 %v515, %v509
  %v636 = vpack.c.b16 %v522, %v516
  %v637 = vpack.c.b16 %v523, %v517
  %v638 = vpack.c.b16 %v524, %v518
  %v639 = vpack.c.b16 %v525, %v519
  %v640 = vpack.c.b16 %v526, %v520
  %v641 = vpack.c.b16 %v527, %v521
  %v642 = vpack.c.b16 %v534, %v528
  %v643 = vpack.c.b16 %v535, %v529
  %v644 = vpack.c.b16 %v536, %v530
  %v645 = vpack.c.b16 %v537, %v531
  %v646 = vpack.c.b16 %v538, %v532
  %v647 = vpack.c.b16 %v539, %v533
  %v648 = vpack.c.b16 %v546, %v540
  %v649 = vpack.c.b16 %v547, %v541
  %v650 = vpack.c.b16 %v548, %v542
  %v651 = vpack.c.b16 %v549, %v543
  %v652 = vpack.c.b16 %v550, %v544
  %v653 = vpack.c.b16 %v551, %v545
  %v654 = vpack.c.b16 %v558, %v552
  %v655 = vpack.c.b16 %v559, %v553
  %v656 = vpack.c.b16 %v560, %v554
  %v657 = vpack.c.b16 %v561, %v555
  %v658 = vpack.c.b16 %v562, %v556
  %v659 = vpack.c.b16 %v563, %v557
  %756 = vmatpush.bf16.msra.mxu0 %v606
  %757 = vmatpush.bf16.msra.mxu0 %v600
  %758 = vmatpush.bf16.msra.mxu0 %v594
  %759 = vmatpush.bf16.msra.mxu0 %v588
  %760 = vmatpush.bf16.msra.mxu0 %v582
  %761 = vmatpush.bf16.msra.mxu0 %v576
  %762 = vmatpush.bf16.msra.mxu0 %v570
  %763 = vmatpush.bf16.msra.mxu0 %v564
  %764 = vmatmul.bf16.gmra.mxu0 %v275
  %v765 = vpop.f32.mrf.mxu0
  %v766 = vadd.f32 0.0, %v765
  %v767 = vpop.f32.mrf.mxu0
  %768 = vdwg.mxu0
  %769 = vmatpush.bf16.msra.mxu0 %v654
  %770 = vmatpush.bf16.msra.mxu0 %v648
  %771 = vmatpush.bf16.msra.mxu0 %v642
  %772 = vmatpush.bf16.msra.mxu0 %v636
  %773 = vmatpush.bf16.msra.mxu0 %v630
  %774 = vmatpush.bf16.msra.mxu0 %v624
  %775 = vmatpush.bf16.msra.mxu0 %v618
  %776 = vmatpush.bf16.msra.mxu0 %v612
  %777 = vmatmul.bf16.gmra.mxu0 %v275
  %v778 = vpop.f32.mrf.mxu0
  %v779 = vadd.f32 %v766, %v778
  %v780 = vpop.f32.mrf.mxu0
  %781 = vdwg.mxu0
  %782 = vmatpush.bf16.msra.mxu0 %v607
  %783 = vmatpush.bf16.msra.mxu0 %v601
  %784 = vmatpush.bf16.msra.mxu0 %v595
  %785 = vmatpush.bf16.msra.mxu0 %v589
  %786 = vmatpush.bf16.msra.mxu0 %v583
  %787 = vmatpush.bf16.msra.mxu0 %v577
  %788 = vmatpush.bf16.msra.mxu0 %v571
  %789 = vmatpush.bf16.msra.mxu0 %v565
  %790 = vmatmul.bf16.gmra.mxu0 %v275
  %v791 = vpop.f32.mrf.mxu0
  %v792 = vadd.f32 0.0, %v791
  %v793 = vpop.f32.mrf.mxu0
  %794 = vdwg.mxu0
  %795 = vmatpush.bf16.msra.mxu0 %v655
  %796 = vmatpush.bf16.msra.mxu0 %v649
  %797 = vmatpush.bf16.msra.mxu0 %v643
  %798 = vmatpush.bf16.msra.mxu0 %v637
  %799 = vmatpush.bf16.msra.mxu0 %v631
  %800 = vmatpush.bf16.msra.mxu0 %v625
  %801 = vmatpush.bf16.msra.mxu0 %v619
  %802 = vmatpush.bf16.msra.mxu0 %v613
  %803 = vmatmul.bf16.gmra.mxu0 %v275
  %v804 = vpop.f32.mrf.mxu0
  %v805 = vadd.f32 %v792, %v804
  %v806 = vpop.f32.mrf.mxu0
  %807 = vdwg.mxu0
  %808 = vmatpush.bf16.msra.mxu0 %v608
  %809 = vmatpush.bf16.msra.mxu0 %v602
  %810 = vmatpush.bf16.msra.mxu0 %v596
  %811 = vmatpush.bf16.msra.mxu0 %v590
  %812 = vmatpush.bf16.msra.mxu0 %v584
  %813 = vmatpush.bf16.msra.mxu0 %v578
  %814 = vmatpush.bf16.msra.mxu0 %v572
  %815 = vmatpush.bf16.msra.mxu0 %v566
  %816 = vmatmul.bf16.gmra.mxu0 %v275
  %v817 = vpop.f32.mrf.mxu0
  %v818 = vadd.f32 0.0, %v817
  %v819 = vpop.f32.mrf.mxu0
  %820 = vdwg.mxu0
  %821 = vmatpush.bf16.msra.mxu0 %v656
  %822 = vmatpush.bf16.msra.mxu0 %v650
  %823 = vmatpush.bf16.msra.mxu0 %v644
  %824 = vmatpush.bf16.msra.mxu0 %v638
  %825 = vmatpush.bf16.msra.mxu0 %v632
  %826 = vmatpush.bf16.msra.mxu0 %v626
  %827 = vmatpush.bf16.msra.mxu0 %v620
  %828 = vmatpush.bf16.msra.mxu0 %v614
  %829 = vmatmul.bf16.gmra.mxu0 %v275
  %v830 = vpop.f32.mrf.mxu0
  %v831 = vadd.f32 %v818, %v830
  %v832 = vpop.f32.mrf.mxu0
  %833 = vdwg.mxu0
  %834 = vmatpush.bf16.msra.mxu0 %v609
  %835 = vmatpush.bf16.msra.mxu0 %v603
  %836 = vmatpush.bf16.msra.mxu0 %v597
  %837 = vmatpush.bf16.msra.mxu0 %v591
  %838 = vmatpush.bf16.msra.mxu0 %v585
  %839 = vmatpush.bf16.msra.mxu0 %v579
  %840 = vmatpush.bf16.msra.mxu0 %v573
  %841 = vmatpush.bf16.msra.mxu0 %v567
  %842 = vmatmul.bf16.gmra.mxu0 %v275
  %v843 = vpop.f32.mrf.mxu0
  %v844 = vadd.f32 0.0, %v843
  %v845 = vpop.f32.mrf.mxu0
  %846 = vdwg.mxu0
  %847 = vmatpush.bf16.msra.mxu0 %v657
  %848 = vmatpush.bf16.msra.mxu0 %v651
  %849 = vmatpush.bf16.msra.mxu0 %v645
  %850 = vmatpush.bf16.msra.mxu0 %v639
  %851 = vmatpush.bf16.msra.mxu0 %v633
  %852 = vmatpush.bf16.msra.mxu0 %v627
  %853 = vmatpush.bf16.msra.mxu0 %v621
  %854 = vmatpush.bf16.msra.mxu0 %v615
  %855 = vmatmul.bf16.gmra.mxu0 %v275
  %v856 = vpop.f32.mrf.mxu0
  %v857 = vadd.f32 %v844, %v856
  %v858 = vpop.f32.mrf.mxu0
  %859 = vdwg.mxu0
  %860 = vmatpush.bf16.msra.mxu0 %v610
  %861 = vmatpush.bf16.msra.mxu0 %v604
  %862 = vmatpush.bf16.msra.mxu0 %v598
  %863 = vmatpush.bf16.msra.mxu0 %v592
  %864 = vmatpush.bf16.msra.mxu0 %v586
  %865 = vmatpush.bf16.msra.mxu0 %v580
  %866 = vmatpush.bf16.msra.mxu0 %v574
  %867 = vmatpush.bf16.msra.mxu0 %v568
  %868 = vmatmul.bf16.gmra.mxu0 %v275
  %v869 = vpop.f32.mrf.mxu0
  %v870 = vadd.f32 0.0, %v869
  %v871 = vpop.f32.mrf.mxu0
  %872 = vdwg.mxu0
  %873 = vmatpush.bf16.msra.mxu0 %v658
  %874 = vmatpush.bf16.msra.mxu0 %v652
  %875 = vmatpush.bf16.msra.mxu0 %v646
  %876 = vmatpush.bf16.msra.mxu0 %v640
  %877 = vmatpush.bf16.msra.mxu0 %v634
  %878 = vmatpush.bf16.msra.mxu0 %v628
  %879 = vmatpush.bf16.msra.mxu0 %v622
  %880 = vmatpush.bf16.msra.mxu0 %v616
  %881 = vmatmul.bf16.gmra.mxu0 %v275
  %v882 = vpop.f32.mrf.mxu0
  %v883 = vadd.f32 %v870, %v882
  %v884 = vpop.f32.mrf.mxu0
  %885 = vdwg.mxu0
  %886 = vmatpush.bf16.msra.mxu0 %v611
  %887 = vmatpush.bf16.msra.mxu0 %v605
  %888 = vmatpush.bf16.msra.mxu0 %v599
  %889 = vmatpush.bf16.msra.mxu0 %v593
  %890 = vmatpush.bf16.msra.mxu0 %v587
  %891 = vmatpush.bf16.msra.mxu0 %v581
  %892 = vmatpush.bf16.msra.mxu0 %v575
  %893 = vmatpush.bf16.msra.mxu0 %v569
  %894 = vmatmul.bf16.gmra.mxu0 %v275
  %v895 = vpop.f32.mrf.mxu0
  %v896 = vadd.f32 0.0, %v895
  %v897 = vpop.f32.mrf.mxu0
  %898 = vdwg.mxu0
  %899 = vmatpush.bf16.msra.mxu0 %v659
  %900 = vmatpush.bf16.msra.mxu0 %v653
  %901 = vmatpush.bf16.msra.mxu0 %v647
  %902 = vmatpush.bf16.msra.mxu0 %v641
  %903 = vmatpush.bf16.msra.mxu0 %v635
  %904 = vmatpush.bf16.msra.mxu0 %v629
  %905 = vmatpush.bf16.msra.mxu0 %v623
  %906 = vmatpush.bf16.msra.mxu0 %v617
  %907 = vmatmul.bf16.gmra.mxu0 %v275
  %v908 = vpop.f32.mrf.mxu0
  %v909 = vadd.f32 %v896, %v908
  %v910 = vpop.f32.mrf.mxu0
  %911 = vdwg.mxu0
  %v912 = vadd.f32 %v263, %v779
  %v913 = vadd.f32 %v264, %v805
  %v914 = vmul.f32 %v912, 0.5
  %v915 = vmul.f32 %v913, 0.5
  %v916 = vtanh.pop %v914
  %v917 = vtanh.pop %v915
  %v918 = vmul.f32 %v916, 0.5
  %v919 = vmul.f32 %v917, 0.5
  %v920 = vadd.f32 %v918, 0.5
  %v921 = vadd.f32 %v919, 0.5
  %v922 = vadd.f32 %v831, %v167
  %v923 = vmul.f32 %v920, %v922
  %v924 = vadd.f32 %v265, %v923
  %v925 = vtanh.pop %v924
  %v926 = vsub.f32 1.0, %v921
  %v927 = vmul.f32 %v926, %v925
  %v928 = vmul.f32 %v921, 0.0
  %v929 = vadd.f32 %v927, %v928
  %v930 = vpack.c.bf16 %v929, %v929
  %v932 = vperm.slane %v166, 0
  %v933 = vperm.slane %v166, 1
  %v934 = vperm.slane %v166, 2
  %v970 = vunpack.c.l.b16 %v108
  %v971 = vunpack.c.h.b16 %v108
  %v972 = vunpack.c.l.b16 %v109
  %v973 = vunpack.c.l.b16 %v110
  %v974 = vunpack.c.h.b16 %v110
  %v975 = vunpack.c.l.b16 %v111
  %v976 = vunpack.c.l.b16 %v112
  %v977 = vunpack.c.h.b16 %v112
  %v978 = vunpack.c.l.b16 %v113
  %v979 = vunpack.c.l.b16 %v114
  %v980 = vunpack.c.h.b16 %v114
  %v981 = vunpack.c.l.b16 %v115
  %v982 = vunpack.c.l.b16 %v116
  %v983 = vunpack.c.h.b16 %v116
  %v984 = vunpack.c.l.b16 %v117
  %v985 = vunpack.c.l.b16 %v118
  %v986 = vunpack.c.h.b16 %v118
  %v987 = vunpack.c.l.b16 %v119
  %v988 = vunpack.c.l.b16 %v120
  %v989 = vunpack.c.h.b16 %v120
  %v990 = vunpack.c.l.b16 %v121
  %v991 = vunpack.c.l.b16 %v122
  %v992 = vunpack.c.h.b16 %v122
  %v993 = vunpack.c.l.b16 %v123
  %v994 = vunpack.c.l.b16 %v124
  %v995 = vunpack.c.h.b16 %v124
  %v996 = vunpack.c.l.b16 %v125
  %v997 = vunpack.c.l.b16 %v126
  %v998 = vunpack.c.h.b16 %v126
  %v999 = vunpack.c.l.b16 %v127
  %v1000 = vunpack.c.l.b16 %v128
  %v1001 = vunpack.c.h.b16 %v128
  %v1002 = vunpack.c.l.b16 %v129
  %v1003 = vunpack.c.l.b16 %v130
  %v1004 = vunpack.c.h.b16 %v130
  %v1005 = vunpack.c.l.b16 %v131
  %v1006 = vunpack.c.l.b16 %v132
  %v1007 = vunpack.c.h.b16 %v132
  %v1008 = vunpack.c.l.b16 %v133
  %v1009 = vunpack.c.l.b16 %v134
  %v1010 = vunpack.c.h.b16 %v134
  %v1011 = vunpack.c.l.b16 %v135
  %v1012 = vunpack.c.l.b16 %v136
  %v1013 = vunpack.c.h.b16 %v136
  %v1014 = vunpack.c.l.b16 %v137
  %v1015 = vunpack.c.l.b16 %v138
  %v1016 = vunpack.c.h.b16 %v138
  %v1017 = vunpack.c.l.b16 %v139
  %v1018 = vpack.c.b16 %v973, %v970
  %v1019 = vpack.c.b16 %v974, %v971
  %v1020 = vpack.c.b16 %v975, %v972
  %v1021 = vpack.c.b16 %v979, %v976
  %v1022 = vpack.c.b16 %v980, %v977
  %v1023 = vpack.c.b16 %v981, %v978
  %v1024 = vpack.c.b16 %v985, %v982
  %v1025 = vpack.c.b16 %v986, %v983
  %v1026 = vpack.c.b16 %v987, %v984
  %v1027 = vpack.c.b16 %v991, %v988
  %v1028 = vpack.c.b16 %v992, %v989
  %v1029 = vpack.c.b16 %v993, %v990
  %v1030 = vpack.c.b16 %v997, %v994
  %v1031 = vpack.c.b16 %v998, %v995
  %v1032 = vpack.c.b16 %v999, %v996
  %v1033 = vpack.c.b16 %v1003, %v1000
  %v1034 = vpack.c.b16 %v1004, %v1001
  %v1035 = vpack.c.b16 %v1005, %v1002
  %v1036 = vpack.c.b16 %v1009, %v1006
  %v1037 = vpack.c.b16 %v1010, %v1007
  %v1038 = vpack.c.b16 %v1011, %v1008
  %v1039 = vpack.c.b16 %v1015, %v1012
  %v1040 = vpack.c.b16 %v1016, %v1013
  %v1041 = vpack.c.b16 %v1017, %v1014
  %1066 = vmatpush.bf16.msra.mxu0 %v1039
  %1067 = vmatpush.bf16.msra.mxu0 %v1036
  %1068 = vmatpush.bf16.msra.mxu0 %v1033
  %1069 = vmatpush.bf16.msra.mxu0 %v1030
  %1070 = vmatpush.bf16.msra.mxu0 %v1027
  %1071 = vmatpush.bf16.msra.mxu0 %v1024
  %1072 = vmatpush.bf16.msra.mxu0 %v1021
  %1073 = vmatpush.bf16.msra.mxu0 %v1018
  %1074 = vmatmul.bf16.gmra.mxu0 %v930
  %v1075 = vpop.f32.mrf.mxu0
  %v1076 = vadd.f32 %v932, %v1075
  %v1077 = vpop.f32.mrf.mxu0
  %1078 = vdwg.mxu0
  %1079 = vmatpush.bf16.msra.mxu0 %v1040
  %1080 = vmatpush.bf16.msra.mxu0 %v1037
  %1081 = vmatpush.bf16.msra.mxu0 %v1034
  %1082 = vmatpush.bf16.msra.mxu0 %v1031
  %1083 = vmatpush.bf16.msra.mxu0 %v1028
  %1084 = vmatpush.bf16.msra.mxu0 %v1025
  %1085 = vmatpush.bf16.msra.mxu0 %v1022
  %1086 = vmatpush.bf16.msra.mxu0 %v1019
  %1087 = vmatmul.bf16.gmra.mxu0 %v930
  %v1088 = vpop.f32.mrf.mxu0
  %v1089 = vadd.f32 %v933, %v1088
  %v1090 = vpop.f32.mrf.mxu0
  %1091 = vdwg.mxu0
  %1092 = vmatpush.bf16.msra.mxu0 %v1041
  %1093 = vmatpush.bf16.msra.mxu0 %v1038
  %1094 = vmatpush.bf16.msra.mxu0 %v1035
  %1095 = vmatpush.bf16.msra.mxu0 %v1032
  %1096 = vmatpush.bf16.msra.mxu0 %v1029
  %1097 = vmatpush.bf16.msra.mxu0 %v1026
  %1098 = vmatpush.bf16.msra.mxu0 %v1023
  %1099 = vmatpush.bf16.msra.mxu0 %v1020
  %1100 = vmatmul.bf16.gmra.mxu0 %v930
  %v1101 = vpop.f32.mrf.mxu0
  %v1102 = vadd.f32 %v934, %v1101
  %v1103 = vpop.f32.mrf.mxu0
  %1104 = vdwg.mxu0
  %v1105 = vadd.f32 %v1076, %v857
  %v1106 = vadd.f32 %v1089, %v883
  %v1107 = vmul.f32 %v1105, 0.5
  %v1108 = vmul.f32 %v1106, 0.5
  %v1109 = vtanh.pop %v1107
  %v1110 = vtanh.pop %v1108
  %v1111 = vmul.f32 %v1109, 0.5
  %v1112 = vmul.f32 %v1110, 0.5
  %v1113 = vadd.f32 %v1111, 0.5
  %v1114 = vadd.f32 %v1112, 0.5
  %v1115 = vadd.f32 %v909, %v168
  %v1116 = vmul.f32 %v1113, %v1115
  %v1117 = vadd.f32 %v1102, %v1116
  %v1118 = vtanh.pop %v1117
  %v1119 = vsub.f32 1.0, %v1114
  %v1120 = vmul.f32 %v1119, %v1118
  %v1121 = vmul.f32 %v1114, 0.0
  %v1122 = vadd.f32 %v1120, %v1121
  %v1123 = vpack.c.bf16 %v1122, %v1122
  %1124 = vmatpush.bf16.msra.mxu0 %v606
  %1125 = vmatpush.bf16.msra.mxu0 %v600
  %1126 = vmatpush.bf16.msra.mxu0 %v594
  %1127 = vmatpush.bf16.msra.mxu0 %v588
  %1128 = vmatpush.bf16.msra.mxu0 %v582
  %1129 = vmatpush.bf16.msra.mxu0 %v576
  %1130 = vmatpush.bf16.msra.mxu0 %v570
  %1131 = vmatpush.bf16.msra.mxu0 %v564
  %1132 = vmatmul.bf16.gmra.mxu0 %v930
  %v1133 = vpop.f32.mrf.mxu0
  %v1134 = vadd.f32 0.0, %v1133
  %v1135 = vpop.f32.mrf.mxu0
  %1136 = vdwg.mxu0
  %1137 = vmatpush.bf16.msra.mxu0 %v654
  %1138 = vmatpush.bf16.msra.mxu0 %v648
  %1139 = vmatpush.bf16.msra.mxu0 %v642
  %1140 = vmatpush.bf16.msra.mxu0 %v636
  %1141 = vmatpush.bf16.msra.mxu0 %v630
  %1142 = vmatpush.bf16.msra.mxu0 %v624
  %1143 = vmatpush.bf16.msra.mxu0 %v618
  %1144 = vmatpush.bf16.msra.mxu0 %v612
  %1145 = vmatmul.bf16.gmra.mxu0 %v1123
  %v1146 = vpop.f32.mrf.mxu0
  %v1147 = vadd.f32 %v1134, %v1146
  %v1148 = vpop.f32.mrf.mxu0
  %1149 = vdwg.mxu0
  %1150 = vmatpush.bf16.msra.mxu0 %v607
  %1151 = vmatpush.bf16.msra.mxu0 %v601
  %1152 = vmatpush.bf16.msra.mxu0 %v595
  %1153 = vmatpush.bf16.msra.mxu0 %v589
  %1154 = vmatpush.bf16.msra.mxu0 %v583
  %1155 = vmatpush.bf16.msra.mxu0 %v577
  %1156 = vmatpush.bf16.msra.mxu0 %v571
  %1157 = vmatpush.bf16.msra.mxu0 %v565
  %1158 = vmatmul.bf16.gmra.mxu0 %v930
  %v1159 = vpop.f32.mrf.mxu0
  %v1160 = vadd.f32 0.0, %v1159
  %v1161 = vpop.f32.mrf.mxu0
  %1162 = vdwg.mxu0
  %1163 = vmatpush.bf16.msra.mxu0 %v655
  %1164 = vmatpush.bf16.msra.mxu0 %v649
  %1165 = vmatpush.bf16.msra.mxu0 %v643
  %1166 = vmatpush.bf16.msra.mxu0 %v637
  %1167 = vmatpush.bf16.msra.mxu0 %v631
  %1168 = vmatpush.bf16.msra.mxu0 %v625
  %1169 = vmatpush.bf16.msra.mxu0 %v619
  %1170 = vmatpush.bf16.msra.mxu0 %v613
  %1171 = vmatmul.bf16.gmra.mxu0 %v1123
  %v1172 = vpop.f32.mrf.mxu0
  %v1173 = vadd.f32 %v1160, %v1172
  %v1174 = vpop.f32.mrf.mxu0
  %1175 = vdwg.mxu0
  %1176 = vmatpush.bf16.msra.mxu0 %v608
  %1177 = vmatpush.bf16.msra.mxu0 %v602
  %1178 = vmatpush.bf16.msra.mxu0 %v596
  %1179 = vmatpush.bf16.msra.mxu0 %v590
  %1180 = vmatpush.bf16.msra.mxu0 %v584
  %1181 = vmatpush.bf16.msra.mxu0 %v578
  %1182 = vmatpush.bf16.msra.mxu0 %v572
  %1183 = vmatpush.bf16.msra.mxu0 %v566
  %1184 = vmatmul.bf16.gmra.mxu0 %v930
  %v1185 = vpop.f32.mrf.mxu0
  %v1186 = vadd.f32 0.0, %v1185
  %v1187 = vpop.f32.mrf.mxu0
  %1188 = vdwg.mxu0
  %1189 = vmatpush.bf16.msra.mxu0 %v656
  %1190 = vmatpush.bf16.msra.mxu0 %v650
  %1191 = vmatpush.bf16.msra.mxu0 %v644
  %1192 = vmatpush.bf16.msra.mxu0 %v638
  %1193 = vmatpush.bf16.msra.mxu0 %v632
  %1194 = vmatpush.bf16.msra.mxu0 %v626
  %1195 = vmatpush.bf16.msra.mxu0 %v620
  %1196 = vmatpush.bf16.msra.mxu0 %v614
  %1197 = vmatmul.bf16.gmra.mxu0 %v1123
  %v1198 = vpop.f32.mrf.mxu0
  %v1199 = vadd.f32 %v1186, %v1198
  %v1200 = vpop.f32.mrf.mxu0
  %1201 = vdwg.mxu0
  %1202 = vmatpush.bf16.msra.mxu0 %v609
  %1203 = vmatpush.bf16.msra.mxu0 %v603
  %1204 = vmatpush.bf16.msra.mxu0 %v597
  %1205 = vmatpush.bf16.msra.mxu0 %v591
  %1206 = vmatpush.bf16.msra.mxu0 %v585
  %1207 = vmatpush.bf16.msra.mxu0 %v579
  %1208 = vmatpush.bf16.msra.mxu0 %v573
  %1209 = vmatpush.bf16.msra.mxu0 %v567
  %1210 = vmatmul.bf16.gmra.mxu0 %v930
  %v1211 = vpop.f32.mrf.mxu0
  %v1212 = vadd.f32 0.0, %v1211
  %v1213 = vpop.f32.mrf.mxu0
  %1214 = vdwg.mxu0
  %1215 = vmatpush.bf16.msra.mxu0 %v657
  %1216 = vmatpush.bf16.msra.mxu0 %v651
  %1217 = vmatpush.bf16.msra.mxu0 %v645
  %1218 = vmatpush.bf16.msra.mxu0 %v639
  %1219 = vmatpush.bf16.msra.mxu0 %v633
  %1220 = vmatpush.bf16.msra.mxu0 %v627
  %1221 = vmatpush.bf16.msra.mxu0 %v621
  %1222 = vmatpush.bf16.msra.mxu0 %v615
  %1223 = vmatmul.bf16.gmra.mxu0 %v1123
  %v1224 = vpop.f32.mrf.mxu0
  %v1225 = vadd.f32 %v1212, %v1224
  %v1226 = vpop.f32.mrf.mxu0
  %1227 = vdwg.mxu0
  %1228 = vmatpush.bf16.msra.mxu0 %v610
  %1229 = vmatpush.bf16.msra.mxu0 %v604
  %1230 = vmatpush.bf16.msra.mxu0 %v598
  %1231 = vmatpush.bf16.msra.mxu0 %v592
  %1232 = vmatpush.bf16.msra.mxu0 %v586
  %1233 = vmatpush.bf16.msra.mxu0 %v580
  %1234 = vmatpush.bf16.msra.mxu0 %v574
  %1235 = vmatpush.bf16.msra.mxu0 %v568
  %1236 = vmatmul.bf16.gmra.mxu0 %v930
  %v1237 = vpop.f32.mrf.mxu0
  %v1238 = vadd.f32 0.0, %v1237
  %v1239 = vpop.f32.mrf.mxu0
  %1240 = vdwg.mxu0
  %1241 = vmatpush.bf16.msra.mxu0 %v658
  %1242 = vmatpush.bf16.msra.mxu0 %v652
  %1243 = vmatpush.bf16.msra.mxu0 %v646
  %1244 = vmatpush.bf16.msra.mxu0 %v640
  %1245 = vmatpush.bf16.msra.mxu0 %v634
  %1246 = vmatpush.bf16.msra.mxu0 %v628
  %1247 = vmatpush.bf16.msra.mxu0 %v622
  %1248 = vmatpush.bf16.msra.mxu0 %v616
  %1249 = vmatmul.bf16.gmra.mxu0 %v1123
  %v1250 = vpop.f32.mrf.mxu0
  %v1251 = vadd.f32 %v1238, %v1250
  %v1252 = vpop.f32.mrf.mxu0
  %1253 = vdwg.mxu0
  %1254 = vmatpush.bf16.msra.mxu0 %v611
  %1255 = vmatpush.bf16.msra.mxu0 %v605
  %1256 = vmatpush.bf16.msra.mxu0 %v599
  %1257 = vmatpush.bf16.msra.mxu0 %v593
  %1258 = vmatpush.bf16.msra.mxu0 %v587
  %1259 = vmatpush.bf16.msra.mxu0 %v581
  %1260 = vmatpush.bf16.msra.mxu0 %v575
  %1261 = vmatpush.bf16.msra.mxu0 %v569
  %1262 = vmatmul.bf16.gmra.mxu0 %v930
  %v1263 = vpop.f32.mrf.mxu0
  %v1264 = vadd.f32 0.0, %v1263
  %v1265 = vpop.f32.mrf.mxu0
  %1266 = vdwg.mxu0
  %1267 = vmatpush.bf16.msra.mxu0 %v659
  %1268 = vmatpush.bf16.msra.mxu0 %v653
  %1269 = vmatpush.bf16.msra.mxu0 %v647
  %1270 = vmatpush.bf16.msra.mxu0 %v641
  %1271 = vmatpush.bf16.msra.mxu0 %v635
  %1272 = vmatpush.bf16.msra.mxu0 %v629
  %1273 = vmatpush.bf16.msra.mxu0 %v623
  %1274 = vmatpush.bf16.msra.mxu0 %v617
  %1275 = vmatmul.bf16.gmra.mxu0 %v1123
  %v1276 = vpop.f32.mrf.mxu0
  %v1277 = vadd.f32 %v1264, %v1276
  %v1278 = vpop.f32.mrf.mxu0
  %1279 = vdwg.mxu0
  %v1282 = vrot.slane %v1147, 4
  %v1283 = vrot.slane %v1173, 4
  %v1286 = vadd.f32 %v263, %v1282
  %v1287 = vadd.f32 %v264, %v1283
  %v1288 = vmul.f32 %v1286, 0.5
  %v1289 = vmul.f32 %v1287, 0.5
  %v1290 = vtanh.pop %v1288
  %v1291 = vtanh.pop %v1289
  %v1292 = vmul.f32 %v1290, 0.5
  %v1293 = vmul.f32 %v1291, 0.5
  %v1294 = vadd.f32 %v1292, 0.5
  %v1295 = vadd.f32 %v1293, 0.5
  %v1296 = vadd.f32 %v1199, %v167
  %v1298 = vrot.slane %v1296, 4
  %v1300 = vmul.f32 %v1294, %v1298
  %v1301 = vadd.f32 %v265, %v1300
  %v1302 = vtanh.pop %v1301
  %v1303 = vsub.f32 1.0, %v1295
  %v1304 = vmul.f32 %v1303, %v1302
  %v1306 = vrot.slane %v929, 4
  %v1308 = vmul.f32 %v1295, %v1306
  %v1309 = vadd.f32 %v1304, %v1308
  %v1310 = vpack.c.bf16 %v1309, %v1309
  %v1312 = vrot.slane %v1310, 2
  %1314 = vmatpush.bf16.msra.mxu0 %v1039
  %1315 = vmatpush.bf16.msra.mxu0 %v1036
  %1316 = vmatpush.bf16.msra.mxu0 %v1033
  %1317 = vmatpush.bf16.msra.mxu0 %v1030
  %1318 = vmatpush.bf16.msra.mxu0 %v1027
  %1319 = vmatpush.bf16.msra.mxu0 %v1024
  %1320 = vmatpush.bf16.msra.mxu0 %v1021
  %1321 = vmatpush.bf16.msra.mxu0 %v1018
  %1322 = vmatmul.bf16.gmra.mxu0 %v1312
  %v1323 = vpop.f32.mrf.mxu0
  %v1324 = vadd.f32 %v932, %v1323
  %v1325 = vpop.f32.mrf.mxu0
  %1326 = vdwg.mxu0
  %1327 = vmatpush.bf16.msra.mxu0 %v1040
  %1328 = vmatpush.bf16.msra.mxu0 %v1037
  %1329 = vmatpush.bf16.msra.mxu0 %v1034
  %1330 = vmatpush.bf16.msra.mxu0 %v1031
  %1331 = vmatpush.bf16.msra.mxu0 %v1028
  %1332 = vmatpush.bf16.msra.mxu0 %v1025
  %1333 = vmatpush.bf16.msra.mxu0 %v1022
  %1334 = vmatpush.bf16.msra.mxu0 %v1019
  %1335 = vmatmul.bf16.gmra.mxu0 %v1312
  %v1336 = vpop.f32.mrf.mxu0
  %v1337 = vadd.f32 %v933, %v1336
  %v1338 = vpop.f32.mrf.mxu0
  %1339 = vdwg.mxu0
  %1340 = vmatpush.bf16.msra.mxu0 %v1041
  %1341 = vmatpush.bf16.msra.mxu0 %v1038
  %1342 = vmatpush.bf16.msra.mxu0 %v1035
  %1343 = vmatpush.bf16.msra.mxu0 %v1032
  %1344 = vmatpush.bf16.msra.mxu0 %v1029
  %1345 = vmatpush.bf16.msra.mxu0 %v1026
  %1346 = vmatpush.bf16.msra.mxu0 %v1023
  %1347 = vmatpush.bf16.msra.mxu0 %v1020
  %1348 = vmatmul.bf16.gmra.mxu0 %v1312
  %v1349 = vpop.f32.mrf.mxu0
  %v1350 = vadd.f32 %v934, %v1349
  %v1351 = vpop.f32.mrf.mxu0
  %1352 = vdwg.mxu0
  %v1353 = vadd.f32 %v1324, %v1225
  %v1354 = vadd.f32 %v1337, %v1251
  %v1355 = vmul.f32 %v1353, 0.5
  %v1356 = vmul.f32 %v1354, 0.5
  %v1357 = vtanh.pop %v1355
  %v1358 = vtanh.pop %v1356
  %v1359 = vmul.f32 %v1357, 0.5
  %v1360 = vmul.f32 %v1358, 0.5
  %v1361 = vadd.f32 %v1359, 0.5
  %v1362 = vadd.f32 %v1360, 0.5
  %v1363 = vadd.f32 %v1277, %v168
  %v1364 = vmul.f32 %v1361, %v1363
  %v1365 = vadd.f32 %v1350, %v1364
  %v1366 = vtanh.pop %v1365
  %v1367 = vsub.f32 1.0, %v1362
  %v1368 = vmul.f32 %v1367, %v1366
  %v1369 = vmul.f32 %v1362, %v1122
  %v1370 = vadd.f32 %v1368, %v1369
  %v1372 = vrot.slane %v1370, 4
  %v1374 = vpack.c.bf16 %v1372, %v1372
  %v1376 = vrot.slane %v1374, 2
  %1378 = vmatpush.bf16.msra.mxu0 %v606
  %1379 = vmatpush.bf16.msra.mxu0 %v600
  %1380 = vmatpush.bf16.msra.mxu0 %v594
  %1381 = vmatpush.bf16.msra.mxu0 %v588
  %1382 = vmatpush.bf16.msra.mxu0 %v582
  %1383 = vmatpush.bf16.msra.mxu0 %v576
  %1384 = vmatpush.bf16.msra.mxu0 %v570
  %1385 = vmatpush.bf16.msra.mxu0 %v564
  %1386 = vmatmul.bf16.gmra.mxu0 %v1312
  %v1387 = vpop.f32.mrf.mxu0
  %v1388 = vadd.f32 0.0, %v1387
  %v1389 = vpop.f32.mrf.mxu0
  %1390 = vdwg.mxu0
  %1391 = vmatpush.bf16.msra.mxu0 %v654
  %1392 = vmatpush.bf16.msra.mxu0 %v648
  %1393 = vmatpush.bf16.msra.mxu0 %v642
  %1394 = vmatpush.bf16.msra.mxu0 %v636
  %1395 = vmatpush.bf16.msra.mxu0 %v630
  %1396 = vmatpush.bf16.msra.mxu0 %v624
  %1397 = vmatpush.bf16.msra.mxu0 %v618
  %1398 = vmatpush.bf16.msra.mxu0 %v612
  %1399 = vmatmul.bf16.gmra.mxu0 %v1376
  %v1400 = vpop.f32.mrf.mxu0
  %v1401 = vadd.f32 %v1388, %v1400
  %v1402 = vpop.f32.mrf.mxu0
  %1403 = vdwg.mxu0
  %1404 = vmatpush.bf16.msra.mxu0 %v607
  %1405 = vmatpush.bf16.msra.mxu0 %v601
  %1406 = vmatpush.bf16.msra.mxu0 %v595
  %1407 = vmatpush.bf16.msra.mxu0 %v589
  %1408 = vmatpush.bf16.msra.mxu0 %v583
  %1409 = vmatpush.bf16.msra.mxu0 %v577
  %1410 = vmatpush.bf16.msra.mxu0 %v571
  %1411 = vmatpush.bf16.msra.mxu0 %v565
  %1412 = vmatmul.bf16.gmra.mxu0 %v1312
  %v1413 = vpop.f32.mrf.mxu0
  %v1414 = vadd.f32 0.0, %v1413
  %v1415 = vpop.f32.mrf.mxu0
  %1416 = vdwg.mxu0
  %1417 = vmatpush.bf16.msra.mxu0 %v655
  %1418 = vmatpush.bf16.msra.mxu0 %v649
  %1419 = vmatpush.bf16.msra.mxu0 %v643
  %1420 = vmatpush.bf16.msra.mxu0 %v637
  %1421 = vmatpush.bf16.msra.mxu0 %v631
  %1422 = vmatpush.bf16.msra.mxu0 %v625
  %1423 = vmatpush.bf16.msra.mxu0 %v619
  %1424 = vmatpush.bf16.msra.mxu0 %v613
  %1425 = vmatmul.bf16.gmra.mxu0 %v1376
  %v1426 = vpop.f32.mrf.mxu0
  %v1427 = vadd.f32 %v1414, %v1426
  %v1428 = vpop.f32.mrf.mxu0
  %1429 = vdwg.mxu0
  %1430 = vmatpush.bf16.msra.mxu0 %v608
  %1431 = vmatpush.bf16.msra.mxu0 %v602
  %1432 = vmatpush.bf16.msra.mxu0 %v596
  %1433 = vmatpush.bf16.msra.mxu0 %v590
  %1434 = vmatpush.bf16.msra.mxu0 %v584
  %1435 = vmatpush.bf16.msra.mxu0 %v578
  %1436 = vmatpush.bf16.msra.mxu0 %v572
  %1437 = vmatpush.bf16.msra.mxu0 %v566
  %1438 = vmatmul.bf16.gmra.mxu0 %v1312
  %v1439 = vpop.f32.mrf.mxu0
  %v1440 = vadd.f32 0.0, %v1439
  %v1441 = vpop.f32.mrf.mxu0
  %1442 = vdwg.mxu0
  %1443 = vmatpush.bf16.msra.mxu0 %v656
  %1444 = vmatpush.bf16.msra.mxu0 %v650
  %1445 = vmatpush.bf16.msra.mxu0 %v644
  %1446 = vmatpush.bf16.msra.mxu0 %v638
  %1447 = vmatpush.bf16.msra.mxu0 %v632
  %1448 = vmatpush.bf16.msra.mxu0 %v626
  %1449 = vmatpush.bf16.msra.mxu0 %v620
  %1450 = vmatpush.bf16.msra.mxu0 %v614
  %1451 = vmatmul.bf16.gmra.mxu0 %v1376
  %v1452 = vpop.f32.mrf.mxu0
  %v1453 = vadd.f32 %v1440, %v1452
  %v1454 = vpop.f32.mrf.mxu0
  %1455 = vdwg.mxu0
  %1456 = vmatpush.bf16.msra.mxu0 %v609
  %1457 = vmatpush.bf16.msra.mxu0 %v603
  %1458 = vmatpush.bf16.msra.mxu0 %v597
  %1459 = vmatpush.bf16.msra.mxu0 %v591
  %1460 = vmatpush.bf16.msra.mxu0 %v585
  %1461 = vmatpush.bf16.msra.mxu0 %v579
  %1462 = vmatpush.bf16.msra.mxu0 %v573
  %1463 = vmatpush.bf16.msra.mxu0 %v567
  %1464 = vmatmul.bf16.gmra.mxu0 %v1312
  %v1465 = vpop.f32.mrf.mxu0
  %v1466 = vadd.f32 0.0, %v1465
  %v1467 = vpop.f32.mrf.mxu0
  %1468 = vdwg.mxu0
  %1469 = vmatpush.bf16.msra.mxu0 %v657
  %1470 = vmatpush.bf16.msra.mxu0 %v651
  %1471 = vmatpush.bf16.msra.mxu0 %v645
  %1472 = vmatpush.bf16.msra.mxu0 %v639
  %1473 = vmatpush.bf16.msra.mxu0 %v633
  %1474 = vmatpush.bf16.msra.mxu0 %v627
  %1475 = vmatpush.bf16.msra.mxu0 %v621
  %1476 = vmatpush.bf16.msra.mxu0 %v615
  %1477 = vmatmul.bf16.gmra.mxu0 %v1376
  %v1478 = vpop.f32.mrf.mxu0
  %v1479 = vadd.f32 %v1466, %v1478
  %v1480 = vpop.f32.mrf.mxu0
  %1481 = vdwg.mxu0
  %1482 = vmatpush.bf16.msra.mxu0 %v610
  %1483 = vmatpush.bf16.msra.mxu0 %v604
  %1484 = vmatpush.bf16.msra.mxu0 %v598
  %1485 = vmatpush.bf16.msra.mxu0 %v592
  %1486 = vmatpush.bf16.msra.mxu0 %v586
  %1487 = vmatpush.bf16.msra.mxu0 %v580
  %1488 = vmatpush.bf16.msra.mxu0 %v574
  %1489 = vmatpush.bf16.msra.mxu0 %v568
  %1490 = vmatmul.bf16.gmra.mxu0 %v1312
  %v1491 = vpop.f32.mrf.mxu0
  %v1492 = vadd.f32 0.0, %v1491
  %v1493 = vpop.f32.mrf.mxu0
  %1494 = vdwg.mxu0
  %1495 = vmatpush.bf16.msra.mxu0 %v658
  %1496 = vmatpush.bf16.msra.mxu0 %v652
  %1497 = vmatpush.bf16.msra.mxu0 %v646
  %1498 = vmatpush.bf16.msra.mxu0 %v640
  %1499 = vmatpush.bf16.msra.mxu0 %v634
  %1500 = vmatpush.bf16.msra.mxu0 %v628
  %1501 = vmatpush.bf16.msra.mxu0 %v622
  %1502 = vmatpush.bf16.msra.mxu0 %v616
  %1503 = vmatmul.bf16.gmra.mxu0 %v1376
  %v1504 = vpop.f32.mrf.mxu0
  %v1505 = vadd.f32 %v1492, %v1504
  %v1506 = vpop.f32.mrf.mxu0
  %1507 = vdwg.mxu0
  %1508 = vmatpush.bf16.msra.mxu0 %v611
  %1509 = vmatpush.bf16.msra.mxu0 %v605
  %1510 = vmatpush.bf16.msra.mxu0 %v599
  %1511 = vmatpush.bf16.msra.mxu0 %v593
  %1512 = vmatpush.bf16.msra.mxu0 %v587
  %1513 = vmatpush.bf16.msra.mxu0 %v581
  %1514 = vmatpush.bf16.msra.mxu0 %v575
  %1515 = vmatpush.bf16.msra.mxu0 %v569
  %1516 = vmatmul.bf16.gmra.mxu0 %v1312
  %v1517 = vpop.f32.mrf.mxu0
  %v1518 = vadd.f32 0.0, %v1517
  %v1519 = vpop.f32.mrf.mxu0
  %1520 = vdwg.mxu0
  %1521 = vmatpush.bf16.msra.mxu0 %v659
  %1522 = vmatpush.bf16.msra.mxu0 %v653
  %1523 = vmatpush.bf16.msra.mxu0 %v647
  %1524 = vmatpush.bf16.msra.mxu0 %v641
  %1525 = vmatpush.bf16.msra.mxu0 %v635
  %1526 = vmatpush.bf16.msra.mxu0 %v629
  %1527 = vmatpush.bf16.msra.mxu0 %v623
  %1528 = vmatpush.bf16.msra.mxu0 %v617
  %1529 = vmatmul.bf16.gmra.mxu0 %v1376
  %v1530 = vpop.f32.mrf.mxu0
  %v1531 = vadd.f32 %v1518, %v1530
  %v1532 = vpop.f32.mrf.mxu0
  %1533 = vdwg.mxu0
  %v1534 = vadd.f32 %v266, %v1401
  %v1535 = vadd.f32 %v267, %v1427
  %v1536 = vmul.f32 %v1534, 0.5
  %v1537 = vmul.f32 %v1535, 0.5
  %v1538 = vtanh.pop %v1536
  %v1539 = vtanh.pop %v1537
  %v1540 = vmul.f32 %v1538, 0.5
  %v1541 = vmul.f32 %v1539, 0.5
  %v1542 = vadd.f32 %v1540, 0.5
  %v1543 = vadd.f32 %v1541, 0.5
  %v1544 = vadd.f32 %v1453, %v167
  %v1545 = vmul.f32 %v1542, %v1544
  %v1546 = vadd.f32 %v268, %v1545
  %v1547 = vtanh.pop %v1546
  %v1548 = vsub.f32 1.0, %v1543
  %v1549 = vmul.f32 %v1548, %v1547
  %v1551 = vrot.slane %v1309, 4
  %v1553 = vmul.f32 %v1543, %v1551
  %v1554 = vadd.f32 %v1549, %v1553
  %v1555 = vpack.c.bf16 %v1554, %v1554
  %1556 = vmatpush.bf16.msra.mxu0 %v1039
  %1557 = vmatpush.bf16.msra.mxu0 %v1036
  %1558 = vmatpush.bf16.msra.mxu0 %v1033
  %1559 = vmatpush.bf16.msra.mxu0 %v1030
  %1560 = vmatpush.bf16.msra.mxu0 %v1027
  %1561 = vmatpush.bf16.msra.mxu0 %v1024
  %1562 = vmatpush.bf16.msra.mxu0 %v1021
  %1563 = vmatpush.bf16.msra.mxu0 %v1018
  %1564 = vmatmul.bf16.gmra.mxu0 %v1555
  %v1565 = vpop.f32.mrf.mxu0
  %v1566 = vadd.f32 %v932, %v1565
  %v1567 = vpop.f32.mrf.mxu0
  %1568 = vdwg.mxu0
  %1569 = vmatpush.bf16.msra.mxu0 %v1040
  %1570 = vmatpush.bf16.msra.mxu0 %v1037
  %1571 = vmatpush.bf16.msra.mxu0 %v1034
  %1572 = vmatpush.bf16.msra.mxu0 %v1031
  %1573 = vmatpush.bf16.msra.mxu0 %v1028
  %1574 = vmatpush.bf16.msra.mxu0 %v1025
  %1575 = vmatpush.bf16.msra.mxu0 %v1022
  %1576 = vmatpush.bf16.msra.mxu0 %v1019
  %1577 = vmatmul.bf16.gmra.mxu0 %v1555
  %v1578 = vpop.f32.mrf.mxu0
  %v1579 = vadd.f32 %v933, %v1578
  %v1580 = vpop.f32.mrf.mxu0
  %1581 = vdwg.mxu0
  %1582 = vmatpush.bf16.msra.mxu0 %v1041
  %1583 = vmatpush.bf16.msra.mxu0 %v1038
  %1584 = vmatpush.bf16.msra.mxu0 %v1035
  %1585 = vmatpush.bf16.msra.mxu0 %v1032
  %1586 = vmatpush.bf16.msra.mxu0 %v1029
  %1587 = vmatpush.bf16.msra.mxu0 %v1026
  %1588 = vmatpush.bf16.msra.mxu0 %v1023
  %1589 = vmatpush.bf16.msra.mxu0 %v1020
  %1590 = vmatmul.bf16.gmra.mxu0 %v1555
  %v1591 = vpop.f32.mrf.mxu0
  %v1592 = vadd.f32 %v934, %v1591
  %v1593 = vpop.f32.mrf.mxu0
  %1594 = vdwg.mxu0
  %v1595 = vadd.f32 %v1566, %v1479
  %v1596 = vadd.f32 %v1579, %v1505
  %v1597 = vmul.f32 %v1595, 0.5
  %v1598 = vmul.f32 %v1596, 0.5
  %v1599 = vtanh.pop %v1597
  %v1600 = vtanh.pop %v1598
  %v1601 = vmul.f32 %v1599, 0.5
  %v1602 = vmul.f32 %v1600, 0.5
  %v1603 = vadd.f32 %v1601, 0.5
  %v1604 = vadd.f32 %v1602, 0.5
  %v1605 = vadd.f32 %v1531, %v168
  %v1606 = vmul.f32 %v1603, %v1605
  %v1607 = vadd.f32 %v1592, %v1606
  %v1608 = vtanh.pop %v1607
  %v1609 = vsub.f32 1.0, %v1604
  %v1610 = vmul.f32 %v1609, %v1608
  %v1611 = vmul.f32 %v1604, %v1370
  %v1612 = vadd.f32 %v1610, %v1611
  %v1613 = vpack.c.bf16 %v1612, %v1612
  %1614 = vmatpush.bf16.msra.mxu0 %v606
  %1615 = vmatpush.bf16.msra.mxu0 %v600
  %1616 = vmatpush.bf16.msra.mxu0 %v594
  %1617 = vmatpush.bf16.msra.mxu0 %v588
  %1618 = vmatpush.bf16.msra.mxu0 %v582
  %1619 = vmatpush.bf16.msra.mxu0 %v576
  %1620 = vmatpush.bf16.msra.mxu0 %v570
  %1621 = vmatpush.bf16.msra.mxu0 %v564
  %1622 = vmatmul.bf16.gmra.mxu0 %v1555
  %v1623 = vpop.f32.mrf.mxu0
  %v1624 = vadd.f32 0.0, %v1623
  %v1625 = vpop.f32.mrf.mxu0
  %1626 = vdwg.mxu0
  %1627 = vmatpush.bf16.msra.mxu0 %v654
  %1628 = vmatpush.bf16.msra.mxu0 %v648
  %1629 = vmatpush.bf16.msra.mxu0 %v642
  %1630 = vmatpush.bf16.msra.mxu0 %v636
  %1631 = vmatpush.bf16.msra.mxu0 %v630
  %1632 = vmatpush.bf16.msra.mxu0 %v624
  %1633 = vmatpush.bf16.msra.mxu0 %v618
  %1634 = vmatpush.bf16.msra.mxu0 %v612
  %1635 = vmatmul.bf16.gmra.mxu0 %v1613
  %v1636 = vpop.f32.mrf.mxu0
  %v1637 = vadd.f32 %v1624, %v1636
  %v1638 = vpop.f32.mrf.mxu0
  %1639 = vdwg.mxu0
  %1640 = vmatpush.bf16.msra.mxu0 %v607
  %1641 = vmatpush.bf16.msra.mxu0 %v601
  %1642 = vmatpush.bf16.msra.mxu0 %v595
  %1643 = vmatpush.bf16.msra.mxu0 %v589
  %1644 = vmatpush.bf16.msra.mxu0 %v583
  %1645 = vmatpush.bf16.msra.mxu0 %v577
  %1646 = vmatpush.bf16.msra.mxu0 %v571
  %1647 = vmatpush.bf16.msra.mxu0 %v565
  %1648 = vmatmul.bf16.gmra.mxu0 %v1555
  %v1649 = vpop.f32.mrf.mxu0
  %v1650 = vadd.f32 0.0, %v1649
  %v1651 = vpop.f32.mrf.mxu0
  %1652 = vdwg.mxu0
  %1653 = vmatpush.bf16.msra.mxu0 %v655
  %1654 = vmatpush.bf16.msra.mxu0 %v649
  %1655 = vmatpush.bf16.msra.mxu0 %v643
  %1656 = vmatpush.bf16.msra.mxu0 %v637
  %1657 = vmatpush.bf16.msra.mxu0 %v631
  %1658 = vmatpush.bf16.msra.mxu0 %v625
  %1659 = vmatpush.bf16.msra.mxu0 %v619
  %1660 = vmatpush.bf16.msra.mxu0 %v613
  %1661 = vmatmul.bf16.gmra.mxu0 %v1613
  %v1662 = vpop.f32.mrf.mxu0
  %v1663 = vadd.f32 %v1650, %v1662
  %v1664 = vpop.f32.mrf.mxu0
  %1665 = vdwg.mxu0
  %1666 = vmatpush.bf16.msra.mxu0 %v608
  %1667 = vmatpush.bf16.msra.mxu0 %v602
  %1668 = vmatpush.bf16.msra.mxu0 %v596
  %1669 = vmatpush.bf16.msra.mxu0 %v590
  %1670 = vmatpush.bf16.msra.mxu0 %v584
  %1671 = vmatpush.bf16.msra.mxu0 %v578
  %1672 = vmatpush.bf16.msra.mxu0 %v572
  %1673 = vmatpush.bf16.msra.mxu0 %v566
  %1674 = vmatmul.bf16.gmra.mxu0 %v1555
  %v1675 = vpop.f32.mrf.mxu0
  %v1676 = vadd.f32 0.0, %v1675
  %v1677 = vpop.f32.mrf.mxu0
  %1678 = vdwg.mxu0
  %1679 = vmatpush.bf16.msra.mxu0 %v656
  %1680 = vmatpush.bf16.msra.mxu0 %v650
  %1681 = vmatpush.bf16.msra.mxu0 %v644
  %1682 = vmatpush.bf16.msra.mxu0 %v638
  %1683 = vmatpush.bf16.msra.mxu0 %v632
  %1684 = vmatpush.bf16.msra.mxu0 %v626
  %1685 = vmatpush.bf16.msra.mxu0 %v620
  %1686 = vmatpush.bf16.msra.mxu0 %v614
  %1687 = vmatmul.bf16.gmra.mxu0 %v1613
  %v1688 = vpop.f32.mrf.mxu0
  %v1689 = vadd.f32 %v1676, %v1688
  %v1690 = vpop.f32.mrf.mxu0
  %1691 = vdwg.mxu0
  %1692 = vmatpush.bf16.msra.mxu0 %v609
  %1693 = vmatpush.bf16.msra.mxu0 %v603
  %1694 = vmatpush.bf16.msra.mxu0 %v597
  %1695 = vmatpush.bf16.msra.mxu0 %v591
  %1696 = vmatpush.bf16.msra.mxu0 %v585
  %1697 = vmatpush.bf16.msra.mxu0 %v579
  %1698 = vmatpush.bf16.msra.mxu0 %v573
  %1699 = vmatpush.bf16.msra.mxu0 %v567
  %1700 = vmatmul.bf16.gmra.mxu0 %v1555
  %v1701 = vpop.f32.mrf.mxu0
  %v1702 = vadd.f32 0.0, %v1701
  %v1703 = vpop.f32.mrf.mxu0
  %1704 = vdwg.mxu0
  %1705 = vmatpush.bf16.msra.mxu0 %v657
  %1706 = vmatpush.bf16.msra.mxu0 %v651
  %1707 = vmatpush.bf16.msra.mxu0 %v645
  %1708 = vmatpush.bf16.msra.mxu0 %v639
  %1709 = vmatpush.bf16.msra.mxu0 %v633
  %1710 = vmatpush.bf16.msra.mxu0 %v627
  %1711 = vmatpush.bf16.msra.mxu0 %v621
  %1712 = vmatpush.bf16.msra.mxu0 %v615
  %1713 = vmatmul.bf16.gmra.mxu0 %v1613
  %v1714 = vpop.f32.mrf.mxu0
  %v1715 = vadd.f32 %v1702, %v1714
  %v1716 = vpop.f32.mrf.mxu0
  %1717 = vdwg.mxu0
  %1718 = vmatpush.bf16.msra.mxu0 %v610
  %1719 = vmatpush.bf16.msra.mxu0 %v604
  %1720 = vmatpush.bf16.msra.mxu0 %v598
  %1721 = vmatpush.bf16.msra.mxu0 %v592
  %1722 = vmatpush.bf16.msra.mxu0 %v586
  %1723 = vmatpush.bf16.msra.mxu0 %v580
  %1724 = vmatpush.bf16.msra.mxu0 %v574
  %1725 = vmatpush.bf16.msra.mxu0 %v568
  %1726 = vmatmul.bf16.gmra.mxu0 %v1555
  %v1727 = vpop.f32.mrf.mxu0
  %v1728 = vadd.f32 0.0, %v1727
  %v1729 = vpop.f32.mrf.mxu0
  %1730 = vdwg.mxu0
  %1731 = vmatpush.bf16.msra.mxu0 %v658
  %1732 = vmatpush.bf16.msra.mxu0 %v652
  %1733 = vmatpush.bf16.msra.mxu0 %v646
  %1734 = vmatpush.bf16.msra.mxu0 %v640
  %1735 = vmatpush.bf16.msra.mxu0 %v634
  %1736 = vmatpush.bf16.msra.mxu0 %v628
  %1737 = vmatpush.bf16.msra.mxu0 %v622
  %1738 = vmatpush.bf16.msra.mxu0 %v616
  %1739 = vmatmul.bf16.gmra.mxu0 %v1613
  %v1740 = vpop.f32.mrf.mxu0
  %v1741 = vadd.f32 %v1728, %v1740
  %v1742 = vpop.f32.mrf.mxu0
  %1743 = vdwg.mxu0
  %1744 = vmatpush.bf16.msra.mxu0 %v611
  %1745 = vmatpush.bf16.msra.mxu0 %v605
  %1746 = vmatpush.bf16.msra.mxu0 %v599
  %1747 = vmatpush.bf16.msra.mxu0 %v593
  %1748 = vmatpush.bf16.msra.mxu0 %v587
  %1749 = vmatpush.bf16.msra.mxu0 %v581
  %1750 = vmatpush.bf16.msra.mxu0 %v575
  %1751 = vmatpush.bf16.msra.mxu0 %v569
  %1752 = vmatmul.bf16.gmra.mxu0 %v1555
  %v1753 = vpop.f32.mrf.mxu0
  %v1754 = vadd.f32 0.0, %v1753
  %v1755 = vpop.f32.mrf.mxu0
  %1756 = vdwg.mxu0
  %1757 = vmatpush.bf16.msra.mxu0 %v659
  %1758 = vmatpush.bf16.msra.mxu0 %v653
  %1759 = vmatpush.bf16.msra.mxu0 %v647
  %1760 = vmatpush.bf16.msra.mxu0 %v641
  %1761 = vmatpush.bf16.msra.mxu0 %v635
  %1762 = vmatpush.bf16.msra.mxu0 %v629
  %1763 = vmatpush.bf16.msra.mxu0 %v623
  %1764 = vmatpush.bf16.msra.mxu0 %v617
  %1765 = vmatmul.bf16.gmra.mxu0 %v1613
  %v1766 = vpop.f32.mrf.mxu0
  %v1767 = vadd.f32 %v1754, %v1766
  %v1768 = vpop.f32.mrf.mxu0
  %1769 = vdwg.mxu0
  %v1772 = vrot.slane %v1637, 4
  %v1773 = vrot.slane %v1663, 4
  %v1776 = vadd.f32 %v266, %v1772
  %v1777 = vadd.f32 %v267, %v1773
  %v1778 = vmul.f32 %v1776, 0.5
  %v1779 = vmul.f32 %v1777, 0.5
  %v1780 = vtanh.pop %v1778
  %v1781 = vtanh.pop %v1779
  %v1782 = vmul.f32 %v1780, 0.5
  %v1783 = vmul.f32 %v1781, 0.5
  %v1784 = vadd.f32 %v1782, 0.5
  %v1785 = vadd.f32 %v1783, 0.5
  %v1786 = vadd.f32 %v1689, %v167
  %v1788 = vrot.slane %v1786, 4
  %v1790 = vmul.f32 %v1784, %v1788
  %v1791 = vadd.f32 %v268, %v1790
  %v1792 = vtanh.pop %v1791
  %v1793 = vsub.f32 1.0, %v1785
  %v1794 = vmul.f32 %v1793, %v1792
  %v1796 = vrot.slane %v1554, 4
  %v1798 = vmul.f32 %v1785, %v1796
  %v1799 = vadd.f32 %v1794, %v1798
  %v1800 = vpack.c.bf16 %v1799, %v1799
  %v1802 = vrot.slane %v1800, 2
  %1804 = vmatpush.bf16.msra.mxu0 %v1039
  %1805 = vmatpush.bf16.msra.mxu0 %v1036
  %1806 = vmatpush.bf16.msra.mxu0 %v1033
  %1807 = vmatpush.bf16.msra.mxu0 %v1030
  %1808 = vmatpush.bf16.msra.mxu0 %v1027
  %1809 = vmatpush.bf16.msra.mxu0 %v1024
  %1810 = vmatpush.bf16.msra.mxu0 %v1021
  %1811 = vmatpush.bf16.msra.mxu0 %v1018
  %1812 = vmatmul.bf16.gmra.mxu0 %v1802
  %v1813 = vpop.f32.mrf.mxu0
  %v1814 = vadd.f32 %v932, %v1813
  %v1815 = vpop.f32.mrf.mxu0
  %1816 = vdwg.mxu0
  %1817 = vmatpush.bf16.msra.mxu0 %v1040
  %1818 = vmatpush.bf16.msra.mxu0 %v1037
  %1819 = vmatpush.bf16.msra.mxu0 %v1034
  %1820 = vmatpush.bf16.msra.mxu0 %v1031
  %1821 = vmatpush.bf16.msra.mxu0 %v1028
  %1822 = vmatpush.bf16.msra.mxu0 %v1025
  %1823 = vmatpush.bf16.msra.mxu0 %v1022
  %1824 = vmatpush.bf16.msra.mxu0 %v1019
  %1825 = vmatmul.bf16.gmra.mxu0 %v1802
  %v1826 = vpop.f32.mrf.mxu0
  %v1827 = vadd.f32 %v933, %v1826
  %v1828 = vpop.f32.mrf.mxu0
  %1829 = vdwg.mxu0
  %1830 = vmatpush.bf16.msra.mxu0 %v1041
  %1831 = vmatpush.bf16.msra.mxu0 %v1038
  %1832 = vmatpush.bf16.msra.mxu0 %v1035
  %1833 = vmatpush.bf16.msra.mxu0 %v1032
  %1834 = vmatpush.bf16.msra.mxu0 %v1029
  %1835 = vmatpush.bf16.msra.mxu0 %v1026
  %1836 = vmatpush.bf16.msra.mxu0 %v1023
  %1837 = vmatpush.bf16.msra.mxu0 %v1020
  %1838 = vmatmul.bf16.gmra.mxu0 %v1802
  %v1839 = vpop.f32.mrf.mxu0
  %v1840 = vadd.f32 %v934, %v1839
  %v1841 = vpop.f32.mrf.mxu0
  %1842 = vdwg.mxu0
  %v1843 = vadd.f32 %v1814, %v1715
  %v1844 = vadd.f32 %v1827, %v1741
  %v1845 = vmul.f32 %v1843, 0.5
  %v1846 = vmul.f32 %v1844, 0.5
  %v1847 = vtanh.pop %v1845
  %v1848 = vtanh.pop %v1846
  %v1849 = vmul.f32 %v1847, 0.5
  %v1850 = vmul.f32 %v1848, 0.5
  %v1851 = vadd.f32 %v1849, 0.5
  %v1852 = vadd.f32 %v1850, 0.5
  %v1853 = vadd.f32 %v1767, %v168
  %v1854 = vmul.f32 %v1851, %v1853
  %v1855 = vadd.f32 %v1840, %v1854
  %v1856 = vtanh.pop %v1855
  %v1857 = vsub.f32 1.0, %v1852
  %v1858 = vmul.f32 %v1857, %v1856
  %v1859 = vmul.f32 %v1852, %v1612
  %v1860 = vadd.f32 %v1858, %v1859
  %v1862 = vrot.slane %v1860, 4
  %v1864 = vpack.c.bf16 %v1862, %v1862
  %v1866 = vrot.slane %v1864, 2
  %1868 = vmatpush.bf16.msra.mxu0 %v606
  %1869 = vmatpush.bf16.msra.mxu0 %v600
  %1870 = vmatpush.bf16.msra.mxu0 %v594
  %1871 = vmatpush.bf16.msra.mxu0 %v588
  %1872 = vmatpush.bf16.msra.mxu0 %v582
  %1873 = vmatpush.bf16.msra.mxu0 %v576
  %1874 = vmatpush.bf16.msra.mxu0 %v570
  %1875 = vmatpush.bf16.msra.mxu0 %v564
  %1876 = vmatmul.bf16.gmra.mxu0 %v1802
  %v1877 = vpop.f32.mrf.mxu0
  %v1878 = vadd.f32 0.0, %v1877
  %v1879 = vpop.f32.mrf.mxu0
  %1880 = vdwg.mxu0
  %1881 = vmatpush.bf16.msra.mxu0 %v654
  %1882 = vmatpush.bf16.msra.mxu0 %v648
  %1883 = vmatpush.bf16.msra.mxu0 %v642
  %1884 = vmatpush.bf16.msra.mxu0 %v636
  %1885 = vmatpush.bf16.msra.mxu0 %v630
  %1886 = vmatpush.bf16.msra.mxu0 %v624
  %1887 = vmatpush.bf16.msra.mxu0 %v618
  %1888 = vmatpush.bf16.msra.mxu0 %v612
  %1889 = vmatmul.bf16.gmra.mxu0 %v1866
  %v1890 = vpop.f32.mrf.mxu0
  %v1891 = vadd.f32 %v1878, %v1890
  %v1892 = vpop.f32.mrf.mxu0
  %1893 = vdwg.mxu0
  %1894 = vmatpush.bf16.msra.mxu0 %v607
  %1895 = vmatpush.bf16.msra.mxu0 %v601
  %1896 = vmatpush.bf16.msra.mxu0 %v595
  %1897 = vmatpush.bf16.msra.mxu0 %v589
  %1898 = vmatpush.bf16.msra.mxu0 %v583
  %1899 = vmatpush.bf16.msra.mxu0 %v577
  %1900 = vmatpush.bf16.msra.mxu0 %v571
  %1901 = vmatpush.bf16.msra.mxu0 %v565
  %1902 = vmatmul.bf16.gmra.mxu0 %v1802
  %v1903 = vpop.f32.mrf.mxu0
  %v1904 = vadd.f32 0.0, %v1903
  %v1905 = vpop.f32.mrf.mxu0
  %1906 = vdwg.mxu0
  %1907 = vmatpush.bf16.msra.mxu0 %v655
  %1908 = vmatpush.bf16.msra.mxu0 %v649
  %1909 = vmatpush.bf16.msra.mxu0 %v643
  %1910 = vmatpush.bf16.msra.mxu0 %v637
  %1911 = vmatpush.bf16.msra.mxu0 %v631
  %1912 = vmatpush.bf16.msra.mxu0 %v625
  %1913 = vmatpush.bf16.msra.mxu0 %v619
  %1914 = vmatpush.bf16.msra.mxu0 %v613
  %1915 = vmatmul.bf16.gmra.mxu0 %v1866
  %v1916 = vpop.f32.mrf.mxu0
  %v1917 = vadd.f32 %v1904, %v1916
  %v1918 = vpop.f32.mrf.mxu0
  %1919 = vdwg.mxu0
  %1920 = vmatpush.bf16.msra.mxu0 %v608
  %1921 = vmatpush.bf16.msra.mxu0 %v602
  %1922 = vmatpush.bf16.msra.mxu0 %v596
  %1923 = vmatpush.bf16.msra.mxu0 %v590
  %1924 = vmatpush.bf16.msra.mxu0 %v584
  %1925 = vmatpush.bf16.msra.mxu0 %v578
  %1926 = vmatpush.bf16.msra.mxu0 %v572
  %1927 = vmatpush.bf16.msra.mxu0 %v566
  %1928 = vmatmul.bf16.gmra.mxu0 %v1802
  %v1929 = vpop.f32.mrf.mxu0
  %v1930 = vadd.f32 0.0, %v1929
  %v1931 = vpop.f32.mrf.mxu0
  %1932 = vdwg.mxu0
  %1933 = vmatpush.bf16.msra.mxu0 %v656
  %1934 = vmatpush.bf16.msra.mxu0 %v650
  %1935 = vmatpush.bf16.msra.mxu0 %v644
  %1936 = vmatpush.bf16.msra.mxu0 %v638
  %1937 = vmatpush.bf16.msra.mxu0 %v632
  %1938 = vmatpush.bf16.msra.mxu0 %v626
  %1939 = vmatpush.bf16.msra.mxu0 %v620
  %1940 = vmatpush.bf16.msra.mxu0 %v614
  %1941 = vmatmul.bf16.gmra.mxu0 %v1866
  %v1942 = vpop.f32.mrf.mxu0
  %v1943 = vadd.f32 %v1930, %v1942
  %v1944 = vpop.f32.mrf.mxu0
  %1945 = vdwg.mxu0
  %1946 = vmatpush.bf16.msra.mxu0 %v609
  %1947 = vmatpush.bf16.msra.mxu0 %v603
  %1948 = vmatpush.bf16.msra.mxu0 %v597
  %1949 = vmatpush.bf16.msra.mxu0 %v591
  %1950 = vmatpush.bf16.msra.mxu0 %v585
  %1951 = vmatpush.bf16.msra.mxu0 %v579
  %1952 = vmatpush.bf16.msra.mxu0 %v573
  %1953 = vmatpush.bf16.msra.mxu0 %v567
  %1954 = vmatmul.bf16.gmra.mxu0 %v1802
  %v1955 = vpop.f32.mrf.mxu0
  %v1956 = vadd.f32 0.0, %v1955
  %v1957 = vpop.f32.mrf.mxu0
  %1958 = vdwg.mxu0
  %1959 = vmatpush.bf16.msra.mxu0 %v657
  %1960 = vmatpush.bf16.msra.mxu0 %v651
  %1961 = vmatpush.bf16.msra.mxu0 %v645
  %1962 = vmatpush.bf16.msra.mxu0 %v639
  %1963 = vmatpush.bf16.msra.mxu0 %v633
  %1964 = vmatpush.bf16.msra.mxu0 %v627
  %1965 = vmatpush.bf16.msra.mxu0 %v621
  %1966 = vmatpush.bf16.msra.mxu0 %v615
  %1967 = vmatmul.bf16.gmra.mxu0 %v1866
  %v1968 = vpop.f32.mrf.mxu0
  %v1969 = vadd.f32 %v1956, %v1968
  %v1970 = vpop.f32.mrf.mxu0
  %1971 = vdwg.mxu0
  %1972 = vmatpush.bf16.msra.mxu0 %v610
  %1973 = vmatpush.bf16.msra.mxu0 %v604
  %1974 = vmatpush.bf16.msra.mxu0 %v598
  %1975 = vmatpush.bf16.msra.mxu0 %v592
  %1976 = vmatpush.bf16.msra.mxu0 %v586
  %1977 = vmatpush.bf16.msra.mxu0 %v580
  %1978 = vmatpush.bf16.msra.mxu0 %v574
  %1979 = vmatpush.bf16.msra.mxu0 %v568
  %1980 = vmatmul.bf16.gmra.mxu0 %v1802
  %v1981 = vpop.f32.mrf.mxu0
  %v1982 = vadd.f32 0.0, %v1981
  %v1983 = vpop.f32.mrf.mxu0
  %1984 = vdwg.mxu0
  %1985 = vmatpush.bf16.msra.mxu0 %v658
  %1986 = vmatpush.bf16.msra.mxu0 %v652
  %1987 = vmatpush.bf16.msra.mxu0 %v646
  %1988 = vmatpush.bf16.msra.mxu0 %v640
  %1989 = vmatpush.bf16.msra.mxu0 %v634
  %1990 = vmatpush.bf16.msra.mxu0 %v628
  %1991 = vmatpush.bf16.msra.mxu0 %v622
  %1992 = vmatpush.bf16.msra.mxu0 %v616
  %1993 = vmatmul.bf16.gmra.mxu0 %v1866
  %v1994 = vpop.f32.mrf.mxu0
  %v1995 = vadd.f32 %v1982, %v1994
  %v1996 = vpop.f32.mrf.mxu0
  %1997 = vdwg.mxu0
  %1998 = vmatpush.bf16.msra.mxu0 %v611
  %1999 = vmatpush.bf16.msra.mxu0 %v605
  %2000 = vmatpush.bf16.msra.mxu0 %v599
  %2001 = vmatpush.bf16.msra.mxu0 %v593
  %2002 = vmatpush.bf16.msra.mxu0 %v587
  %2003 = vmatpush.bf16.msra.mxu0 %v581
  %2004 = vmatpush.bf16.msra.mxu0 %v575
  %2005 = vmatpush.bf16.msra.mxu0 %v569
  %2006 = vmatmul.bf16.gmra.mxu0 %v1802
  %v2007 = vpop.f32.mrf.mxu0
  %v2008 = vadd.f32 0.0, %v2007
  %v2009 = vpop.f32.mrf.mxu0
  %2010 = vdwg.mxu0
  %2011 = vmatpush.bf16.msra.mxu0 %v659
  %2012 = vmatpush.bf16.msra.mxu0 %v653
  %2013 = vmatpush.bf16.msra.mxu0 %v647
  %2014 = vmatpush.bf16.msra.mxu0 %v641
  %2015 = vmatpush.bf16.msra.mxu0 %v635
  %2016 = vmatpush.bf16.msra.mxu0 %v629
  %2017 = vmatpush.bf16.msra.mxu0 %v623
  %2018 = vmatpush.bf16.msra.mxu0 %v617
  %2019 = vmatmul.bf16.gmra.mxu0 %v1866
  %v2020 = vpop.f32.mrf.mxu0
  %v2021 = vadd.f32 %v2008, %v2020
  %v2022 = vpop.f32.mrf.mxu0
  %2023 = vdwg.mxu0
  %v2024 = vadd.f32 %v269, %v1891
  %v2025 = vadd.f32 %v270, %v1917
  %v2026 = vmul.f32 %v2024, 0.5
  %v2027 = vmul.f32 %v2025, 0.5
  %v2028 = vtanh.pop %v2026
  %v2029 = vtanh.pop %v2027
  %v2030 = vmul.f32 %v2028, 0.5
  %v2031 = vmul.f32 %v2029, 0.5
  %v2032 = vadd.f32 %v2030, 0.5
  %v2033 = vadd.f32 %v2031, 0.5
  %v2034 = vadd.f32 %v1943, %v167
  %v2035 = vmul.f32 %v2032, %v2034
  %v2036 = vadd.f32 %v271, %v2035
  %v2037 = vtanh.pop %v2036
  %v2038 = vsub.f32 1.0, %v2033
  %v2039 = vmul.f32 %v2038, %v2037
  %v2041 = vrot.slane %v1799, 4
  %v2043 = vmul.f32 %v2033, %v2041
  %v2044 = vadd.f32 %v2039, %v2043
  %v2045 = vpack.c.bf16 %v2044, %v2044
  %2046 = vmatpush.bf16.msra.mxu0 %v1039
  %2047 = vmatpush.bf16.msra.mxu0 %v1036
  %2048 = vmatpush.bf16.msra.mxu0 %v1033
  %2049 = vmatpush.bf16.msra.mxu0 %v1030
  %2050 = vmatpush.bf16.msra.mxu0 %v1027
  %2051 = vmatpush.bf16.msra.mxu0 %v1024
  %2052 = vmatpush.bf16.msra.mxu0 %v1021
  %2053 = vmatpush.bf16.msra.mxu0 %v1018
  %2054 = vmatmul.bf16.gmra.mxu0 %v2045
  %v2055 = vpop.f32.mrf.mxu0
  %v2056 = vadd.f32 %v932, %v2055
  %v2057 = vpop.f32.mrf.mxu0
  %2058 = vdwg.mxu0
  %2059 = vmatpush.bf16.msra.mxu0 %v1040
  %2060 = vmatpush.bf16.msra.mxu0 %v1037
  %2061 = vmatpush.bf16.msra.mxu0 %v1034
  %2062 = vmatpush.bf16.msra.mxu0 %v1031
  %2063 = vmatpush.bf16.msra.mxu0 %v1028
  %2064 = vmatpush.bf16.msra.mxu0 %v1025
  %2065 = vmatpush.bf16.msra.mxu0 %v1022
  %2066 = vmatpush.bf16.msra.mxu0 %v1019
  %2067 = vmatmul.bf16.gmra.mxu0 %v2045
  %v2068 = vpop.f32.mrf.mxu0
  %v2069 = vadd.f32 %v933, %v2068
  %v2070 = vpop.f32.mrf.mxu0
  %2071 = vdwg.mxu0
  %2072 = vmatpush.bf16.msra.mxu0 %v1041
  %2073 = vmatpush.bf16.msra.mxu0 %v1038
  %2074 = vmatpush.bf16.msra.mxu0 %v1035
  %2075 = vmatpush.bf16.msra.mxu0 %v1032
  %2076 = vmatpush.bf16.msra.mxu0 %v1029
  %2077 = vmatpush.bf16.msra.mxu0 %v1026
  %2078 = vmatpush.bf16.msra.mxu0 %v1023
  %2079 = vmatpush.bf16.msra.mxu0 %v1020
  %2080 = vmatmul.bf16.gmra.mxu0 %v2045
  %v2081 = vpop.f32.mrf.mxu0
  %v2082 = vadd.f32 %v934, %v2081
  %v2083 = vpop.f32.mrf.mxu0
  %2084 = vdwg.mxu0
  %v2085 = vadd.f32 %v2056, %v1969
  %v2086 = vadd.f32 %v2069, %v1995
  %v2087 = vmul.f32 %v2085, 0.5
  %v2088 = vmul.f32 %v2086, 0.5
  %v2089 = vtanh.pop %v2087
  %v2090 = vtanh.pop %v2088
  %v2091 = vmul.f32 %v2089, 0.5
  %v2092 = vmul.f32 %v2090, 0.5
  %v2093 = vadd.f32 %v2091, 0.5
  %v2094 = vadd.f32 %v2092, 0.5
  %v2095 = vadd.f32 %v2021, %v168
  %v2096 = vmul.f32 %v2093, %v2095
  %v2097 = vadd.f32 %v2082, %v2096
  %v2098 = vtanh.pop %v2097
  %v2099 = vsub.f32 1.0, %v2094
  %v2100 = vmul.f32 %v2099, %v2098
  %v2101 = vmul.f32 %v2094, %v1860
  %v2102 = vadd.f32 %v2100, %v2101
  %v2103 = vpack.c.bf16 %v2102, %v2102
  %2104 = vmatpush.bf16.msra.mxu0 %v606
  %2105 = vmatpush.bf16.msra.mxu0 %v600
  %2106 = vmatpush.bf16.msra.mxu0 %v594
  %2107 = vmatpush.bf16.msra.mxu0 %v588
  %2108 = vmatpush.bf16.msra.mxu0 %v582
  %2109 = vmatpush.bf16.msra.mxu0 %v576
  %2110 = vmatpush.bf16.msra.mxu0 %v570
  %2111 = vmatpush.bf16.msra.mxu0 %v564
  %2112 = vmatmul.bf16.gmra.mxu0 %v2045
  %v2113 = vpop.f32.mrf.mxu0
  %v2114 = vadd.f32 0.0, %v2113
  %v2115 = vpop.f32.mrf.mxu0
  %2116 = vdwg.mxu0
  %2117 = vmatpush.bf16.msra.mxu0 %v654
  %2118 = vmatpush.bf16.msra.mxu0 %v648
  %2119 = vmatpush.bf16.msra.mxu0 %v642
  %2120 = vmatpush.bf16.msra.mxu0 %v636
  %2121 = vmatpush.bf16.msra.mxu0 %v630
  %2122 = vmatpush.bf16.msra.mxu0 %v624
  %2123 = vmatpush.bf16.msra.mxu0 %v618
  %2124 = vmatpush.bf16.msra.mxu0 %v612
  %2125 = vmatmul.bf16.gmra.mxu0 %v2103
  %v2126 = vpop.f32.mrf.mxu0
  %v2127 = vadd.f32 %v2114, %v2126
  %v2128 = vpop.f32.mrf.mxu0
  %2129 = vdwg.mxu0
  %2130 = vmatpush.bf16.msra.mxu0 %v607
  %2131 = vmatpush.bf16.msra.mxu0 %v601
  %2132 = vmatpush.bf16.msra.mxu0 %v595
  %2133 = vmatpush.bf16.msra.mxu0 %v589
  %2134 = vmatpush.bf16.msra.mxu0 %v583
  %2135 = vmatpush.bf16.msra.mxu0 %v577
  %2136 = vmatpush.bf16.msra.mxu0 %v571
  %2137 = vmatpush.bf16.msra.mxu0 %v565
  %2138 = vmatmul.bf16.gmra.mxu0 %v2045
  %v2139 = vpop.f32.mrf.mxu0
  %v2140 = vadd.f32 0.0, %v2139
  %v2141 = vpop.f32.mrf.mxu0
  %2142 = vdwg.mxu0
  %2143 = vmatpush.bf16.msra.mxu0 %v655
  %2144 = vmatpush.bf16.msra.mxu0 %v649
  %2145 = vmatpush.bf16.msra.mxu0 %v643
  %2146 = vmatpush.bf16.msra.mxu0 %v637
  %2147 = vmatpush.bf16.msra.mxu0 %v631
  %2148 = vmatpush.bf16.msra.mxu0 %v625
  %2149 = vmatpush.bf16.msra.mxu0 %v619
  %2150 = vmatpush.bf16.msra.mxu0 %v613
  %2151 = vmatmul.bf16.gmra.mxu0 %v2103
  %v2152 = vpop.f32.mrf.mxu0
  %v2153 = vadd.f32 %v2140, %v2152
  %v2154 = vpop.f32.mrf.mxu0
  %2155 = vdwg.mxu0
  %2156 = vmatpush.bf16.msra.mxu0 %v608
  %2157 = vmatpush.bf16.msra.mxu0 %v602
  %2158 = vmatpush.bf16.msra.mxu0 %v596
  %2159 = vmatpush.bf16.msra.mxu0 %v590
  %2160 = vmatpush.bf16.msra.mxu0 %v584
  %2161 = vmatpush.bf16.msra.mxu0 %v578
  %2162 = vmatpush.bf16.msra.mxu0 %v572
  %2163 = vmatpush.bf16.msra.mxu0 %v566
  %2164 = vmatmul.bf16.gmra.mxu0 %v2045
  %v2165 = vpop.f32.mrf.mxu0
  %v2166 = vadd.f32 0.0, %v2165
  %v2167 = vpop.f32.mrf.mxu0
  %2168 = vdwg.mxu0
  %2169 = vmatpush.bf16.msra.mxu0 %v656
  %2170 = vmatpush.bf16.msra.mxu0 %v650
  %2171 = vmatpush.bf16.msra.mxu0 %v644
  %2172 = vmatpush.bf16.msra.mxu0 %v638
  %2173 = vmatpush.bf16.msra.mxu0 %v632
  %2174 = vmatpush.bf16.msra.mxu0 %v626
  %2175 = vmatpush.bf16.msra.mxu0 %v620
  %2176 = vmatpush.bf16.msra.mxu0 %v614
  %2177 = vmatmul.bf16.gmra.mxu0 %v2103
  %v2178 = vpop.f32.mrf.mxu0
  %v2179 = vadd.f32 %v2166, %v2178
  %v2180 = vpop.f32.mrf.mxu0
  %2181 = vdwg.mxu0
  %2182 = vmatpush.bf16.msra.mxu0 %v609
  %2183 = vmatpush.bf16.msra.mxu0 %v603
  %2184 = vmatpush.bf16.msra.mxu0 %v597
  %2185 = vmatpush.bf16.msra.mxu0 %v591
  %2186 = vmatpush.bf16.msra.mxu0 %v585
  %2187 = vmatpush.bf16.msra.mxu0 %v579
  %2188 = vmatpush.bf16.msra.mxu0 %v573
  %2189 = vmatpush.bf16.msra.mxu0 %v567
  %2190 = vmatmul.bf16.gmra.mxu0 %v2045
  %v2191 = vpop.f32.mrf.mxu0
  %v2192 = vadd.f32 0.0, %v2191
  %v2193 = vpop.f32.mrf.mxu0
  %2194 = vdwg.mxu0
  %2195 = vmatpush.bf16.msra.mxu0 %v657
  %2196 = vmatpush.bf16.msra.mxu0 %v651
  %2197 = vmatpush.bf16.msra.mxu0 %v645
  %2198 = vmatpush.bf16.msra.mxu0 %v639
  %2199 = vmatpush.bf16.msra.mxu0 %v633
  %2200 = vmatpush.bf16.msra.mxu0 %v627
  %2201 = vmatpush.bf16.msra.mxu0 %v621
  %2202 = vmatpush.bf16.msra.mxu0 %v615
  %2203 = vmatmul.bf16.gmra.mxu0 %v2103
  %v2204 = vpop.f32.mrf.mxu0
  %v2205 = vadd.f32 %v2192, %v2204
  %v2206 = vpop.f32.mrf.mxu0
  %2207 = vdwg.mxu0
  %2208 = vmatpush.bf16.msra.mxu0 %v610
  %2209 = vmatpush.bf16.msra.mxu0 %v604
  %2210 = vmatpush.bf16.msra.mxu0 %v598
  %2211 = vmatpush.bf16.msra.mxu0 %v592
  %2212 = vmatpush.bf16.msra.mxu0 %v586
  %2213 = vmatpush.bf16.msra.mxu0 %v580
  %2214 = vmatpush.bf16.msra.mxu0 %v574
  %2215 = vmatpush.bf16.msra.mxu0 %v568
  %2216 = vmatmul.bf16.gmra.mxu0 %v2045
  %v2217 = vpop.f32.mrf.mxu0
  %v2218 = vadd.f32 0.0, %v2217
  %v2219 = vpop.f32.mrf.mxu0
  %2220 = vdwg.mxu0
  %2221 = vmatpush.bf16.msra.mxu0 %v658
  %2222 = vmatpush.bf16.msra.mxu0 %v652
  %2223 = vmatpush.bf16.msra.mxu0 %v646
  %2224 = vmatpush.bf16.msra.mxu0 %v640
  %2225 = vmatpush.bf16.msra.mxu0 %v634
  %2226 = vmatpush.bf16.msra.mxu0 %v628
  %2227 = vmatpush.bf16.msra.mxu0 %v622
  %2228 = vmatpush.bf16.msra.mxu0 %v616
  %2229 = vmatmul.bf16.gmra.mxu0 %v2103
  %v2230 = vpop.f32.mrf.mxu0
  %v2231 = vadd.f32 %v2218, %v2230
  %v2232 = vpop.f32.mrf.mxu0
  %2233 = vdwg.mxu0
  %2234 = vmatpush.bf16.msra.mxu0 %v611
  %2235 = vmatpush.bf16.msra.mxu0 %v605
  %2236 = vmatpush.bf16.msra.mxu0 %v599
  %2237 = vmatpush.bf16.msra.mxu0 %v593
  %2238 = vmatpush.bf16.msra.mxu0 %v587
  %2239 = vmatpush.bf16.msra.mxu0 %v581
  %2240 = vmatpush.bf16.msra.mxu0 %v575
  %2241 = vmatpush.bf16.msra.mxu0 %v569
  %2242 = vmatmul.bf16.gmra.mxu0 %v2045
  %v2243 = vpop.f32.mrf.mxu0
  %v2244 = vadd.f32 0.0, %v2243
  %v2245 = vpop.f32.mrf.mxu0
  %2246 = vdwg.mxu0
  %2247 = vmatpush.bf16.msra.mxu0 %v659
  %2248 = vmatpush.bf16.msra.mxu0 %v653
  %2249 = vmatpush.bf16.msra.mxu0 %v647
  %2250 = vmatpush.bf16.msra.mxu0 %v641
  %2251 = vmatpush.bf16.msra.mxu0 %v635
  %2252 = vmatpush.bf16.msra.mxu0 %v629
  %2253 = vmatpush.bf16.msra.mxu0 %v623
  %2254 = vmatpush.bf16.msra.mxu0 %v617
  %2255 = vmatmul.bf16.gmra.mxu0 %v2103
  %v2256 = vpop.f32.mrf.mxu0
  %v2257 = vadd.f32 %v2244, %v2256
  %v2258 = vpop.f32.mrf.mxu0
  %2259 = vdwg.mxu0
  %v2262 = vrot.slane %v2127, 4
  %v2263 = vrot.slane %v2153, 4
  %v2266 = vadd.f32 %v269, %v2262
  %v2267 = vadd.f32 %v270, %v2263
  %v2268 = vmul.f32 %v2266, 0.5
  %v2269 = vmul.f32 %v2267, 0.5
  %v2270 = vtanh.pop %v2268
  %v2271 = vtanh.pop %v2269
  %v2272 = vmul.f32 %v2270, 0.5
  %v2273 = vmul.f32 %v2271, 0.5
  %v2274 = vadd.f32 %v2272, 0.5
  %v2275 = vadd.f32 %v2273, 0.5
  %v2276 = vadd.f32 %v2179, %v167
  %v2278 = vrot.slane %v2276, 4
  %v2280 = vmul.f32 %v2274, %v2278
  %v2281 = vadd.f32 %v271, %v2280
  %v2282 = vtanh.pop %v2281
  %v2283 = vsub.f32 1.0, %v2275
  %v2284 = vmul.f32 %v2283, %v2282
  %v2286 = vrot.slane %v2044, 4
  %v2288 = vmul.f32 %v2275, %v2286
  %v2289 = vadd.f32 %v2284, %v2288
  %v2290 = vpack.c.bf16 %v2289, %v2289
  %v2292 = vrot.slane %v2290, 2
  %2294 = vmatpush.bf16.msra.mxu0 %v1039
  %2295 = vmatpush.bf16.msra.mxu0 %v1036
  %2296 = vmatpush.bf16.msra.mxu0 %v1033
  %2297 = vmatpush.bf16.msra.mxu0 %v1030
  %2298 = vmatpush.bf16.msra.mxu0 %v1027
  %2299 = vmatpush.bf16.msra.mxu0 %v1024
  %2300 = vmatpush.bf16.msra.mxu0 %v1021
  %2301 = vmatpush.bf16.msra.mxu0 %v1018
  %2302 = vmatmul.bf16.gmra.mxu0 %v2292
  %v2303 = vpop.f32.mrf.mxu0
  %v2304 = vadd.f32 %v932, %v2303
  %v2305 = vpop.f32.mrf.mxu0
  %2306 = vdwg.mxu0
  %2307 = vmatpush.bf16.msra.mxu0 %v1040
  %2308 = vmatpush.bf16.msra.mxu0 %v1037
  %2309 = vmatpush.bf16.msra.mxu0 %v1034
  %2310 = vmatpush.bf16.msra.mxu0 %v1031
  %2311 = vmatpush.bf16.msra.mxu0 %v1028
  %2312 = vmatpush.bf16.msra.mxu0 %v1025
  %2313 = vmatpush.bf16.msra.mxu0 %v1022
  %2314 = vmatpush.bf16.msra.mxu0 %v1019
  %2315 = vmatmul.bf16.gmra.mxu0 %v2292
  %v2316 = vpop.f32.mrf.mxu0
  %v2317 = vadd.f32 %v933, %v2316
  %v2318 = vpop.f32.mrf.mxu0
  %2319 = vdwg.mxu0
  %2320 = vmatpush.bf16.msra.mxu0 %v1041
  %2321 = vmatpush.bf16.msra.mxu0 %v1038
  %2322 = vmatpush.bf16.msra.mxu0 %v1035
  %2323 = vmatpush.bf16.msra.mxu0 %v1032
  %2324 = vmatpush.bf16.msra.mxu0 %v1029
  %2325 = vmatpush.bf16.msra.mxu0 %v1026
  %2326 = vmatpush.bf16.msra.mxu0 %v1023
  %2327 = vmatpush.bf16.msra.mxu0 %v1020
  %2328 = vmatmul.bf16.gmra.mxu0 %v2292
  %v2329 = vpop.f32.mrf.mxu0
  %v2330 = vadd.f32 %v934, %v2329
  %v2331 = vpop.f32.mrf.mxu0
  %2332 = vdwg.mxu0
  %v2333 = vadd.f32 %v2304, %v2205
  %v2334 = vadd.f32 %v2317, %v2231
  %v2335 = vmul.f32 %v2333, 0.5
  %v2336 = vmul.f32 %v2334, 0.5
  %v2337 = vtanh.pop %v2335
  %v2338 = vtanh.pop %v2336
  %v2339 = vmul.f32 %v2337, 0.5
  %v2340 = vmul.f32 %v2338, 0.5
  %v2341 = vadd.f32 %v2339, 0.5
  %v2342 = vadd.f32 %v2340, 0.5
  %v2343 = vadd.f32 %v2257, %v168
  %v2344 = vmul.f32 %v2341, %v2343
  %v2345 = vadd.f32 %v2330, %v2344
  %v2346 = vtanh.pop %v2345
  %v2347 = vsub.f32 1.0, %v2342
  %v2348 = vmul.f32 %v2347, %v2346
  %v2349 = vmul.f32 %v2342, %v2102
  %v2350 = vadd.f32 %v2348, %v2349
  %v2352 = vrot.slane %v2350, 4
  %v2354 = vpack.c.bf16 %v2352, %v2352
  %v2356 = vrot.slane %v2354, 2
  %2358 = vmatpush.bf16.msra.mxu0 %v606
  %2359 = vmatpush.bf16.msra.mxu0 %v600
  %2360 = vmatpush.bf16.msra.mxu0 %v594
  %2361 = vmatpush.bf16.msra.mxu0 %v588
  %2362 = vmatpush.bf16.msra.mxu0 %v582
  %2363 = vmatpush.bf16.msra.mxu0 %v576
  %2364 = vmatpush.bf16.msra.mxu0 %v570
  %2365 = vmatpush.bf16.msra.mxu0 %v564
  %2366 = vmatmul.bf16.gmra.mxu0 %v2292
  %v2367 = vpop.f32.mrf.mxu0
  %v2368 = vadd.f32 0.0, %v2367
  %v2369 = vpop.f32.mrf.mxu0
  %2370 = vdwg.mxu0
  %2371 = vmatpush.bf16.msra.mxu0 %v654
  %2372 = vmatpush.bf16.msra.mxu0 %v648
  %2373 = vmatpush.bf16.msra.mxu0 %v642
  %2374 = vmatpush.bf16.msra.mxu0 %v636
  %2375 = vmatpush.bf16.msra.mxu0 %v630
  %2376 = vmatpush.bf16.msra.mxu0 %v624
  %2377 = vmatpush.bf16.msra.mxu0 %v618
  %2378 = vmatpush.bf16.msra.mxu0 %v612
  %2379 = vmatmul.bf16.gmra.mxu0 %v2356
  %v2380 = vpop.f32.mrf.mxu0
  %v2381 = vadd.f32 %v2368, %v2380
  %v2382 = vpop.f32.mrf.mxu0
  %2383 = vdwg.mxu0
  %2384 = vmatpush.bf16.msra.mxu0 %v607
  %2385 = vmatpush.bf16.msra.mxu0 %v601
  %2386 = vmatpush.bf16.msra.mxu0 %v595
  %2387 = vmatpush.bf16.msra.mxu0 %v589
  %2388 = vmatpush.bf16.msra.mxu0 %v583
  %2389 = vmatpush.bf16.msra.mxu0 %v577
  %2390 = vmatpush.bf16.msra.mxu0 %v571
  %2391 = vmatpush.bf16.msra.mxu0 %v565
  %2392 = vmatmul.bf16.gmra.mxu0 %v2292
  %v2393 = vpop.f32.mrf.mxu0
  %v2394 = vadd.f32 0.0, %v2393
  %v2395 = vpop.f32.mrf.mxu0
  %2396 = vdwg.mxu0
  %2397 = vmatpush.bf16.msra.mxu0 %v655
  %2398 = vmatpush.bf16.msra.mxu0 %v649
  %2399 = vmatpush.bf16.msra.mxu0 %v643
  %2400 = vmatpush.bf16.msra.mxu0 %v637
  %2401 = vmatpush.bf16.msra.mxu0 %v631
  %2402 = vmatpush.bf16.msra.mxu0 %v625
  %2403 = vmatpush.bf16.msra.mxu0 %v619
  %2404 = vmatpush.bf16.msra.mxu0 %v613
  %2405 = vmatmul.bf16.gmra.mxu0 %v2356
  %v2406 = vpop.f32.mrf.mxu0
  %v2407 = vadd.f32 %v2394, %v2406
  %v2408 = vpop.f32.mrf.mxu0
  %2409 = vdwg.mxu0
  %2410 = vmatpush.bf16.msra.mxu0 %v608
  %2411 = vmatpush.bf16.msra.mxu0 %v602
  %2412 = vmatpush.bf16.msra.mxu0 %v596
  %2413 = vmatpush.bf16.msra.mxu0 %v590
  %2414 = vmatpush.bf16.msra.mxu0 %v584
  %2415 = vmatpush.bf16.msra.mxu0 %v578
  %2416 = vmatpush.bf16.msra.mxu0 %v572
  %2417 = vmatpush.bf16.msra.mxu0 %v566
  %2418 = vmatmul.bf16.gmra.mxu0 %v2292
  %v2419 = vpop.f32.mrf.mxu0
  %v2420 = vadd.f32 0.0, %v2419
  %v2421 = vpop.f32.mrf.mxu0
  %2422 = vdwg.mxu0
  %2423 = vmatpush.bf16.msra.mxu0 %v656
  %2424 = vmatpush.bf16.msra.mxu0 %v650
  %2425 = vmatpush.bf16.msra.mxu0 %v644
  %2426 = vmatpush.bf16.msra.mxu0 %v638
  %2427 = vmatpush.bf16.msra.mxu0 %v632
  %2428 = vmatpush.bf16.msra.mxu0 %v626
  %2429 = vmatpush.bf16.msra.mxu0 %v620
  %2430 = vmatpush.bf16.msra.mxu0 %v614
  %2431 = vmatmul.bf16.gmra.mxu0 %v2356
  %v2432 = vpop.f32.mrf.mxu0
  %v2433 = vadd.f32 %v2420, %v2432
  %v2434 = vpop.f32.mrf.mxu0
  %2435 = vdwg.mxu0
  %2436 = vmatpush.bf16.msra.mxu0 %v609
  %2437 = vmatpush.bf16.msra.mxu0 %v603
  %2438 = vmatpush.bf16.msra.mxu0 %v597
  %2439 = vmatpush.bf16.msra.mxu0 %v591
  %2440 = vmatpush.bf16.msra.mxu0 %v585
  %2441 = vmatpush.bf16.msra.mxu0 %v579
  %2442 = vmatpush.bf16.msra.mxu0 %v573
  %2443 = vmatpush.bf16.msra.mxu0 %v567
  %2444 = vmatmul.bf16.gmra.mxu0 %v2292
  %v2445 = vpop.f32.mrf.mxu0
  %v2446 = vadd.f32 0.0, %v2445
  %v2447 = vpop.f32.mrf.mxu0
  %2448 = vdwg.mxu0
  %2449 = vmatpush.bf16.msra.mxu0 %v657
  %2450 = vmatpush.bf16.msra.mxu0 %v651
  %2451 = vmatpush.bf16.msra.mxu0 %v645
  %2452 = vmatpush.bf16.msra.mxu0 %v639
  %2453 = vmatpush.bf16.msra.mxu0 %v633
  %2454 = vmatpush.bf16.msra.mxu0 %v627
  %2455 = vmatpush.bf16.msra.mxu0 %v621
  %2456 = vmatpush.bf16.msra.mxu0 %v615
  %2457 = vmatmul.bf16.gmra.mxu0 %v2356
  %v2458 = vpop.f32.mrf.mxu0
  %v2459 = vadd.f32 %v2446, %v2458
  %v2460 = vpop.f32.mrf.mxu0
  %2461 = vdwg.mxu0
  %2462 = vmatpush.bf16.msra.mxu0 %v610
  %2463 = vmatpush.bf16.msra.mxu0 %v604
  %2464 = vmatpush.bf16.msra.mxu0 %v598
  %2465 = vmatpush.bf16.msra.mxu0 %v592
  %2466 = vmatpush.bf16.msra.mxu0 %v586
  %2467 = vmatpush.bf16.msra.mxu0 %v580
  %2468 = vmatpush.bf16.msra.mxu0 %v574
  %2469 = vmatpush.bf16.msra.mxu0 %v568
  %2470 = vmatmul.bf16.gmra.mxu0 %v2292
  %v2471 = vpop.f32.mrf.mxu0
  %v2472 = vadd.f32 0.0, %v2471
  %v2473 = vpop.f32.mrf.mxu0
  %2474 = vdwg.mxu0
  %2475 = vmatpush.bf16.msra.mxu0 %v658
  %2476 = vmatpush.bf16.msra.mxu0 %v652
  %2477 = vmatpush.bf16.msra.mxu0 %v646
  %2478 = vmatpush.bf16.msra.mxu0 %v640
  %2479 = vmatpush.bf16.msra.mxu0 %v634
  %2480 = vmatpush.bf16.msra.mxu0 %v628
  %2481 = vmatpush.bf16.msra.mxu0 %v622
  %2482 = vmatpush.bf16.msra.mxu0 %v616
  %2483 = vmatmul.bf16.gmra.mxu0 %v2356
  %v2484 = vpop.f32.mrf.mxu0
  %v2485 = vadd.f32 %v2472, %v2484
  %v2486 = vpop.f32.mrf.mxu0
  %2487 = vdwg.mxu0
  %2488 = vmatpush.bf16.msra.mxu0 %v611
  %2489 = vmatpush.bf16.msra.mxu0 %v605
  %2490 = vmatpush.bf16.msra.mxu0 %v599
  %2491 = vmatpush.bf16.msra.mxu0 %v593
  %2492 = vmatpush.bf16.msra.mxu0 %v587
  %2493 = vmatpush.bf16.msra.mxu0 %v581
  %2494 = vmatpush.bf16.msra.mxu0 %v575
  %2495 = vmatpush.bf16.msra.mxu0 %v569
  %2496 = vmatmul.bf16.gmra.mxu0 %v2292
  %v2497 = vpop.f32.mrf.mxu0
  %v2498 = vadd.f32 0.0, %v2497
  %v2499 = vpop.f32.mrf.mxu0
  %2500 = vdwg.mxu0
  %2501 = vmatpush.bf16.msra.mxu0 %v659
  %2502 = vmatpush.bf16.msra.mxu0 %v653
  %2503 = vmatpush.bf16.msra.mxu0 %v647
  %2504 = vmatpush.bf16.msra.mxu0 %v641
  %2505 = vmatpush.bf16.msra.mxu0 %v635
  %2506 = vmatpush.bf16.msra.mxu0 %v629
  %2507 = vmatpush.bf16.msra.mxu0 %v623
  %2508 = vmatpush.bf16.msra.mxu0 %v617
  %2509 = vmatmul.bf16.gmra.mxu0 %v2356
  %v2510 = vpop.f32.mrf.mxu0
  %v2511 = vadd.f32 %v2498, %v2510
  %v2512 = vpop.f32.mrf.mxu0
  %2513 = vdwg.mxu0
  %v2514 = vadd.f32 %v272, %v2381
  %v2515 = vadd.f32 %v273, %v2407
  %v2516 = vmul.f32 %v2514, 0.5
  %v2517 = vmul.f32 %v2515, 0.5
  %v2518 = vtanh.pop %v2516
  %v2519 = vtanh.pop %v2517
  %v2520 = vmul.f32 %v2518, 0.5
  %v2521 = vmul.f32 %v2519, 0.5
  %v2522 = vadd.f32 %v2520, 0.5
  %v2523 = vadd.f32 %v2521, 0.5
  %v2524 = vadd.f32 %v2433, %v167
  %v2525 = vmul.f32 %v2522, %v2524
  %v2526 = vadd.f32 %v274, %v2525
  %v2527 = vtanh.pop %v2526
  %v2528 = vsub.f32 1.0, %v2523
  %v2529 = vmul.f32 %v2528, %v2527
  %v2531 = vrot.slane %v2289, 4
  %v2533 = vmul.f32 %v2523, %v2531
  %v2534 = vadd.f32 %v2529, %v2533
  %v2535 = vpack.c.bf16 %v2534, %v2534
  %2536 = vmatpush.bf16.msra.mxu0 %v1039
  %2537 = vmatpush.bf16.msra.mxu0 %v1036
  %2538 = vmatpush.bf16.msra.mxu0 %v1033
  %2539 = vmatpush.bf16.msra.mxu0 %v1030
  %2540 = vmatpush.bf16.msra.mxu0 %v1027
  %2541 = vmatpush.bf16.msra.mxu0 %v1024
  %2542 = vmatpush.bf16.msra.mxu0 %v1021
  %2543 = vmatpush.bf16.msra.mxu0 %v1018
  %2544 = vmatmul.bf16.gmra.mxu0 %v2535
  %v2545 = vpop.f32.mrf.mxu0
  %v2546 = vadd.f32 %v932, %v2545
  %v2547 = vpop.f32.mrf.mxu0
  %2548 = vdwg.mxu0
  %2549 = vmatpush.bf16.msra.mxu0 %v1040
  %2550 = vmatpush.bf16.msra.mxu0 %v1037
  %2551 = vmatpush.bf16.msra.mxu0 %v1034
  %2552 = vmatpush.bf16.msra.mxu0 %v1031
  %2553 = vmatpush.bf16.msra.mxu0 %v1028
  %2554 = vmatpush.bf16.msra.mxu0 %v1025
  %2555 = vmatpush.bf16.msra.mxu0 %v1022
  %2556 = vmatpush.bf16.msra.mxu0 %v1019
  %2557 = vmatmul.bf16.gmra.mxu0 %v2535
  %v2558 = vpop.f32.mrf.mxu0
  %v2559 = vadd.f32 %v933, %v2558
  %v2560 = vpop.f32.mrf.mxu0
  %2561 = vdwg.mxu0
  %2562 = vmatpush.bf16.msra.mxu0 %v1041
  %2563 = vmatpush.bf16.msra.mxu0 %v1038
  %2564 = vmatpush.bf16.msra.mxu0 %v1035
  %2565 = vmatpush.bf16.msra.mxu0 %v1032
  %2566 = vmatpush.bf16.msra.mxu0 %v1029
  %2567 = vmatpush.bf16.msra.mxu0 %v1026
  %2568 = vmatpush.bf16.msra.mxu0 %v1023
  %2569 = vmatpush.bf16.msra.mxu0 %v1020
  %2570 = vmatmul.bf16.gmra.mxu0 %v2535
  %v2571 = vpop.f32.mrf.mxu0
  %v2572 = vadd.f32 %v934, %v2571
  %v2573 = vpop.f32.mrf.mxu0
  %2574 = vdwg.mxu0
  %v2575 = vadd.f32 %v2546, %v2459
  %v2576 = vadd.f32 %v2559, %v2485
  %v2577 = vmul.f32 %v2575, 0.5
  %v2578 = vmul.f32 %v2576, 0.5
  %v2579 = vtanh.pop %v2577
  %v2580 = vtanh.pop %v2578
  %v2581 = vmul.f32 %v2579, 0.5
  %v2582 = vmul.f32 %v2580, 0.5
  %v2583 = vadd.f32 %v2581, 0.5
  %v2584 = vadd.f32 %v2582, 0.5
  %v2585 = vadd.f32 %v2511, %v168
  %v2586 = vmul.f32 %v2583, %v2585
  %v2587 = vadd.f32 %v2572, %v2586
  %v2588 = vtanh.pop %v2587
  %v2589 = vsub.f32 1.0, %v2584
  %v2590 = vmul.f32 %v2589, %v2588
  %v2591 = vmul.f32 %v2584, %v2350
  %v2592 = vadd.f32 %v2590, %v2591
  %v2593 = vpack.c.bf16 %v2592, %v2592
  %2594 = vmatpush.bf16.msra.mxu0 %v606
  %2595 = vmatpush.bf16.msra.mxu0 %v600
  %2596 = vmatpush.bf16.msra.mxu0 %v594
  %2597 = vmatpush.bf16.msra.mxu0 %v588
  %2598 = vmatpush.bf16.msra.mxu0 %v582
  %2599 = vmatpush.bf16.msra.mxu0 %v576
  %2600 = vmatpush.bf16.msra.mxu0 %v570
  %2601 = vmatpush.bf16.msra.mxu0 %v564
  %2602 = vmatmul.bf16.gmra.mxu0 %v2535
  %v2603 = vpop.f32.mrf.mxu0
  %v2604 = vadd.f32 0.0, %v2603
  %v2605 = vpop.f32.mrf.mxu0
  %2606 = vdwg.mxu0
  %2607 = vmatpush.bf16.msra.mxu0 %v654
  %2608 = vmatpush.bf16.msra.mxu0 %v648
  %2609 = vmatpush.bf16.msra.mxu0 %v642
  %2610 = vmatpush.bf16.msra.mxu0 %v636
  %2611 = vmatpush.bf16.msra.mxu0 %v630
  %2612 = vmatpush.bf16.msra.mxu0 %v624
  %2613 = vmatpush.bf16.msra.mxu0 %v618
  %2614 = vmatpush.bf16.msra.mxu0 %v612
  %2615 = vmatmul.bf16.gmra.mxu0 %v2593
  %v2616 = vpop.f32.mrf.mxu0
  %v2617 = vadd.f32 %v2604, %v2616
  %v2618 = vpop.f32.mrf.mxu0
  %2619 = vdwg.mxu0
  %2620 = vmatpush.bf16.msra.mxu0 %v607
  %2621 = vmatpush.bf16.msra.mxu0 %v601
  %2622 = vmatpush.bf16.msra.mxu0 %v595
  %2623 = vmatpush.bf16.msra.mxu0 %v589
  %2624 = vmatpush.bf16.msra.mxu0 %v583
  %2625 = vmatpush.bf16.msra.mxu0 %v577
  %2626 = vmatpush.bf16.msra.mxu0 %v571
  %2627 = vmatpush.bf16.msra.mxu0 %v565
  %2628 = vmatmul.bf16.gmra.mxu0 %v2535
  %v2629 = vpop.f32.mrf.mxu0
  %v2630 = vadd.f32 0.0, %v2629
  %v2631 = vpop.f32.mrf.mxu0
  %2632 = vdwg.mxu0
  %2633 = vmatpush.bf16.msra.mxu0 %v655
  %2634 = vmatpush.bf16.msra.mxu0 %v649
  %2635 = vmatpush.bf16.msra.mxu0 %v643
  %2636 = vmatpush.bf16.msra.mxu0 %v637
  %2637 = vmatpush.bf16.msra.mxu0 %v631
  %2638 = vmatpush.bf16.msra.mxu0 %v625
  %2639 = vmatpush.bf16.msra.mxu0 %v619
  %2640 = vmatpush.bf16.msra.mxu0 %v613
  %2641 = vmatmul.bf16.gmra.mxu0 %v2593
  %v2642 = vpop.f32.mrf.mxu0
  %v2643 = vadd.f32 %v2630, %v2642
  %v2644 = vpop.f32.mrf.mxu0
  %2645 = vdwg.mxu0
  %2646 = vmatpush.bf16.msra.mxu0 %v608
  %2647 = vmatpush.bf16.msra.mxu0 %v602
  %2648 = vmatpush.bf16.msra.mxu0 %v596
  %2649 = vmatpush.bf16.msra.mxu0 %v590
  %2650 = vmatpush.bf16.msra.mxu0 %v584
  %2651 = vmatpush.bf16.msra.mxu0 %v578
  %2652 = vmatpush.bf16.msra.mxu0 %v572
  %2653 = vmatpush.bf16.msra.mxu0 %v566
  %2654 = vmatmul.bf16.gmra.mxu0 %v2535
  %v2655 = vpop.f32.mrf.mxu0
  %v2656 = vadd.f32 0.0, %v2655
  %v2657 = vpop.f32.mrf.mxu0
  %2658 = vdwg.mxu0
  %2659 = vmatpush.bf16.msra.mxu0 %v656
  %2660 = vmatpush.bf16.msra.mxu0 %v650
  %2661 = vmatpush.bf16.msra.mxu0 %v644
  %2662 = vmatpush.bf16.msra.mxu0 %v638
  %2663 = vmatpush.bf16.msra.mxu0 %v632
  %2664 = vmatpush.bf16.msra.mxu0 %v626
  %2665 = vmatpush.bf16.msra.mxu0 %v620
  %2666 = vmatpush.bf16.msra.mxu0 %v614
  %2667 = vmatmul.bf16.gmra.mxu0 %v2593
  %v2668 = vpop.f32.mrf.mxu0
  %v2669 = vadd.f32 %v2656, %v2668
  %v2670 = vpop.f32.mrf.mxu0
  %2671 = vdwg.mxu0
  %2672 = vmatpush.bf16.msra.mxu0 %v609
  %2673 = vmatpush.bf16.msra.mxu0 %v603
  %2674 = vmatpush.bf16.msra.mxu0 %v597
  %2675 = vmatpush.bf16.msra.mxu0 %v591
  %2676 = vmatpush.bf16.msra.mxu0 %v585
  %2677 = vmatpush.bf16.msra.mxu0 %v579
  %2678 = vmatpush.bf16.msra.mxu0 %v573
  %2679 = vmatpush.bf16.msra.mxu0 %v567
  %2680 = vmatmul.bf16.gmra.mxu0 %v2535
  %v2681 = vpop.f32.mrf.mxu0
  %v2682 = vadd.f32 0.0, %v2681
  %v2683 = vpop.f32.mrf.mxu0
  %2684 = vdwg.mxu0
  %2685 = vmatpush.bf16.msra.mxu0 %v657
  %2686 = vmatpush.bf16.msra.mxu0 %v651
  %2687 = vmatpush.bf16.msra.mxu0 %v645
  %2688 = vmatpush.bf16.msra.mxu0 %v639
  %2689 = vmatpush.bf16.msra.mxu0 %v633
  %2690 = vmatpush.bf16.msra.mxu0 %v627
  %2691 = vmatpush.bf16.msra.mxu0 %v621
  %2692 = vmatpush.bf16.msra.mxu0 %v615
  %2693 = vmatmul.bf16.gmra.mxu0 %v2593
  %v2694 = vpop.f32.mrf.mxu0
  %v2695 = vadd.f32 %v2682, %v2694
  %v2696 = vpop.f32.mrf.mxu0
  %2697 = vdwg.mxu0
  %2698 = vmatpush.bf16.msra.mxu0 %v610
  %2699 = vmatpush.bf16.msra.mxu0 %v604
  %2700 = vmatpush.bf16.msra.mxu0 %v598
  %2701 = vmatpush.bf16.msra.mxu0 %v592
  %2702 = vmatpush.bf16.msra.mxu0 %v586
  %2703 = vmatpush.bf16.msra.mxu0 %v580
  %2704 = vmatpush.bf16.msra.mxu0 %v574
  %2705 = vmatpush.bf16.msra.mxu0 %v568
  %2706 = vmatmul.bf16.gmra.mxu0 %v2535
  %v2707 = vpop.f32.mrf.mxu0
  %v2708 = vadd.f32 0.0, %v2707
  %v2709 = vpop.f32.mrf.mxu0
  %2710 = vdwg.mxu0
  %2711 = vmatpush.bf16.msra.mxu0 %v658
  %2712 = vmatpush.bf16.msra.mxu0 %v652
  %2713 = vmatpush.bf16.msra.mxu0 %v646
  %2714 = vmatpush.bf16.msra.mxu0 %v640
  %2715 = vmatpush.bf16.msra.mxu0 %v634
  %2716 = vmatpush.bf16.msra.mxu0 %v628
  %2717 = vmatpush.bf16.msra.mxu0 %v622
  %2718 = vmatpush.bf16.msra.mxu0 %v616
  %2719 = vmatmul.bf16.gmra.mxu0 %v2593
  %v2720 = vpop.f32.mrf.mxu0
  %v2721 = vadd.f32 %v2708, %v2720
  %v2722 = vpop.f32.mrf.mxu0
  %2723 = vdwg.mxu0
  %2724 = vmatpush.bf16.msra.mxu0 %v611
  %2725 = vmatpush.bf16.msra.mxu0 %v605
  %2726 = vmatpush.bf16.msra.mxu0 %v599
  %2727 = vmatpush.bf16.msra.mxu0 %v593
  %2728 = vmatpush.bf16.msra.mxu0 %v587
  %2729 = vmatpush.bf16.msra.mxu0 %v581
  %2730 = vmatpush.bf16.msra.mxu0 %v575
  %2731 = vmatpush.bf16.msra.mxu0 %v569
  %2732 = vmatmul.bf16.gmra.mxu0 %v2535
  %v2733 = vpop.f32.mrf.mxu0
  %v2734 = vadd.f32 0.0, %v2733
  %v2735 = vpop.f32.mrf.mxu0
  %2736 = vdwg.mxu0
  %2737 = vmatpush.bf16.msra.mxu0 %v659
  %2738 = vmatpush.bf16.msra.mxu0 %v653
  %2739 = vmatpush.bf16.msra.mxu0 %v647
  %2740 = vmatpush.bf16.msra.mxu0 %v641
  %2741 = vmatpush.bf16.msra.mxu0 %v635
  %2742 = vmatpush.bf16.msra.mxu0 %v629
  %2743 = vmatpush.bf16.msra.mxu0 %v623
  %2744 = vmatpush.bf16.msra.mxu0 %v617
  %2745 = vmatmul.bf16.gmra.mxu0 %v2593
  %v2746 = vpop.f32.mrf.mxu0
  %v2747 = vadd.f32 %v2734, %v2746
  %v2748 = vpop.f32.mrf.mxu0
  %2749 = vdwg.mxu0
  %v2752 = vrot.slane %v2617, 4
  %v2753 = vrot.slane %v2643, 4
  %v2756 = vadd.f32 %v272, %v2752
  %v2757 = vadd.f32 %v273, %v2753
  %v2758 = vmul.f32 %v2756, 0.5
  %v2759 = vmul.f32 %v2757, 0.5
  %v2760 = vtanh.pop %v2758
  %v2761 = vtanh.pop %v2759
  %v2762 = vmul.f32 %v2760, 0.5
  %v2763 = vmul.f32 %v2761, 0.5
  %v2764 = vadd.f32 %v2762, 0.5
  %v2765 = vadd.f32 %v2763, 0.5
  %v2766 = vadd.f32 %v2669, %v167
  %v2768 = vrot.slane %v2766, 4
  %v2770 = vmul.f32 %v2764, %v2768
  %v2771 = vadd.f32 %v274, %v2770
  %v2772 = vtanh.pop %v2771
  %v2773 = vsub.f32 1.0, %v2765
  %v2774 = vmul.f32 %v2773, %v2772
  %v2776 = vrot.slane %v2534, 4
  %v2778 = vmul.f32 %v2765, %v2776
  %v2779 = vadd.f32 %v2774, %v2778
  %v2780 = vpack.c.bf16 %v2779, %v2779
  %v2782 = vrot.slane %v2780, 2
  %2784 = vmatpush.bf16.msra.mxu0 %v1039
  %2785 = vmatpush.bf16.msra.mxu0 %v1036
  %2786 = vmatpush.bf16.msra.mxu0 %v1033
  %2787 = vmatpush.bf16.msra.mxu0 %v1030
  %2788 = vmatpush.bf16.msra.mxu0 %v1027
  %2789 = vmatpush.bf16.msra.mxu0 %v1024
  %2790 = vmatpush.bf16.msra.mxu0 %v1021
  %2791 = vmatpush.bf16.msra.mxu0 %v1018
  %2792 = vmatmul.bf16.gmra.mxu0 %v2782
  %v2793 = vpop.f32.mrf.mxu0
  %v2794 = vadd.f32 %v932, %v2793
  %v2795 = vpop.f32.mrf.mxu0
  %2796 = vdwg.mxu0
  %2797 = vmatpush.bf16.msra.mxu0 %v1040
  %2798 = vmatpush.bf16.msra.mxu0 %v1037
  %2799 = vmatpush.bf16.msra.mxu0 %v1034
  %2800 = vmatpush.bf16.msra.mxu0 %v1031
  %2801 = vmatpush.bf16.msra.mxu0 %v1028
  %2802 = vmatpush.bf16.msra.mxu0 %v1025
  %2803 = vmatpush.bf16.msra.mxu0 %v1022
  %2804 = vmatpush.bf16.msra.mxu0 %v1019
  %2805 = vmatmul.bf16.gmra.mxu0 %v2782
  %v2806 = vpop.f32.mrf.mxu0
  %v2807 = vadd.f32 %v933, %v2806
  %v2808 = vpop.f32.mrf.mxu0
  %2809 = vdwg.mxu0
  %2810 = vmatpush.bf16.msra.mxu0 %v1041
  %2811 = vmatpush.bf16.msra.mxu0 %v1038
  %2812 = vmatpush.bf16.msra.mxu0 %v1035
  %2813 = vmatpush.bf16.msra.mxu0 %v1032
  %2814 = vmatpush.bf16.msra.mxu0 %v1029
  %2815 = vmatpush.bf16.msra.mxu0 %v1026
  %2816 = vmatpush.bf16.msra.mxu0 %v1023
  %2817 = vmatpush.bf16.msra.mxu0 %v1020
  %2818 = vmatmul.bf16.gmra.mxu0 %v2782
  %v2819 = vpop.f32.mrf.mxu0
  %v2820 = vadd.f32 %v934, %v2819
  %v2821 = vpop.f32.mrf.mxu0
  %2822 = vdwg.mxu0
  %v2823 = vadd.f32 %v2794, %v2695
  %v2824 = vadd.f32 %v2807, %v2721
  %v2825 = vmul.f32 %v2823, 0.5
  %v2826 = vmul.f32 %v2824, 0.5
  %v2827 = vtanh.pop %v2825
  %v2828 = vtanh.pop %v2826
  %v2829 = vmul.f32 %v2827, 0.5
  %v2830 = vmul.f32 %v2828, 0.5
  %v2831 = vadd.f32 %v2829, 0.5
  %v2832 = vadd.f32 %v2830, 0.5
  %v2833 = vadd.f32 %v2747, %v168
  %v2834 = vmul.f32 %v2831, %v2833
  %v2835 = vadd.f32 %v2820, %v2834
  %v2836 = vtanh.pop %v2835
  %v2837 = vsub.f32 1.0, %v2832
  %v2838 = vmul.f32 %v2837, %v2836
  %v2839 = vmul.f32 %v2832, %v2592
  %v2840 = vadd.f32 %v2838, %v2839
  %v2842 = vrot.slane %v2779, 4
  %v2845 = vrot.slane %v2840, 4
  %vm2847 = vcmask 1043456
  %v2848 = vsel %vm2847, %v2842, %v2845
  %v2849 = vpack.c.bf16 %v2848, %v2848
  %v2866 = vunpack.c.l.b16 %v140
  %v2867 = vunpack.c.l.b16 %v141
  %v2868 = vunpack.c.l.b16 %v142
  %v2869 = vunpack.c.l.b16 %v143
  %v2870 = vunpack.c.l.b16 %v144
  %v2871 = vunpack.c.l.b16 %v145
  %v2872 = vunpack.c.l.b16 %v146
  %v2873 = vunpack.c.l.b16 %v147
  %v2874 = vunpack.c.l.b16 %v148
  %v2875 = vunpack.c.l.b16 %v149
  %v2876 = vunpack.c.l.b16 %v150
  %v2877 = vunpack.c.l.b16 %v151
  %v2878 = vunpack.c.l.b16 %v152
  %v2879 = vunpack.c.l.b16 %v153
  %v2880 = vunpack.c.l.b16 %v154
  %v2881 = vunpack.c.l.b16 %v155
  %v2882 = vpack.c.b16 %v2867, %v2866
  %v2883 = vpack.c.b16 %v2869, %v2868
  %v2884 = vpack.c.b16 %v2871, %v2870
  %v2885 = vpack.c.b16 %v2873, %v2872
  %v2886 = vpack.c.b16 %v2875, %v2874
  %v2887 = vpack.c.b16 %v2877, %v2876
  %v2888 = vpack.c.b16 %v2879, %v2878
  %v2889 = vpack.c.b16 %v2881, %v2880
  %2898 = vmatpush.bf16.msra.mxu0 %v2889
  %2899 = vmatpush.bf16.msra.mxu0 %v2888
  %2900 = vmatpush.bf16.msra.mxu0 %v2887
  %2901 = vmatpush.bf16.msra.mxu0 %v2886
  %2902 = vmatpush.bf16.msra.mxu0 %v2885
  %2903 = vmatpush.bf16.msra.mxu0 %v2884
  %2904 = vmatpush.bf16.msra.mxu0 %v2883
  %2905 = vmatpush.bf16.msra.mxu0 %v2882
  %2906 = vmatmul.bf16.gmra.mxu0 %v2849
  %v2907 = vpop.f32.mrf.mxu0
  %v2908 = vadd.f32 0.0, %v2907
  %v2909 = vpop.f32.mrf.mxu0
  %2910 = vdwg.mxu0
  %v2911 = vtanh.pop %v2908
  %v2912 = vpack.c.bf16 %v2911, %v2911
  %v2921 = vunpack.c.l.b16 %v156
  %v2922 = vunpack.c.l.b16 %v157
  %v2923 = vunpack.c.l.b16 %v158
  %v2924 = vunpack.c.l.b16 %v159
  %v2925 = vunpack.c.l.b16 %v160
  %v2926 = vunpack.c.l.b16 %v161
  %v2927 = vunpack.c.l.b16 %v162
  %v2928 = vunpack.c.l.b16 %v163
  %v2929 = vpack.c.b16 %v2922, %v2921
  %v2930 = vpack.c.b16 %v2924, %v2923
  %v2931 = vpack.c.b16 %v2926, %v2925
  %v2932 = vpack.c.b16 %v2928, %v2927
  %vm2937 = vcmask 523264
  %v2939 = vsel %vm2937, %v2912, 0
  %2941 = vmatpush.bf16.msra.mxu0 0
  %2942 = vmatpush.bf16.msra.mxu0 0
  %2943 = vmatpush.bf16.msra.mxu0 0
  %2944 = vmatpush.bf16.msra.mxu0 0
  %2945 = vmatpush.bf16.msra.mxu0 %v2932
  %2946 = vmatpush.bf16.msra.mxu0 %v2931
  %2947 = vmatpush.bf16.msra.mxu0 %v2930
  %2948 = vmatpush.bf16.msra.mxu0 %v2929
  %2949 = vmatmul.bf16.gmra.mxu0 %v2939
  %v2950 = vpop.f32.mrf.mxu0
  %v2951 = vadd.f32 0.0, %v2950
  %v2952 = vpop.f32.mrf.mxu0
  %2953 = vdwg.mxu0
  %v2955 = vrot.slane %v2951, 4
  %v2957 = vmax.f32 %v2951, %v2955
  %v2958 = vsub.f32 %v2951, %v2957
  %v2959 = vmul.f32 %v2958, 1.442695
  %v2960 = vpow.pop %v2959
  %v2962 = vrot.slane %v2957, 4
  %v2964 = vsub.f32 %v2951, %v2962
  %v2965 = vmul.f32 %v2964, 1.442695
  %v2966 = vpow.pop %v2965
  %v2968 = vrot.slane %v2966, 4
  %v2970 = vadd.f32 %v2960, %v2968
  %v2971 = vrcp.pop %v2970
  %v2972 = vmul.f32 %v2970, %v2971
  %v2973 = vsub.f32 1.0, %v2972
  %v2974 = vmul.f32 %v2971, %v2973
  %v2975 = vadd.f32 %v2971, %v2974
  %vm2976 = vweird.f32 %v2970
  %vm2977 = vweird.f32 %v2971
  %vm2978 = vmor %vm2976, %vm2977
  %v2979 = vsel %vm2978, %v2971, %v2975
  %v2980 = vand.u32 2147483647, %v2970
  %vm2981 = vcmp.eq.f32.partialorder %v2980, 8.507059e+37
  %v2982 = vand.u32 %v2970, 2147483648
  %v2983 = vor.u32 1.1754944e-38, %v2982
  %v2984 = vsel %vm2981, %v2983, %v2979
  %v2985 = vmul.f32 1.0, %v2984
  %v2986 = vmul.f32 %v2960, %v2985
  %v2988 = vrot.slane %v2985, 4
  %v2990 = vmul.f32 %v2966, %v2988
  %v2991 = vmul.f32 %v2986, %v2986
  %v2992 = vmul.f32 %v2990, %v2990
  %v2994 = vrot.slane %v2992, 4
  %v2996 = vadd.f32 %v2991, %v2994
  %2998 = vrot.lane.b32.xlu0 %v2986, 127
  %v2999 = vpop.permute.xlu0 %2998
  %v3001 = vmul.f32 %v2986, %v2999
  %3003 = vrot.lane.b32.xlu0 %v2990, 127
  %v3004 = vpop.permute.xlu0 %3003
  %v3006 = vmul.f32 %v2990, %v3004
  %v3008 = vrot.slane %v3006, 4
  %v3010 = vadd.f32 %v3001, %v3008
  %v3011 = vsub.f32 %v2996, 1.0
  %v3012 = vmul.f32 %v3011, %v3011
  %vm3013 = vcmask 3072
  %v3014 = vsel %vm3013, %v3012, 0.0
  %3015 = vadd.xlane.f32.xlu0 %v3014
  %v3016 = vpop.xlane.xlu0 %3015
  %v3017 = vrot.slane %v3016, 4
  %v3018 = vadd.f32 %v3016, %v3017
  %v3019 = vrot.slane %v3018, 2
  %v3020 = vadd.f32 %v3018, %v3019
  %v3021 = vrot.slane %v3020, 1
  %v3022 = vadd.f32 %v3020, %v3021
  %s3023 = vtos %v3022
  %v3024 = vmul.f32 %v3010, %v3010
  %v3025 = vsel %vm3013, %v3024, 0.0
  %3026 = vadd.xlane.f32.xlu0 %v3025
  %v3027 = vpop.xlane.xlu0 %3026
  %v3028 = vrot.slane %v3027, 4
  %v3029 = vadd.f32 %v3027, %v3028
  %v3030 = vrot.slane %v3029, 2
  %v3031 = vadd.f32 %v3029, %v3030
  %v3032 = vrot.slane %v3031, 1
  %v3033 = vadd.f32 %v3031, %v3032
  %s3034 = vtos %v3033
  %s3035 = smul.f32 %s3034, 2.0
  %s3036 = sadd.f32 %s3023, %s3035
  %3038 = vrot.lane.b32.xlu0 %v3012, 127
  %v3039 = vpop.permute.xlu0 %3038
  %v3041 = vsel %vm3013, %v3039, 0.0
  %3042 = vadd.xlane.f32.xlu0 %v3041
  %v3043 = vpop.xlane.xlu0 %3042
  %v3044 = vrot.slane %v3043, 4
  %v3045 = vadd.f32 %v3043, %v3044
  %v3046 = vrot.slane %v3045, 2
  %v3047 = vadd.f32 %v3045, %v3046
  %v3048 = vrot.slane %v3047, 1
  %v3049 = vadd.f32 %v3047, %v3048
  %s3050 = vtos %v3049
  %s3051 = sadd.f32 %s3036, %s3050
  %v3052 = vadd.f32 %v2986, %v2999
  %3054 = vset.pattern.permute.xlu0 0
  %3055 = vperm.xlu0 %3054, %v3052
  %v3056 = vpop.permute.xlu0 %3055
  %v3057 = vrot.slane %v3056, 4
  %v3059 = vmul.f32 %v2779, %v3057
  %v3060 = vadd.f32 %v2990, %v3004
  %3062 = vset.pattern.permute.xlu0 0
  %3063 = vperm.xlu0 %3062, %v3060
  %v3064 = vpop.permute.xlu0 %3063
  %v3065 = vrot.slane %v3064, 4
  %v3067 = vmul.f32 %v2840, %v3065
  %v3069 = vrot.slane %v3067, 4
  %v3071 = vadd.f32 %v3059, %v3069
  %v3072 = vmul.f32 %v3071, %v169
  %vm3073 = vcmask 1047556
  %v3074 = vsel %vm3073, %v3072, 0.0
  %3075 = vadd.xlane.f32.xlu0 %v3074
  %v3076 = vpop.xlane.xlu0 %3075
  %v3077 = vadd.f32 %v3076, %v170
  %v3078 = vlaneseq
  %v3079 = vshrl.u32 %v3078, 7
  %v3081 = vrot.slane %v3077, 4
  %v3083 = vsel %vm2847, %v3081, 0.0
  %3085 = vset.pattern.permute.xlu0 0
  %3086 = vperm.xlu0 %3085, %v3083
  %v3087 = vpop.permute.xlu0 %3086
  %v3089 = vstv %s3051
  %vm3090 = vcmp.lt.s32.totalorder %v3079, 4
  %v3091 = vsel %vm3090, %v3087, %v3089
  %3092 = vst [vmem:[%s2] sm:$0xff] %v3091
  // Predicated region
  $region10: #{model_attention_forward.1} parent=0 // pred_check
    _
  $region11: #{model_attention_forward.1} parent=0 // pred_check_branch
    %3094 = sbr.rel (0) target = $region13
  $region12: #{model_attention_forward.1} parent=0 // pred_region
    _
  $region13: #{model_attention_forward.1} parent=0 // pred_fallthru
    _
  // Predicated region
  $region14: #{model_attention_forward.1} parent=0 // pred_check
    _
  $region15: #{model_attention_forward.1} parent=0 // pred_check_branch
    %3096 = sbr.rel (0) target = $region17
  $region16: #{model_attention_forward.1} parent=0 // pred_region
    _
  $region17: #{model_attention_forward.1} parent=0 // pred_fallthru
    _

</llo_original>
